<compile_context>
chip_gen: v7x
topology: tpu7x:2x2x1
jax: 0.10.0
libtpu: 0.0.40
codegen_flags: <defaults>
</compile_context>

<pallas_src>
import math

import jax
import jax.numpy as jnp
from jax import lax
from jax.experimental import pallas as pl
from jax.experimental.pallas import tpu as pltpu

# ---- model config (small synthetic shapes consistent with the module) ----
B = 2            # batch
S = 8            # sequence length
BS = B * S       # flattened tokens
H = 32           # hidden size
NH = 4           # attention heads
HD = H // NH     # head dim
I = 64           # intermediate (FFN) size
L = 10           # num_labels (THUCNews classes)
VOCAB = 64       # vocab size
NUM_LAYERS = 3   # need encoded_layers[2] -> at least 3 layers
EPS = 1e-12
SCALE = 1.0 / math.sqrt(HD)

NEG_PAD_KEY = -10000.0       # additive bias for padded keys (BERT convention)
NEG_CROSS_BATCH = -1.0e9     # additive bias for cross-batch positions (strictly below pad bias)
NEG_LOGIT_PAD = -1.0e30      # classifier-bias padding -> exp underflows to exactly 0

# ---- slab layout constants ----
LANE = 128
MAT_ROWS = 3 * H + I         # 160: [wqkv(32) | wo(32) | w1(32) | w2(64)]
VEC_ROWS = 8                 # one per-layer vector per 128-lane row
R_EMB_G = VOCAB              # 64  embedding LayerNorm gamma
R_EMB_B = VOCAB + 1          # 65  embedding LayerNorm beta
R_FDB = VOCAB + 2            # 66  classifier bias (lanes L:128 = NEG_LOGIT_PAD)
R_BIAS = 72                  # 72..87  constant block-diagonal attention bias [BS, BS]
R_FDW = R_BIAS + BS          # 88..119 classifier weight [H, L] (lanes L:128 zero)
MISC_ROWS = R_FDW + H        # 120


# ----------------------------- kernel helpers -----------------------------
def _layer_norm(x, gamma, beta):
    mu = jnp.mean(x, axis=-1, keepdims=True)
    var = jnp.mean((x - mu) ** 2, axis=-1, keepdims=True)
    return (x - mu) * lax.rsqrt(var + EPS) * gamma + beta


def _gelu(x):
    # BERT tanh-approximate GELU
    return 0.5 * x * (1.0 + jnp.tanh(0.7978845608028654 * (x + 0.044715 * x * x * x)))


# --------------------------- fused Pallas kernel ---------------------------
def fused_bert_kernel(ids_col_ref, ids_row_ref, pos_ref, mats_ref, vecs_ref, misc_ref, o_ref):
    f32 = jnp.float32

    # ---- embeddings: one-hot gather (MXU) + positional, LayerNorm ----
    # (token-type-0 embedding already folded into the word-embedding rows at init)
    ids_col = ids_col_ref[...]                                        # [BS, 1] int32
    vocab_iota = lax.broadcasted_iota(jnp.int32, (BS, VOCAB), 1)
    one_hot = (ids_col == vocab_iota).astype(f32)                     # [BS, VOCAB]
    x = jnp.dot(one_hot, misc_ref[0:VOCAB, 0:H],
                preferred_element_type=f32) + pos_ref[...]            # [BS, H]
    x = _layer_norm(x, misc_ref[R_EMB_G:R_EMB_G + 1, 0:H],
                    misc_ref[R_EMB_B:R_EMB_B + 1, 0:H])               # dropout = no-op (eval)

    # ---- attention bias: constant block-diagonal (from slab) + key padding mask ----
    base_bias = misc_ref[R_BIAS:R_BIAS + BS, 0:BS]                    # [BS, BS] (0 / -1e9)
    key_pad = jnp.where(ids_row_ref[...] > 0, 0.0, NEG_PAD_KEY).astype(f32)   # [1, BS]
    bias = base_bias + key_pad                                        # [BS, BS]

    # ---- transformer encoder layers (statically unrolled; weights resident in VMEM) ----
    for layer in range(NUM_LAYERS):
        wqkv = mats_ref[layer, 0:H, 0:3 * H]                          # [H, 3H]  (Q block pre-scaled)
        w1 = mats_ref[layer, 2 * H:3 * H, 0:I]                        # [H, I]
        w2 = mats_ref[layer, 3 * H:3 * H + I, 0:H]                    # [I, H]

        bqkv = vecs_ref[layer, 0:1, 0:3 * H]
        bo = vecs_ref[layer, 1:2, 0:H]
        g1 = vecs_ref[layer, 2:3, 0:H]
        be1 = vecs_ref[layer, 3:4, 0:H]
        b1 = vecs_ref[layer, 4:5, 0:I]
        b2 = vecs_ref[layer, 5:6, 0:H]
        g2 = vecs_ref[layer, 6:7, 0:H]
        be2 = vecs_ref[layer, 7:8, 0:H]

        qkv = jnp.dot(x, wqkv, preferred_element_type=f32) + bqkv     # [BS, 3H]

        attn = None
        for h in range(NH):                                           # static unroll (MRF overlap)
            lo, hi = h * HD, (h + 1) * HD
            qh = qkv[:, lo:hi]                                        # [BS, HD] (already scaled)
            kh = qkv[:, H + lo:H + hi]
            vh = qkv[:, 2 * H + lo:2 * H + hi]
            # scores = qh @ kh^T  (contract last dims; no explicit transpose materialized)
            s = lax.dot_general(qh, kh, (((1,), (1,)), ((), ())),
                                preferred_element_type=f32) + bias    # [BS, BS]
            s = s - jnp.max(s, axis=-1, keepdims=True)
            p = jnp.exp(s)
            p = p * pl.reciprocal(jnp.sum(p, axis=-1, keepdims=True), approx=True)
            ctx = jnp.dot(p, vh, preferred_element_type=f32)          # [BS, HD]
            # fold this head through its block of Wo rows; accumulate (no lane concat)
            part = jnp.dot(ctx, mats_ref[layer, H + lo:H + hi, 0:H],
                           preferred_element_type=f32)                # [BS, H]
            attn = part if attn is None else attn + part
        attn = attn + bo

        x = _layer_norm(x + attn, g1, be1)
        mid = _gelu(jnp.dot(x, w1, preferred_element_type=f32) + b1)
        ffn = jnp.dot(mid, w2, preferred_element_type=f32) + b2
        x = _layer_norm(x + ffn, g2, be2)

    # x == encoded_layers[2] (third encoder layer output)
    # ---- classifier head, computed lane-dense for all BS rows ([BS, 128] output) ----
    # Padded weight columns are 0 and padded bias lanes are -1e30, so the row softmax over
    # 128 lanes equals the softmax over the L real classes exactly.
    logits = jnp.dot(x, misc_ref[R_FDW:R_FDW + H, :], preferred_element_type=f32) \
        + misc_ref[R_FDB:R_FDB + 1, :]                                # [BS, 128]
    m = jnp.max(logits, axis=-1, keepdims=True)
    e = jnp.exp(logits - m)
    o_ref[...] = e / jnp.sum(e, axis=-1, keepdims=True)               # exact division (output)


# --------------------------- pallas_call wrapper ---------------------------
def _full_spec(shape):
    n = len(shape)
    return pl.BlockSpec(shape, lambda *_: (0,) * n)


def fused_forward(ids_col, ids_row, pos, params):
    args = (ids_col, ids_row, pos, params["mats"], params["vecs"], params["misc"])
    return pl.pallas_call(
        fused_bert_kernel,
        out_shape=jax.ShapeDtypeStruct((BS, LANE), jnp.float32),
        grid=(1,),
        in_specs=[_full_spec(a.shape) for a in args],
        out_specs=_full_spec((BS, LANE)),
        compiler_params=pltpu.CompilerParams(dimension_semantics=("arbitrary",)),
    )(*args)


# ----------------------------- parameters ---------------------------------
def init_params(key):
    keys = iter(jax.random.split(key, 8))

    def nrm(shape):
        return 0.02 * jax.random.normal(next(keys), shape, jnp.float32)

    word_emb = nrm((VOCAB, H))
    tok_type = nrm((2, H))
    wqkv = nrm((NUM_LAYERS, H, 3 * H))
    wo = nrm((NUM_LAYERS, H, H))
    w1 = nrm((NUM_LAYERS, H, I))
    w2 = nrm((NUM_LAYERS, I, H))
    fd_w = nrm((H, L))
    fd_b = jnp.zeros((L,), jnp.float32)

    # ---- init-time folds (zero per-call cost) ----
    word_emb = word_emb + tok_type[0:1, :]            # token_type_ids == 0 always
    wqkv = wqkv.at[:, :, 0:H].multiply(SCALE)         # fold 1/sqrt(HD) into the Q projection
    bqkv = jnp.zeros((NUM_LAYERS, 3 * H), jnp.float32)   # (Q slice of zeros: scaling is a no-op)
    bo = jnp.zeros((NUM_LAYERS, H), jnp.float32)
    b1 = jnp.zeros((NUM_LAYERS, I), jnp.float32)
    b2 = jnp.zeros((NUM_LAYERS, H), jnp.float32)
    ln_g = jnp.ones((NUM_LAYERS, H), jnp.float32)
    ln_b = jnp.zeros((NUM_LAYERS, H), jnp.float32)

    # ---- slab 1: per-layer matrices, lane-padded to 128 ----
    mats = jnp.zeros((NUM_LAYERS, MAT_ROWS, LANE), jnp.float32)
    mats = mats.at[:, 0:H, 0:3 * H].set(wqkv)
    mats = mats.at[:, H:2 * H, 0:H].set(wo)
    mats = mats.at[:, 2 * H:3 * H, 0:I].set(w1)
    mats = mats.at[:, 3 * H:3 * H + I, 0:H].set(w2)

    # ---- slab 2: per-layer vectors (one 128-lane row each) ----
    vecs = jnp.zeros((NUM_LAYERS, VEC_ROWS, LANE), jnp.float32)
    vecs = vecs.at[:, 0, 0:3 * H].set(bqkv)
    vecs = vecs.at[:, 1, 0:H].set(bo)
    vecs = vecs.at[:, 2, 0:H].set(ln_g)
    vecs = vecs.at[:, 3, 0:H].set(ln_b)
    vecs = vecs.at[:, 4, 0:I].set(b1)
    vecs = vecs.at[:, 5, 0:H].set(b2)
    vecs = vecs.at[:, 6, 0:H].set(ln_g)
    vecs = vecs.at[:, 7, 0:H].set(ln_b)

    # ---- slab 3: embeddings, emb-LayerNorm, classifier head, constant attention bias ----
    misc = jnp.zeros((MISC_ROWS, LANE), jnp.float32)
    misc = misc.at[0:VOCAB, 0:H].set(word_emb)
    misc = misc.at[R_EMB_G, 0:H].set(jnp.ones((H,), jnp.float32))
    misc = misc.at[R_EMB_B, 0:H].set(jnp.zeros((H,), jnp.float32))
    fdb_row = jnp.full((LANE,), NEG_LOGIT_PAD, jnp.float32).at[0:L].set(fd_b)
    misc = misc.at[R_FDB].set(fdb_row)
    blockdiag = jnp.kron(jnp.eye(B, dtype=jnp.float32), jnp.ones((S, S), jnp.float32))
    misc = misc.at[R_BIAS:R_BIAS + BS, 0:BS].set(
        jnp.where(blockdiag > 0, 0.0, NEG_CROSS_BATCH))
    misc = misc.at[R_FDW:R_FDW + H, 0:L].set(fd_w)

    return {"mats": mats, "vecs": vecs, "misc": misc}


# ------------------------------- forward -----------------------------------
def thuc_news_bert_forward(params, text_input, positional_enc):
    """text_input: int32 [B, S]; positional_enc: float32 [B, S, H] -> softmax probs [B, L]."""
    ids_col = text_input.reshape(BS, 1).astype(jnp.int32)   # for in-kernel one-hot gather
    ids_row = text_input.reshape(1, BS).astype(jnp.int32)   # for in-kernel key padding mask
    pos = positional_enc.reshape(BS, H).astype(jnp.float32)
    probs_full = fused_forward(ids_col, ids_row, pos, params)   # [BS, 128] lane-dense block
    # CLS token of each sequence (row b*S) and the L real class lanes.
    return probs_full[0::S, 0:L]                                 # [B, L]


def sinusoidal_positional_encoding():
    pos = jnp.arange(S, dtype=jnp.float32)[:, None]                # [S, 1]
    div = jnp.exp(jnp.arange(0, H, 2, dtype=jnp.float32) * (-math.log(10000.0) / H))
    ang = pos * div                                                # [S, H//2]
    pe = jnp.stack([jnp.sin(ang), jnp.cos(ang)], axis=-1).reshape(S, H)
    return jnp.broadcast_to(pe, (B, S, H)).astype(jnp.float32)


# --------------------------------- main -------------------------------------
if __name__ == "__main__":
    key = jax.random.PRNGKey(0)
    pkey, tkey = jax.random.split(key)
    params = init_params(pkey)

    text_input = jax.random.randint(tkey, (B, S), 1, VOCAB, dtype=jnp.int32)
    positional_enc = sinusoidal_positional_encoding()

    fwd = jax.jit(thuc_news_bert_forward)
    preds = jax.block_until_ready(fwd(params, text_input, positional_enc))

    assert preds.shape == (B, L)
    assert bool(jnp.all(jnp.isfinite(preds)))
    row_sums = jnp.sum(preds, axis=-1)
    assert bool(jnp.all(jnp.abs(row_sums - 1.0) < 1e-4)), row_sums
    print("KERNEL_OK")
</pallas_src>

<mosaic_0001>
module attributes {stable_mosaic.version = 11 : i64} {
  func.func @fused_bert_kernel(%arg0: i32, %arg1: memref<16x1xi32, #tpu.memory_space<vmem>>, %arg2: memref<1x16xi32, #tpu.memory_space<vmem>>, %arg3: memref<16x32xf32, #tpu.memory_space<vmem>>, %arg4: memref<3x160x128xf32, #tpu.memory_space<vmem>>, %arg5: memref<3x8x128xf32, #tpu.memory_space<vmem>>, %arg6: memref<120x128xf32, #tpu.memory_space<vmem>>, %arg7: memref<16x128xf32, #tpu.memory_space<vmem>>) attributes {dimension_semantics = [#tpu.dimension_semantics<arbitrary>], iteration_bounds = array<i64: 1>, scalar_prefetch = 0 : i64, scratch_operands = 0 : i64, tpu.core_type = #tpu.core_type<tc>, window_params = [{pipeline_mode = #tpu.pipeline_mode<synchronous>, transform_indices = @transform_0, window_bounds = array<i64: 16, 1>}, {pipeline_mode = #tpu.pipeline_mode<synchronous>, transform_indices = @transform_1, window_bounds = array<i64: 1, 16>}, {pipeline_mode = #tpu.pipeline_mode<synchronous>, transform_indices = @transform_2, window_bounds = array<i64: 16, 32>}, {pipeline_mode = #tpu.pipeline_mode<synchronous>, transform_indices = @transform_3, window_bounds = array<i64: 3, 160, 128>}, {pipeline_mode = #tpu.pipeline_mode<synchronous>, transform_indices = @transform_4, window_bounds = array<i64: 3, 8, 128>}, {pipeline_mode = #tpu.pipeline_mode<synchronous>, transform_indices = @transform_5, window_bounds = array<i64: 120, 128>}, {pipeline_mode = #tpu.pipeline_mode<synchronous>, transform_indices = @transform_6, window_bounds = array<i64: 16, 128>}]} {
    %c0 = arith.constant 0 : index
    %c0_0 = arith.constant 0 : index
    %0 = vector.load %arg1[%c0, %c0_0] : memref<16x1xi32, #tpu.memory_space<vmem>>, vector<16x1xi32>
    %1 = tpu.iota {dimensions = array<i32: 1>} : vector<16x64xi32>
    %2 = vector.broadcast %0 : vector<16x1xi32> to vector<16x64xi32>
    %3 = arith.cmpi eq, %2, %1 : vector<16x64xi32>
    %4 = arith.extui %3 : vector<16x64xi1> to vector<16x64xi32>
    %5 = arith.sitofp %4 : vector<16x64xi32> to vector<16x64xf32>
    %c0_1 = arith.constant 0 : index
    %c0_2 = arith.constant 0 : index
    %6 = vector.load %arg6[%c0_1, %c0_2] : memref<120x128xf32, #tpu.memory_space<vmem>>, vector<64x32xf32>
    %cst = arith.constant dense<0.000000e+00> : vector<16x32xf32>
    %7 = tpu.matmul %5, %6, %cst {dimension_numbers = #tpu.dot_dimension_numbers<[1], [0], [0], [1], [0, 0, 1, 1], [], []>} : vector<16x64xf32>, vector<64x32xf32>, vector<16x32xf32> -> vector<16x32xf32>
    %c0_3 = arith.constant 0 : index
    %c0_4 = arith.constant 0 : index
    %8 = vector.load %arg3[%c0_3, %c0_4] : memref<16x32xf32, #tpu.memory_space<vmem>>, vector<16x32xf32>
    %9 = arith.addf %7, %8 : vector<16x32xf32>
    %c64 = arith.constant 64 : index
    %c0_5 = arith.constant 0 : index
    %10 = vector.load %arg6[%c64, %c0_5] : memref<120x128xf32, #tpu.memory_space<vmem>>, vector<1x32xf32>
    %c65 = arith.constant 65 : index
    %c0_6 = arith.constant 0 : index
    %11 = vector.load %arg6[%c65, %c0_6] : memref<120x128xf32, #tpu.memory_space<vmem>>, vector<1x32xf32>
    %cst_7 = arith.constant dense<0.000000e+00> : vector<16xf32>
    %12 = vector.multi_reduction <add>, %9, %cst_7 [1] : vector<16x32xf32> to vector<16xf32>
    %13 = vector.shape_cast %12 : vector<16xf32> to vector<16x1xf32>
    %cst_8 = arith.constant 3.200000e+01 : f32
    %14 = vector.broadcast %cst_8 : f32 to vector<16x1xf32>
    %15 = arith.divf %13, %14 : vector<16x1xf32>
    %16 = vector.broadcast %15 : vector<16x1xf32> to vector<16x32xf32>
    %17 = arith.subf %9, %16 : vector<16x32xf32>
    %18 = arith.mulf %17, %17 : vector<16x32xf32>
    %cst_9 = arith.constant dense<0.000000e+00> : vector<16xf32>
    %19 = vector.multi_reduction <add>, %18, %cst_9 [1] : vector<16x32xf32> to vector<16xf32>
    %20 = vector.shape_cast %19 : vector<16xf32> to vector<16x1xf32>
    %cst_10 = arith.constant 3.200000e+01 : f32
    %21 = vector.broadcast %cst_10 : f32 to vector<16x1xf32>
    %22 = arith.divf %20, %21 : vector<16x1xf32>
    %23 = vector.broadcast %15 : vector<16x1xf32> to vector<16x32xf32>
    %24 = arith.subf %9, %23 : vector<16x32xf32>
    %cst_11 = arith.constant 9.99999996E-13 : f32
    %25 = vector.broadcast %cst_11 : f32 to vector<16x1xf32>
    %26 = arith.addf %22, %25 : vector<16x1xf32>
    %27 = math.rsqrt %26 : vector<16x1xf32>
    %28 = vector.broadcast %27 : vector<16x1xf32> to vector<16x32xf32>
    %29 = arith.mulf %24, %28 : vector<16x32xf32>
    %30 = vector.broadcast %10 : vector<1x32xf32> to vector<16x32xf32>
    %31 = arith.mulf %29, %30 : vector<16x32xf32>
    %32 = vector.broadcast %11 : vector<1x32xf32> to vector<16x32xf32>
    %33 = arith.addf %31, %32 : vector<16x32xf32>
    %c72 = arith.constant 72 : index
    %c0_12 = arith.constant 0 : index
    %34 = vector.load %arg6[%c72, %c0_12] : memref<120x128xf32, #tpu.memory_space<vmem>>, vector<16x16xf32>
    %c0_13 = arith.constant 0 : index
    %c0_14 = arith.constant 0 : index
    %35 = vector.load %arg2[%c0_13, %c0_14] : memref<1x16xi32, #tpu.memory_space<vmem>>, vector<1x16xi32>
    %c0_i32 = arith.constant 0 : i32
    %36 = vector.broadcast %c0_i32 : i32 to vector<1x16xi32>
    %37 = arith.cmpi sgt, %35, %36 : vector<1x16xi32>
    %cst_15 = arith.constant 0.000000e+00 : f32
    %cst_16 = arith.constant -1.000000e+04 : f32
    %38 = vector.broadcast %cst_15 : f32 to vector<1x16xf32>
    %39 = vector.broadcast %cst_16 : f32 to vector<1x16xf32>
    %40 = arith.select %37, %38, %39 : vector<1x16xi1>, vector<1x16xf32>
    %41 = vector.broadcast %40 : vector<1x16xf32> to vector<16x16xf32>
    %42 = arith.addf %34, %41 : vector<16x16xf32>
    %c0_17 = arith.constant 0 : index
    %c0_18 = arith.constant 0 : index
    %c0_19 = arith.constant 0 : index
    %43 = vector.load %arg4[%c0_17, %c0_18, %c0_19] : memref<3x160x128xf32, #tpu.memory_space<vmem>>, vector<1x32x96xf32>
    %44 = vector.shape_cast %43 : vector<1x32x96xf32> to vector<32x96xf32>
    %c0_20 = arith.constant 0 : index
    %c64_21 = arith.constant 64 : index
    %c0_22 = arith.constant 0 : index
    %45 = vector.load %arg4[%c0_20, %c64_21, %c0_22] : memref<3x160x128xf32, #tpu.memory_space<vmem>>, vector<1x32x64xf32>
    %46 = vector.shape_cast %45 : vector<1x32x64xf32> to vector<32x64xf32>
    %c0_23 = arith.constant 0 : index
    %c96 = arith.constant 96 : index
    %c0_24 = arith.constant 0 : index
    %47 = vector.load %arg4[%c0_23, %c96, %c0_24] : memref<3x160x128xf32, #tpu.memory_space<vmem>>, vector<1x64x32xf32>
    %48 = vector.shape_cast %47 : vector<1x64x32xf32> to vector<64x32xf32>
    %c0_25 = arith.constant 0 : index
    %c0_26 = arith.constant 0 : index
    %c0_27 = arith.constant 0 : index
    %49 = vector.load %arg5[%c0_25, %c0_26, %c0_27] : memref<3x8x128xf32, #tpu.memory_space<vmem>>, vector<1x1x96xf32>
    %50 = vector.shape_cast %49 : vector<1x1x96xf32> to vector<1x96xf32>
    %c0_28 = arith.constant 0 : index
    %c1 = arith.constant 1 : index
    %c0_29 = arith.constant 0 : index
    %51 = vector.load %arg5[%c0_28, %c1, %c0_29] : memref<3x8x128xf32, #tpu.memory_space<vmem>>, vector<1x1x32xf32>
    %52 = vector.shape_cast %51 : vector<1x1x32xf32> to vector<1x32xf32>
    %c0_30 = arith.constant 0 : index
    %c2 = arith.constant 2 : index
    %c0_31 = arith.constant 0 : index
    %53 = vector.load %arg5[%c0_30, %c2, %c0_31] : memref<3x8x128xf32, #tpu.memory_space<vmem>>, vector<1x1x32xf32>
    %54 = vector.shape_cast %53 : vector<1x1x32xf32> to vector<1x32xf32>
    %c0_32 = arith.constant 0 : index
    %c3 = arith.constant 3 : index
    %c0_33 = arith.constant 0 : index
    %55 = vector.load %arg5[%c0_32, %c3, %c0_33] : memref<3x8x128xf32, #tpu.memory_space<vmem>>, vector<1x1x32xf32>
    %56 = vector.shape_cast %55 : vector<1x1x32xf32> to vector<1x32xf32>
    %c0_34 = arith.constant 0 : index
    %c4 = arith.constant 4 : index
    %c0_35 = arith.constant 0 : index
    %57 = vector.load %arg5[%c0_34, %c4, %c0_35] : memref<3x8x128xf32, #tpu.memory_space<vmem>>, vector<1x1x64xf32>
    %58 = vector.shape_cast %57 : vector<1x1x64xf32> to vector<1x64xf32>
    %c0_36 = arith.constant 0 : index
    %c5 = arith.constant 5 : index
    %c0_37 = arith.constant 0 : index
    %59 = vector.load %arg5[%c0_36, %c5, %c0_37] : memref<3x8x128xf32, #tpu.memory_space<vmem>>, vector<1x1x32xf32>
    %60 = vector.shape_cast %59 : vector<1x1x32xf32> to vector<1x32xf32>
    %c0_38 = arith.constant 0 : index
    %c6 = arith.constant 6 : index
    %c0_39 = arith.constant 0 : index
    %61 = vector.load %arg5[%c0_38, %c6, %c0_39] : memref<3x8x128xf32, #tpu.memory_space<vmem>>, vector<1x1x32xf32>
    %62 = vector.shape_cast %61 : vector<1x1x32xf32> to vector<1x32xf32>
    %c0_40 = arith.constant 0 : index
    %c7 = arith.constant 7 : index
    %c0_41 = arith.constant 0 : index
    %63 = vector.load %arg5[%c0_40, %c7, %c0_41] : memref<3x8x128xf32, #tpu.memory_space<vmem>>, vector<1x1x32xf32>
    %64 = vector.shape_cast %63 : vector<1x1x32xf32> to vector<1x32xf32>
    %cst_42 = arith.constant dense<0.000000e+00> : vector<16x96xf32>
    %65 = tpu.matmul %33, %44, %cst_42 {dimension_numbers = #tpu.dot_dimension_numbers<[1], [0], [0], [1], [0, 0, 1, 1], [], []>} : vector<16x32xf32>, vector<32x96xf32>, vector<16x96xf32> -> vector<16x96xf32>
    %66 = vector.broadcast %50 : vector<1x96xf32> to vector<16x96xf32>
    %67 = arith.addf %65, %66 : vector<16x96xf32>
    %68 = vector.extract_strided_slice %67 {offsets = [0, 0], sizes = [16, 8], strides = [1, 1]} : vector<16x96xf32> to vector<16x8xf32>
    %69 = vector.extract_strided_slice %67 {offsets = [0, 32], sizes = [16, 8], strides = [1, 1]} : vector<16x96xf32> to vector<16x8xf32>
    %70 = vector.extract_strided_slice %67 {offsets = [0, 64], sizes = [16, 8], strides = [1, 1]} : vector<16x96xf32> to vector<16x8xf32>
    %cst_43 = arith.constant dense<0.000000e+00> : vector<16x16xf32>
    %71 = tpu.matmul %68, %69, %cst_43 {dimension_numbers = #tpu.dot_dimension_numbers<[1], [1], [0], [0], [0, 0, 1, 0], [], []>} : vector<16x8xf32>, vector<16x8xf32>, vector<16x16xf32> -> vector<16x16xf32>
    %72 = arith.addf %71, %42 : vector<16x16xf32>
    %cst_44 = arith.constant dense<0xFF800000> : vector<16xf32>
    %73 = vector.multi_reduction <maximumf>, %72, %cst_44 [1] : vector<16x16xf32> to vector<16xf32>
    %74 = vector.shape_cast %73 : vector<16xf32> to vector<16x1xf32>
    %75 = vector.broadcast %74 : vector<16x1xf32> to vector<16x16xf32>
    %76 = arith.subf %72, %75 : vector<16x16xf32>
    %77 = math.exp %76 : vector<16x16xf32>
    %cst_45 = arith.constant dense<0.000000e+00> : vector<16xf32>
    %78 = vector.multi_reduction <add>, %77, %cst_45 [1] : vector<16x16xf32> to vector<16xf32>
    %79 = vector.shape_cast %78 : vector<16xf32> to vector<16x1xf32>
    %80 = tpu.reciprocal %79 {approx = true} : vector<16x1xf32> -> vector<16x1xf32>
    %81 = vector.broadcast %80 : vector<16x1xf32> to vector<16x16xf32>
    %82 = arith.mulf %77, %81 : vector<16x16xf32>
    %cst_46 = arith.constant dense<0.000000e+00> : vector<16x8xf32>
    %83 = tpu.matmul %82, %70, %cst_46 {dimension_numbers = #tpu.dot_dimension_numbers<[1], [0], [0], [1], [0, 0, 1, 1], [], []>} : vector<16x16xf32>, vector<16x8xf32>, vector<16x8xf32> -> vector<16x8xf32>
    %c0_47 = arith.constant 0 : index
    %c32 = arith.constant 32 : index
    %c0_48 = arith.constant 0 : index
    %84 = vector.load %arg4[%c0_47, %c32, %c0_48] : memref<3x160x128xf32, #tpu.memory_space<vmem>>, vector<1x8x32xf32>
    %85 = vector.shape_cast %84 : vector<1x8x32xf32> to vector<8x32xf32>
    %cst_49 = arith.constant dense<0.000000e+00> : vector<16x32xf32>
    %86 = tpu.matmul %83, %85, %cst_49 {dimension_numbers = #tpu.dot_dimension_numbers<[1], [0], [0], [1], [0, 0, 1, 1], [], []>} : vector<16x8xf32>, vector<8x32xf32>, vector<16x32xf32> -> vector<16x32xf32>
    %87 = vector.extract_strided_slice %67 {offsets = [0, 8], sizes = [16, 8], strides = [1, 1]} : vector<16x96xf32> to vector<16x8xf32>
    %88 = vector.extract_strided_slice %67 {offsets = [0, 40], sizes = [16, 8], strides = [1, 1]} : vector<16x96xf32> to vector<16x8xf32>
    %89 = vector.extract_strided_slice %67 {offsets = [0, 72], sizes = [16, 8], strides = [1, 1]} : vector<16x96xf32> to vector<16x8xf32>
    %cst_50 = arith.constant dense<0.000000e+00> : vector<16x16xf32>
    %90 = tpu.matmul %87, %88, %cst_50 {dimension_numbers = #tpu.dot_dimension_numbers<[1], [1], [0], [0], [0, 0, 1, 0], [], []>} : vector<16x8xf32>, vector<16x8xf32>, vector<16x16xf32> -> vector<16x16xf32>
    %91 = arith.addf %90, %42 : vector<16x16xf32>
    %cst_51 = arith.constant dense<0xFF800000> : vector<16xf32>
    %92 = vector.multi_reduction <maximumf>, %91, %cst_51 [1] : vector<16x16xf32> to vector<16xf32>
    %93 = vector.shape_cast %92 : vector<16xf32> to vector<16x1xf32>
    %94 = vector.broadcast %93 : vector<16x1xf32> to vector<16x16xf32>
    %95 = arith.subf %91, %94 : vector<16x16xf32>
    %96 = math.exp %95 : vector<16x16xf32>
    %cst_52 = arith.constant dense<0.000000e+00> : vector<16xf32>
    %97 = vector.multi_reduction <add>, %96, %cst_52 [1] : vector<16x16xf32> to vector<16xf32>
    %98 = vector.shape_cast %97 : vector<16xf32> to vector<16x1xf32>
    %99 = tpu.reciprocal %98 {approx = true} : vector<16x1xf32> -> vector<16x1xf32>
    %100 = vector.broadcast %99 : vector<16x1xf32> to vector<16x16xf32>
    %101 = arith.mulf %96, %100 : vector<16x16xf32>
    %cst_53 = arith.constant dense<0.000000e+00> : vector<16x8xf32>
    %102 = tpu.matmul %101, %89, %cst_53 {dimension_numbers = #tpu.dot_dimension_numbers<[1], [0], [0], [1], [0, 0, 1, 1], [], []>} : vector<16x16xf32>, vector<16x8xf32>, vector<16x8xf32> -> vector<16x8xf32>
    %c0_54 = arith.constant 0 : index
    %c40 = arith.constant 40 : index
    %c0_55 = arith.constant 0 : index
    %103 = vector.load %arg4[%c0_54, %c40, %c0_55] : memref<3x160x128xf32, #tpu.memory_space<vmem>>, vector<1x8x32xf32>
    %104 = vector.shape_cast %103 : vector<1x8x32xf32> to vector<8x32xf32>
    %cst_56 = arith.constant dense<0.000000e+00> : vector<16x32xf32>
    %105 = tpu.matmul %102, %104, %cst_56 {dimension_numbers = #tpu.dot_dimension_numbers<[1], [0], [0], [1], [0, 0, 1, 1], [], []>} : vector<16x8xf32>, vector<8x32xf32>, vector<16x32xf32> -> vector<16x32xf32>
    %106 = arith.addf %86, %105 : vector<16x32xf32>
    %107 = vector.extract_strided_slice %67 {offsets = [0, 16], sizes = [16, 8], strides = [1, 1]} : vector<16x96xf32> to vector<16x8xf32>
    %108 = vector.extract_strided_slice %67 {offsets = [0, 48], sizes = [16, 8], strides = [1, 1]} : vector<16x96xf32> to vector<16x8xf32>
    %109 = vector.extract_strided_slice %67 {offsets = [0, 80], sizes = [16, 8], strides = [1, 1]} : vector<16x96xf32> to vector<16x8xf32>
    %cst_57 = arith.constant dense<0.000000e+00> : vector<16x16xf32>
    %110 = tpu.matmul %107, %108, %cst_57 {dimension_numbers = #tpu.dot_dimension_numbers<[1], [1], [0], [0], [0, 0, 1, 0], [], []>} : vector<16x8xf32>, vector<16x8xf32>, vector<16x16xf32> -> vector<16x16xf32>
    %111 = arith.addf %110, %42 : vector<16x16xf32>
    %cst_58 = arith.constant dense<0xFF800000> : vector<16xf32>
    %112 = vector.multi_reduction <maximumf>, %111, %cst_58 [1] : vector<16x16xf32> to vector<16xf32>
    %113 = vector.shape_cast %112 : vector<16xf32> to vector<16x1xf32>
    %114 = vector.broadcast %113 : vector<16x1xf32> to vector<16x16xf32>
    %115 = arith.subf %111, %114 : vector<16x16xf32>
    %116 = math.exp %115 : vector<16x16xf32>
    %cst_59 = arith.constant dense<0.000000e+00> : vector<16xf32>
    %117 = vector.multi_reduction <add>, %116, %cst_59 [1] : vector<16x16xf32> to vector<16xf32>
    %118 = vector.shape_cast %117 : vector<16xf32> to vector<16x1xf32>
    %119 = tpu.reciprocal %118 {approx = true} : vector<16x1xf32> -> vector<16x1xf32>
    %120 = vector.broadcast %119 : vector<16x1xf32> to vector<16x16xf32>
    %121 = arith.mulf %116, %120 : vector<16x16xf32>
    %cst_60 = arith.constant dense<0.000000e+00> : vector<16x8xf32>
    %122 = tpu.matmul %121, %109, %cst_60 {dimension_numbers = #tpu.dot_dimension_numbers<[1], [0], [0], [1], [0, 0, 1, 1], [], []>} : vector<16x16xf32>, vector<16x8xf32>, vector<16x8xf32> -> vector<16x8xf32>
    %c0_61 = arith.constant 0 : index
    %c48 = arith.constant 48 : index
    %c0_62 = arith.constant 0 : index
    %123 = vector.load %arg4[%c0_61, %c48, %c0_62] : memref<3x160x128xf32, #tpu.memory_space<vmem>>, vector<1x8x32xf32>
    %124 = vector.shape_cast %123 : vector<1x8x32xf32> to vector<8x32xf32>
    %cst_63 = arith.constant dense<0.000000e+00> : vector<16x32xf32>
    %125 = tpu.matmul %122, %124, %cst_63 {dimension_numbers = #tpu.dot_dimension_numbers<[1], [0], [0], [1], [0, 0, 1, 1], [], []>} : vector<16x8xf32>, vector<8x32xf32>, vector<16x32xf32> -> vector<16x32xf32>
    %126 = arith.addf %106, %125 : vector<16x32xf32>
    %127 = vector.extract_strided_slice %67 {offsets = [0, 24], sizes = [16, 8], strides = [1, 1]} : vector<16x96xf32> to vector<16x8xf32>
    %128 = vector.extract_strided_slice %67 {offsets = [0, 56], sizes = [16, 8], strides = [1, 1]} : vector<16x96xf32> to vector<16x8xf32>
    %129 = vector.extract_strided_slice %67 {offsets = [0, 88], sizes = [16, 8], strides = [1, 1]} : vector<16x96xf32> to vector<16x8xf32>
    %cst_64 = arith.constant dense<0.000000e+00> : vector<16x16xf32>
    %130 = tpu.matmul %127, %128, %cst_64 {dimension_numbers = #tpu.dot_dimension_numbers<[1], [1], [0], [0], [0, 0, 1, 0], [], []>} : vector<16x8xf32>, vector<16x8xf32>, vector<16x16xf32> -> vector<16x16xf32>
    %131 = arith.addf %130, %42 : vector<16x16xf32>
    %cst_65 = arith.constant dense<0xFF800000> : vector<16xf32>
    %132 = vector.multi_reduction <maximumf>, %131, %cst_65 [1] : vector<16x16xf32> to vector<16xf32>
    %133 = vector.shape_cast %132 : vector<16xf32> to vector<16x1xf32>
    %134 = vector.broadcast %133 : vector<16x1xf32> to vector<16x16xf32>
    %135 = arith.subf %131, %134 : vector<16x16xf32>
    %136 = math.exp %135 : vector<16x16xf32>
    %cst_66 = arith.constant dense<0.000000e+00> : vector<16xf32>
    %137 = vector.multi_reduction <add>, %136, %cst_66 [1] : vector<16x16xf32> to vector<16xf32>
    %138 = vector.shape_cast %137 : vector<16xf32> to vector<16x1xf32>
    %139 = tpu.reciprocal %138 {approx = true} : vector<16x1xf32> -> vector<16x1xf32>
    %140 = vector.broadcast %139 : vector<16x1xf32> to vector<16x16xf32>
    %141 = arith.mulf %136, %140 : vector<16x16xf32>
    %cst_67 = arith.constant dense<0.000000e+00> : vector<16x8xf32>
    %142 = tpu.matmul %141, %129, %cst_67 {dimension_numbers = #tpu.dot_dimension_numbers<[1], [0], [0], [1], [0, 0, 1, 1], [], []>} : vector<16x16xf32>, vector<16x8xf32>, vector<16x8xf32> -> vector<16x8xf32>
    %c0_68 = arith.constant 0 : index
    %c56 = arith.constant 56 : index
    %c0_69 = arith.constant 0 : index
    %143 = vector.load %arg4[%c0_68, %c56, %c0_69] : memref<3x160x128xf32, #tpu.memory_space<vmem>>, vector<1x8x32xf32>
    %144 = vector.shape_cast %143 : vector<1x8x32xf32> to vector<8x32xf32>
    %cst_70 = arith.constant dense<0.000000e+00> : vector<16x32xf32>
    %145 = tpu.matmul %142, %144, %cst_70 {dimension_numbers = #tpu.dot_dimension_numbers<[1], [0], [0], [1], [0, 0, 1, 1], [], []>} : vector<16x8xf32>, vector<8x32xf32>, vector<16x32xf32> -> vector<16x32xf32>
    %146 = arith.addf %126, %145 : vector<16x32xf32>
    %147 = vector.broadcast %52 : vector<1x32xf32> to vector<16x32xf32>
    %148 = arith.addf %146, %147 : vector<16x32xf32>
    %149 = arith.addf %33, %148 : vector<16x32xf32>
    %cst_71 = arith.constant dense<0.000000e+00> : vector<16xf32>
    %150 = vector.multi_reduction <add>, %149, %cst_71 [1] : vector<16x32xf32> to vector<16xf32>
    %151 = vector.shape_cast %150 : vector<16xf32> to vector<16x1xf32>
    %cst_72 = arith.constant 3.200000e+01 : f32
    %152 = vector.broadcast %cst_72 : f32 to vector<16x1xf32>
    %153 = arith.divf %151, %152 : vector<16x1xf32>
    %154 = vector.broadcast %153 : vector<16x1xf32> to vector<16x32xf32>
    %155 = arith.subf %149, %154 : vector<16x32xf32>
    %156 = arith.mulf %155, %155 : vector<16x32xf32>
    %cst_73 = arith.constant dense<0.000000e+00> : vector<16xf32>
    %157 = vector.multi_reduction <add>, %156, %cst_73 [1] : vector<16x32xf32> to vector<16xf32>
    %158 = vector.shape_cast %157 : vector<16xf32> to vector<16x1xf32>
    %cst_74 = arith.constant 3.200000e+01 : f32
    %159 = vector.broadcast %cst_74 : f32 to vector<16x1xf32>
    %160 = arith.divf %158, %159 : vector<16x1xf32>
    %161 = vector.broadcast %153 : vector<16x1xf32> to vector<16x32xf32>
    %162 = arith.subf %149, %161 : vector<16x32xf32>
    %cst_75 = arith.constant 9.99999996E-13 : f32
    %163 = vector.broadcast %cst_75 : f32 to vector<16x1xf32>
    %164 = arith.addf %160, %163 : vector<16x1xf32>
    %165 = math.rsqrt %164 : vector<16x1xf32>
    %166 = vector.broadcast %165 : vector<16x1xf32> to vector<16x32xf32>
    %167 = arith.mulf %162, %166 : vector<16x32xf32>
    %168 = vector.broadcast %54 : vector<1x32xf32> to vector<16x32xf32>
    %169 = arith.mulf %167, %168 : vector<16x32xf32>
    %170 = vector.broadcast %56 : vector<1x32xf32> to vector<16x32xf32>
    %171 = arith.addf %169, %170 : vector<16x32xf32>
    %cst_76 = arith.constant dense<0.000000e+00> : vector<16x64xf32>
    %172 = tpu.matmul %171, %46, %cst_76 {dimension_numbers = #tpu.dot_dimension_numbers<[1], [0], [0], [1], [0, 0, 1, 1], [], []>} : vector<16x32xf32>, vector<32x64xf32>, vector<16x64xf32> -> vector<16x64xf32>
    %173 = vector.broadcast %58 : vector<1x64xf32> to vector<16x64xf32>
    %174 = arith.addf %172, %173 : vector<16x64xf32>
    %cst_77 = arith.constant 5.000000e-01 : f32
    %175 = vector.broadcast %cst_77 : f32 to vector<16x64xf32>
    %176 = arith.mulf %175, %174 : vector<16x64xf32>
    %cst_78 = arith.constant 4.471500e-02 : f32
    %177 = vector.broadcast %cst_78 : f32 to vector<16x64xf32>
    %178 = arith.mulf %177, %174 : vector<16x64xf32>
    %179 = arith.mulf %178, %174 : vector<16x64xf32>
    %180 = arith.mulf %179, %174 : vector<16x64xf32>
    %181 = arith.addf %174, %180 : vector<16x64xf32>
    %cst_79 = arith.constant 0.797884583 : f32
    %182 = vector.broadcast %cst_79 : f32 to vector<16x64xf32>
    %183 = arith.mulf %182, %181 : vector<16x64xf32>
    %184 = math.tanh %183 : vector<16x64xf32>
    %cst_80 = arith.constant 1.000000e+00 : f32
    %185 = vector.broadcast %cst_80 : f32 to vector<16x64xf32>
    %186 = arith.addf %185, %184 : vector<16x64xf32>
    %187 = arith.mulf %176, %186 : vector<16x64xf32>
    %cst_81 = arith.constant dense<0.000000e+00> : vector<16x32xf32>
    %188 = tpu.matmul %187, %48, %cst_81 {dimension_numbers = #tpu.dot_dimension_numbers<[1], [0], [0], [1], [0, 0, 1, 1], [], []>} : vector<16x64xf32>, vector<64x32xf32>, vector<16x32xf32> -> vector<16x32xf32>
    %189 = vector.broadcast %60 : vector<1x32xf32> to vector<16x32xf32>
    %190 = arith.addf %188, %189 : vector<16x32xf32>
    %191 = arith.addf %171, %190 : vector<16x32xf32>
    %cst_82 = arith.constant dense<0.000000e+00> : vector<16xf32>
    %192 = vector.multi_reduction <add>, %191, %cst_82 [1] : vector<16x32xf32> to vector<16xf32>
    %193 = vector.shape_cast %192 : vector<16xf32> to vector<16x1xf32>
    %cst_83 = arith.constant 3.200000e+01 : f32
    %194 = vector.broadcast %cst_83 : f32 to vector<16x1xf32>
    %195 = arith.divf %193, %194 : vector<16x1xf32>
    %196 = vector.broadcast %195 : vector<16x1xf32> to vector<16x32xf32>
    %197 = arith.subf %191, %196 : vector<16x32xf32>
    %198 = arith.mulf %197, %197 : vector<16x32xf32>
    %cst_84 = arith.constant dense<0.000000e+00> : vector<16xf32>
    %199 = vector.multi_reduction <add>, %198, %cst_84 [1] : vector<16x32xf32> to vector<16xf32>
    %200 = vector.shape_cast %199 : vector<16xf32> to vector<16x1xf32>
    %cst_85 = arith.constant 3.200000e+01 : f32
    %201 = vector.broadcast %cst_85 : f32 to vector<16x1xf32>
    %202 = arith.divf %200, %201 : vector<16x1xf32>
    %203 = vector.broadcast %195 : vector<16x1xf32> to vector<16x32xf32>
    %204 = arith.subf %191, %203 : vector<16x32xf32>
    %cst_86 = arith.constant 9.99999996E-13 : f32
    %205 = vector.broadcast %cst_86 : f32 to vector<16x1xf32>
    %206 = arith.addf %202, %205 : vector<16x1xf32>
    %207 = math.rsqrt %206 : vector<16x1xf32>
    %208 = vector.broadcast %207 : vector<16x1xf32> to vector<16x32xf32>
    %209 = arith.mulf %204, %208 : vector<16x32xf32>
    %210 = vector.broadcast %62 : vector<1x32xf32> to vector<16x32xf32>
    %211 = arith.mulf %209, %210 : vector<16x32xf32>
    %212 = vector.broadcast %64 : vector<1x32xf32> to vector<16x32xf32>
    %213 = arith.addf %211, %212 : vector<16x32xf32>
    %c1_87 = arith.constant 1 : index
    %c0_88 = arith.constant 0 : index
    %c0_89 = arith.constant 0 : index
    %214 = vector.load %arg4[%c1_87, %c0_88, %c0_89] : memref<3x160x128xf32, #tpu.memory_space<vmem>>, vector<1x32x96xf32>
    %215 = vector.shape_cast %214 : vector<1x32x96xf32> to vector<32x96xf32>
    %c1_90 = arith.constant 1 : index
    %c64_91 = arith.constant 64 : index
    %c0_92 = arith.constant 0 : index
    %216 = vector.load %arg4[%c1_90, %c64_91, %c0_92] : memref<3x160x128xf32, #tpu.memory_space<vmem>>, vector<1x32x64xf32>
    %217 = vector.shape_cast %216 : vector<1x32x64xf32> to vector<32x64xf32>
    %c1_93 = arith.constant 1 : index
    %c96_94 = arith.constant 96 : index
    %c0_95 = arith.constant 0 : index
    %218 = vector.load %arg4[%c1_93, %c96_94, %c0_95] : memref<3x160x128xf32, #tpu.memory_space<vmem>>, vector<1x64x32xf32>
    %219 = vector.shape_cast %218 : vector<1x64x32xf32> to vector<64x32xf32>
    %c1_96 = arith.constant 1 : index
    %c0_97 = arith.constant 0 : index
    %c0_98 = arith.constant 0 : index
    %220 = vector.load %arg5[%c1_96, %c0_97, %c0_98] : memref<3x8x128xf32, #tpu.memory_space<vmem>>, vector<1x1x96xf32>
    %221 = vector.shape_cast %220 : vector<1x1x96xf32> to vector<1x96xf32>
    %c1_99 = arith.constant 1 : index
    %c1_100 = arith.constant 1 : index
    %c0_101 = arith.constant 0 : index
    %222 = vector.load %arg5[%c1_99, %c1_100, %c0_101] : memref<3x8x128xf32, #tpu.memory_space<vmem>>, vector<1x1x32xf32>
    %223 = vector.shape_cast %222 : vector<1x1x32xf32> to vector<1x32xf32>
    %c1_102 = arith.constant 1 : index
    %c2_103 = arith.constant 2 : index
    %c0_104 = arith.constant 0 : index
    %224 = vector.load %arg5[%c1_102, %c2_103, %c0_104] : memref<3x8x128xf32, #tpu.memory_space<vmem>>, vector<1x1x32xf32>
    %225 = vector.shape_cast %224 : vector<1x1x32xf32> to vector<1x32xf32>
    %c1_105 = arith.constant 1 : index
    %c3_106 = arith.constant 3 : index
    %c0_107 = arith.constant 0 : index
    %226 = vector.load %arg5[%c1_105, %c3_106, %c0_107] : memref<3x8x128xf32, #tpu.memory_space<vmem>>, vector<1x1x32xf32>
    %227 = vector.shape_cast %226 : vector<1x1x32xf32> to vector<1x32xf32>
    %c1_108 = arith.constant 1 : index
    %c4_109 = arith.constant 4 : index
    %c0_110 = arith.constant 0 : index
    %228 = vector.load %arg5[%c1_108, %c4_109, %c0_110] : memref<3x8x128xf32, #tpu.memory_space<vmem>>, vector<1x1x64xf32>
    %229 = vector.shape_cast %228 : vector<1x1x64xf32> to vector<1x64xf32>
    %c1_111 = arith.constant 1 : index
    %c5_112 = arith.constant 5 : index
    %c0_113 = arith.constant 0 : index
    %230 = vector.load %arg5[%c1_111, %c5_112, %c0_113] : memref<3x8x128xf32, #tpu.memory_space<vmem>>, vector<1x1x32xf32>
    %231 = vector.shape_cast %230 : vector<1x1x32xf32> to vector<1x32xf32>
    %c1_114 = arith.constant 1 : index
    %c6_115 = arith.constant 6 : index
    %c0_116 = arith.constant 0 : index
    %232 = vector.load %arg5[%c1_114, %c6_115, %c0_116] : memref<3x8x128xf32, #tpu.memory_space<vmem>>, vector<1x1x32xf32>
    %233 = vector.shape_cast %232 : vector<1x1x32xf32> to vector<1x32xf32>
    %c1_117 = arith.constant 1 : index
    %c7_118 = arith.constant 7 : index
    %c0_119 = arith.constant 0 : index
    %234 = vector.load %arg5[%c1_117, %c7_118, %c0_119] : memref<3x8x128xf32, #tpu.memory_space<vmem>>, vector<1x1x32xf32>
    %235 = vector.shape_cast %234 : vector<1x1x32xf32> to vector<1x32xf32>
    %cst_120 = arith.constant dense<0.000000e+00> : vector<16x96xf32>
    %236 = tpu.matmul %213, %215, %cst_120 {dimension_numbers = #tpu.dot_dimension_numbers<[1], [0], [0], [1], [0, 0, 1, 1], [], []>} : vector<16x32xf32>, vector<32x96xf32>, vector<16x96xf32> -> vector<16x96xf32>
    %237 = vector.broadcast %221 : vector<1x96xf32> to vector<16x96xf32>
    %238 = arith.addf %236, %237 : vector<16x96xf32>
    %239 = vector.extract_strided_slice %238 {offsets = [0, 0], sizes = [16, 8], strides = [1, 1]} : vector<16x96xf32> to vector<16x8xf32>
    %240 = vector.extract_strided_slice %238 {offsets = [0, 32], sizes = [16, 8], strides = [1, 1]} : vector<16x96xf32> to vector<16x8xf32>
    %241 = vector.extract_strided_slice %238 {offsets = [0, 64], sizes = [16, 8], strides = [1, 1]} : vector<16x96xf32> to vector<16x8xf32>
    %cst_121 = arith.constant dense<0.000000e+00> : vector<16x16xf32>
    %242 = tpu.matmul %239, %240, %cst_121 {dimension_numbers = #tpu.dot_dimension_numbers<[1], [1], [0], [0], [0, 0, 1, 0], [], []>} : vector<16x8xf32>, vector<16x8xf32>, vector<16x16xf32> -> vector<16x16xf32>
    %243 = arith.addf %242, %42 : vector<16x16xf32>
    %cst_122 = arith.constant dense<0xFF800000> : vector<16xf32>
    %244 = vector.multi_reduction <maximumf>, %243, %cst_122 [1] : vector<16x16xf32> to vector<16xf32>
    %245 = vector.shape_cast %244 : vector<16xf32> to vector<16x1xf32>
    %246 = vector.broadcast %245 : vector<16x1xf32> to vector<16x16xf32>
    %247 = arith.subf %243, %246 : vector<16x16xf32>
    %248 = math.exp %247 : vector<16x16xf32>
    %cst_123 = arith.constant dense<0.000000e+00> : vector<16xf32>
    %249 = vector.multi_reduction <add>, %248, %cst_123 [1] : vector<16x16xf32> to vector<16xf32>
    %250 = vector.shape_cast %249 : vector<16xf32> to vector<16x1xf32>
    %251 = tpu.reciprocal %250 {approx = true} : vector<16x1xf32> -> vector<16x1xf32>
    %252 = vector.broadcast %251 : vector<16x1xf32> to vector<16x16xf32>
    %253 = arith.mulf %248, %252 : vector<16x16xf32>
    %cst_124 = arith.constant dense<0.000000e+00> : vector<16x8xf32>
    %254 = tpu.matmul %253, %241, %cst_124 {dimension_numbers = #tpu.dot_dimension_numbers<[1], [0], [0], [1], [0, 0, 1, 1], [], []>} : vector<16x16xf32>, vector<16x8xf32>, vector<16x8xf32> -> vector<16x8xf32>
    %c1_125 = arith.constant 1 : index
    %c32_126 = arith.constant 32 : index
    %c0_127 = arith.constant 0 : index
    %255 = vector.load %arg4[%c1_125, %c32_126, %c0_127] : memref<3x160x128xf32, #tpu.memory_space<vmem>>, vector<1x8x32xf32>
    %256 = vector.shape_cast %255 : vector<1x8x32xf32> to vector<8x32xf32>
    %cst_128 = arith.constant dense<0.000000e+00> : vector<16x32xf32>
    %257 = tpu.matmul %254, %256, %cst_128 {dimension_numbers = #tpu.dot_dimension_numbers<[1], [0], [0], [1], [0, 0, 1, 1], [], []>} : vector<16x8xf32>, vector<8x32xf32>, vector<16x32xf32> -> vector<16x32xf32>
    %258 = vector.extract_strided_slice %238 {offsets = [0, 8], sizes = [16, 8], strides = [1, 1]} : vector<16x96xf32> to vector<16x8xf32>
    %259 = vector.extract_strided_slice %238 {offsets = [0, 40], sizes = [16, 8], strides = [1, 1]} : vector<16x96xf32> to vector<16x8xf32>
    %260 = vector.extract_strided_slice %238 {offsets = [0, 72], sizes = [16, 8], strides = [1, 1]} : vector<16x96xf32> to vector<16x8xf32>
    %cst_129 = arith.constant dense<0.000000e+00> : vector<16x16xf32>
    %261 = tpu.matmul %258, %259, %cst_129 {dimension_numbers = #tpu.dot_dimension_numbers<[1], [1], [0], [0], [0, 0, 1, 0], [], []>} : vector<16x8xf32>, vector<16x8xf32>, vector<16x16xf32> -> vector<16x16xf32>
    %262 = arith.addf %261, %42 : vector<16x16xf32>
    %cst_130 = arith.constant dense<0xFF800000> : vector<16xf32>
    %263 = vector.multi_reduction <maximumf>, %262, %cst_130 [1] : vector<16x16xf32> to vector<16xf32>
    %264 = vector.shape_cast %263 : vector<16xf32> to vector<16x1xf32>
    %265 = vector.broadcast %264 : vector<16x1xf32> to vector<16x16xf32>
    %266 = arith.subf %262, %265 : vector<16x16xf32>
    %267 = math.exp %266 : vector<16x16xf32>
    %cst_131 = arith.constant dense<0.000000e+00> : vector<16xf32>
    %268 = vector.multi_reduction <add>, %267, %cst_131 [1] : vector<16x16xf32> to vector<16xf32>
    %269 = vector.shape_cast %268 : vector<16xf32> to vector<16x1xf32>
    %270 = tpu.reciprocal %269 {approx = true} : vector<16x1xf32> -> vector<16x1xf32>
    %271 = vector.broadcast %270 : vector<16x1xf32> to vector<16x16xf32>
    %272 = arith.mulf %267, %271 : vector<16x16xf32>
    %cst_132 = arith.constant dense<0.000000e+00> : vector<16x8xf32>
    %273 = tpu.matmul %272, %260, %cst_132 {dimension_numbers = #tpu.dot_dimension_numbers<[1], [0], [0], [1], [0, 0, 1, 1], [], []>} : vector<16x16xf32>, vector<16x8xf32>, vector<16x8xf32> -> vector<16x8xf32>
    %c1_133 = arith.constant 1 : index
    %c40_134 = arith.constant 40 : index
    %c0_135 = arith.constant 0 : index
    %274 = vector.load %arg4[%c1_133, %c40_134, %c0_135] : memref<3x160x128xf32, #tpu.memory_space<vmem>>, vector<1x8x32xf32>
    %275 = vector.shape_cast %274 : vector<1x8x32xf32> to vector<8x32xf32>
    %cst_136 = arith.constant dense<0.000000e+00> : vector<16x32xf32>
    %276 = tpu.matmul %273, %275, %cst_136 {dimension_numbers = #tpu.dot_dimension_numbers<[1], [0], [0], [1], [0, 0, 1, 1], [], []>} : vector<16x8xf32>, vector<8x32xf32>, vector<16x32xf32> -> vector<16x32xf32>
    %277 = arith.addf %257, %276 : vector<16x32xf32>
    %278 = vector.extract_strided_slice %238 {offsets = [0, 16], sizes = [16, 8], strides = [1, 1]} : vector<16x96xf32> to vector<16x8xf32>
    %279 = vector.extract_strided_slice %238 {offsets = [0, 48], sizes = [16, 8], strides = [1, 1]} : vector<16x96xf32> to vector<16x8xf32>
    %280 = vector.extract_strided_slice %238 {offsets = [0, 80], sizes = [16, 8], strides = [1, 1]} : vector<16x96xf32> to vector<16x8xf32>
    %cst_137 = arith.constant dense<0.000000e+00> : vector<16x16xf32>
    %281 = tpu.matmul %278, %279, %cst_137 {dimension_numbers = #tpu.dot_dimension_numbers<[1], [1], [0], [0], [0, 0, 1, 0], [], []>} : vector<16x8xf32>, vector<16x8xf32>, vector<16x16xf32> -> vector<16x16xf32>
    %282 = arith.addf %281, %42 : vector<16x16xf32>
    %cst_138 = arith.constant dense<0xFF800000> : vector<16xf32>
    %283 = vector.multi_reduction <maximumf>, %282, %cst_138 [1] : vector<16x16xf32> to vector<16xf32>
    %284 = vector.shape_cast %283 : vector<16xf32> to vector<16x1xf32>
    %285 = vector.broadcast %284 : vector<16x1xf32> to vector<16x16xf32>
    %286 = arith.subf %282, %285 : vector<16x16xf32>
    %287 = math.exp %286 : vector<16x16xf32>
    %cst_139 = arith.constant dense<0.000000e+00> : vector<16xf32>
    %288 = vector.multi_reduction <add>, %287, %cst_139 [1] : vector<16x16xf32> to vector<16xf32>
    %289 = vector.shape_cast %288 : vector<16xf32> to vector<16x1xf32>
    %290 = tpu.reciprocal %289 {approx = true} : vector<16x1xf32> -> vector<16x1xf32>
    %291 = vector.broadcast %290 : vector<16x1xf32> to vector<16x16xf32>
    %292 = arith.mulf %287, %291 : vector<16x16xf32>
    %cst_140 = arith.constant dense<0.000000e+00> : vector<16x8xf32>
    %293 = tpu.matmul %292, %280, %cst_140 {dimension_numbers = #tpu.dot_dimension_numbers<[1], [0], [0], [1], [0, 0, 1, 1], [], []>} : vector<16x16xf32>, vector<16x8xf32>, vector<16x8xf32> -> vector<16x8xf32>
    %c1_141 = arith.constant 1 : index
    %c48_142 = arith.constant 48 : index
    %c0_143 = arith.constant 0 : index
    %294 = vector.load %arg4[%c1_141, %c48_142, %c0_143] : memref<3x160x128xf32, #tpu.memory_space<vmem>>, vector<1x8x32xf32>
    %295 = vector.shape_cast %294 : vector<1x8x32xf32> to vector<8x32xf32>
    %cst_144 = arith.constant dense<0.000000e+00> : vector<16x32xf32>
    %296 = tpu.matmul %293, %295, %cst_144 {dimension_numbers = #tpu.dot_dimension_numbers<[1], [0], [0], [1], [0, 0, 1, 1], [], []>} : vector<16x8xf32>, vector<8x32xf32>, vector<16x32xf32> -> vector<16x32xf32>
    %297 = arith.addf %277, %296 : vector<16x32xf32>
    %298 = vector.extract_strided_slice %238 {offsets = [0, 24], sizes = [16, 8], strides = [1, 1]} : vector<16x96xf32> to vector<16x8xf32>
    %299 = vector.extract_strided_slice %238 {offsets = [0, 56], sizes = [16, 8], strides = [1, 1]} : vector<16x96xf32> to vector<16x8xf32>
    %300 = vector.extract_strided_slice %238 {offsets = [0, 88], sizes = [16, 8], strides = [1, 1]} : vector<16x96xf32> to vector<16x8xf32>
    %cst_145 = arith.constant dense<0.000000e+00> : vector<16x16xf32>
    %301 = tpu.matmul %298, %299, %cst_145 {dimension_numbers = #tpu.dot_dimension_numbers<[1], [1], [0], [0], [0, 0, 1, 0], [], []>} : vector<16x8xf32>, vector<16x8xf32>, vector<16x16xf32> -> vector<16x16xf32>
    %302 = arith.addf %301, %42 : vector<16x16xf32>
    %cst_146 = arith.constant dense<0xFF800000> : vector<16xf32>
    %303 = vector.multi_reduction <maximumf>, %302, %cst_146 [1] : vector<16x16xf32> to vector<16xf32>
    %304 = vector.shape_cast %303 : vector<16xf32> to vector<16x1xf32>
    %305 = vector.broadcast %304 : vector<16x1xf32> to vector<16x16xf32>
    %306 = arith.subf %302, %305 : vector<16x16xf32>
    %307 = math.exp %306 : vector<16x16xf32>
    %cst_147 = arith.constant dense<0.000000e+00> : vector<16xf32>
    %308 = vector.multi_reduction <add>, %307, %cst_147 [1] : vector<16x16xf32> to vector<16xf32>
    %309 = vector.shape_cast %308 : vector<16xf32> to vector<16x1xf32>
    %310 = tpu.reciprocal %309 {approx = true} : vector<16x1xf32> -> vector<16x1xf32>
    %311 = vector.broadcast %310 : vector<16x1xf32> to vector<16x16xf32>
    %312 = arith.mulf %307, %311 : vector<16x16xf32>
    %cst_148 = arith.constant dense<0.000000e+00> : vector<16x8xf32>
    %313 = tpu.matmul %312, %300, %cst_148 {dimension_numbers = #tpu.dot_dimension_numbers<[1], [0], [0], [1], [0, 0, 1, 1], [], []>} : vector<16x16xf32>, vector<16x8xf32>, vector<16x8xf32> -> vector<16x8xf32>
    %c1_149 = arith.constant 1 : index
    %c56_150 = arith.constant 56 : index
    %c0_151 = arith.constant 0 : index
    %314 = vector.load %arg4[%c1_149, %c56_150, %c0_151] : memref<3x160x128xf32, #tpu.memory_space<vmem>>, vector<1x8x32xf32>
    %315 = vector.shape_cast %314 : vector<1x8x32xf32> to vector<8x32xf32>
    %cst_152 = arith.constant dense<0.000000e+00> : vector<16x32xf32>
    %316 = tpu.matmul %313, %315, %cst_152 {dimension_numbers = #tpu.dot_dimension_numbers<[1], [0], [0], [1], [0, 0, 1, 1], [], []>} : vector<16x8xf32>, vector<8x32xf32>, vector<16x32xf32> -> vector<16x32xf32>
    %317 = arith.addf %297, %316 : vector<16x32xf32>
    %318 = vector.broadcast %223 : vector<1x32xf32> to vector<16x32xf32>
    %319 = arith.addf %317, %318 : vector<16x32xf32>
    %320 = arith.addf %213, %319 : vector<16x32xf32>
    %cst_153 = arith.constant dense<0.000000e+00> : vector<16xf32>
    %321 = vector.multi_reduction <add>, %320, %cst_153 [1] : vector<16x32xf32> to vector<16xf32>
    %322 = vector.shape_cast %321 : vector<16xf32> to vector<16x1xf32>
    %cst_154 = arith.constant 3.200000e+01 : f32
    %323 = vector.broadcast %cst_154 : f32 to vector<16x1xf32>
    %324 = arith.divf %322, %323 : vector<16x1xf32>
    %325 = vector.broadcast %324 : vector<16x1xf32> to vector<16x32xf32>
    %326 = arith.subf %320, %325 : vector<16x32xf32>
    %327 = arith.mulf %326, %326 : vector<16x32xf32>
    %cst_155 = arith.constant dense<0.000000e+00> : vector<16xf32>
    %328 = vector.multi_reduction <add>, %327, %cst_155 [1] : vector<16x32xf32> to vector<16xf32>
    %329 = vector.shape_cast %328 : vector<16xf32> to vector<16x1xf32>
    %cst_156 = arith.constant 3.200000e+01 : f32
    %330 = vector.broadcast %cst_156 : f32 to vector<16x1xf32>
    %331 = arith.divf %329, %330 : vector<16x1xf32>
    %332 = vector.broadcast %324 : vector<16x1xf32> to vector<16x32xf32>
    %333 = arith.subf %320, %332 : vector<16x32xf32>
    %cst_157 = arith.constant 9.99999996E-13 : f32
    %334 = vector.broadcast %cst_157 : f32 to vector<16x1xf32>
    %335 = arith.addf %331, %334 : vector<16x1xf32>
    %336 = math.rsqrt %335 : vector<16x1xf32>
    %337 = vector.broadcast %336 : vector<16x1xf32> to vector<16x32xf32>
    %338 = arith.mulf %333, %337 : vector<16x32xf32>
    %339 = vector.broadcast %225 : vector<1x32xf32> to vector<16x32xf32>
    %340 = arith.mulf %338, %339 : vector<16x32xf32>
    %341 = vector.broadcast %227 : vector<1x32xf32> to vector<16x32xf32>
    %342 = arith.addf %340, %341 : vector<16x32xf32>
    %cst_158 = arith.constant dense<0.000000e+00> : vector<16x64xf32>
    %343 = tpu.matmul %342, %217, %cst_158 {dimension_numbers = #tpu.dot_dimension_numbers<[1], [0], [0], [1], [0, 0, 1, 1], [], []>} : vector<16x32xf32>, vector<32x64xf32>, vector<16x64xf32> -> vector<16x64xf32>
    %344 = vector.broadcast %229 : vector<1x64xf32> to vector<16x64xf32>
    %345 = arith.addf %343, %344 : vector<16x64xf32>
    %cst_159 = arith.constant 5.000000e-01 : f32
    %346 = vector.broadcast %cst_159 : f32 to vector<16x64xf32>
    %347 = arith.mulf %346, %345 : vector<16x64xf32>
    %cst_160 = arith.constant 4.471500e-02 : f32
    %348 = vector.broadcast %cst_160 : f32 to vector<16x64xf32>
    %349 = arith.mulf %348, %345 : vector<16x64xf32>
    %350 = arith.mulf %349, %345 : vector<16x64xf32>
    %351 = arith.mulf %350, %345 : vector<16x64xf32>
    %352 = arith.addf %345, %351 : vector<16x64xf32>
    %cst_161 = arith.constant 0.797884583 : f32
    %353 = vector.broadcast %cst_161 : f32 to vector<16x64xf32>
    %354 = arith.mulf %353, %352 : vector<16x64xf32>
    %355 = math.tanh %354 : vector<16x64xf32>
    %cst_162 = arith.constant 1.000000e+00 : f32
    %356 = vector.broadcast %cst_162 : f32 to vector<16x64xf32>
    %357 = arith.addf %356, %355 : vector<16x64xf32>
    %358 = arith.mulf %347, %357 : vector<16x64xf32>
    %cst_163 = arith.constant dense<0.000000e+00> : vector<16x32xf32>
    %359 = tpu.matmul %358, %219, %cst_163 {dimension_numbers = #tpu.dot_dimension_numbers<[1], [0], [0], [1], [0, 0, 1, 1], [], []>} : vector<16x64xf32>, vector<64x32xf32>, vector<16x32xf32> -> vector<16x32xf32>
    %360 = vector.broadcast %231 : vector<1x32xf32> to vector<16x32xf32>
    %361 = arith.addf %359, %360 : vector<16x32xf32>
    %362 = arith.addf %342, %361 : vector<16x32xf32>
    %cst_164 = arith.constant dense<0.000000e+00> : vector<16xf32>
    %363 = vector.multi_reduction <add>, %362, %cst_164 [1] : vector<16x32xf32> to vector<16xf32>
    %364 = vector.shape_cast %363 : vector<16xf32> to vector<16x1xf32>
    %cst_165 = arith.constant 3.200000e+01 : f32
    %365 = vector.broadcast %cst_165 : f32 to vector<16x1xf32>
    %366 = arith.divf %364, %365 : vector<16x1xf32>
    %367 = vector.broadcast %366 : vector<16x1xf32> to vector<16x32xf32>
    %368 = arith.subf %362, %367 : vector<16x32xf32>
    %369 = arith.mulf %368, %368 : vector<16x32xf32>
    %cst_166 = arith.constant dense<0.000000e+00> : vector<16xf32>
    %370 = vector.multi_reduction <add>, %369, %cst_166 [1] : vector<16x32xf32> to vector<16xf32>
    %371 = vector.shape_cast %370 : vector<16xf32> to vector<16x1xf32>
    %cst_167 = arith.constant 3.200000e+01 : f32
    %372 = vector.broadcast %cst_167 : f32 to vector<16x1xf32>
    %373 = arith.divf %371, %372 : vector<16x1xf32>
    %374 = vector.broadcast %366 : vector<16x1xf32> to vector<16x32xf32>
    %375 = arith.subf %362, %374 : vector<16x32xf32>
    %cst_168 = arith.constant 9.99999996E-13 : f32
    %376 = vector.broadcast %cst_168 : f32 to vector<16x1xf32>
    %377 = arith.addf %373, %376 : vector<16x1xf32>
    %378 = math.rsqrt %377 : vector<16x1xf32>
    %379 = vector.broadcast %378 : vector<16x1xf32> to vector<16x32xf32>
    %380 = arith.mulf %375, %379 : vector<16x32xf32>
    %381 = vector.broadcast %233 : vector<1x32xf32> to vector<16x32xf32>
    %382 = arith.mulf %380, %381 : vector<16x32xf32>
    %383 = vector.broadcast %235 : vector<1x32xf32> to vector<16x32xf32>
    %384 = arith.addf %382, %383 : vector<16x32xf32>
    %c2_169 = arith.constant 2 : index
    %c0_170 = arith.constant 0 : index
    %c0_171 = arith.constant 0 : index
    %385 = vector.load %arg4[%c2_169, %c0_170, %c0_171] : memref<3x160x128xf32, #tpu.memory_space<vmem>>, vector<1x32x96xf32>
    %386 = vector.shape_cast %385 : vector<1x32x96xf32> to vector<32x96xf32>
    %c2_172 = arith.constant 2 : index
    %c64_173 = arith.constant 64 : index
    %c0_174 = arith.constant 0 : index
    %387 = vector.load %arg4[%c2_172, %c64_173, %c0_174] : memref<3x160x128xf32, #tpu.memory_space<vmem>>, vector<1x32x64xf32>
    %388 = vector.shape_cast %387 : vector<1x32x64xf32> to vector<32x64xf32>
    %c2_175 = arith.constant 2 : index
    %c96_176 = arith.constant 96 : index
    %c0_177 = arith.constant 0 : index
    %389 = vector.load %arg4[%c2_175, %c96_176, %c0_177] : memref<3x160x128xf32, #tpu.memory_space<vmem>>, vector<1x64x32xf32>
    %390 = vector.shape_cast %389 : vector<1x64x32xf32> to vector<64x32xf32>
    %c2_178 = arith.constant 2 : index
    %c0_179 = arith.constant 0 : index
    %c0_180 = arith.constant 0 : index
    %391 = vector.load %arg5[%c2_178, %c0_179, %c0_180] : memref<3x8x128xf32, #tpu.memory_space<vmem>>, vector<1x1x96xf32>
    %392 = vector.shape_cast %391 : vector<1x1x96xf32> to vector<1x96xf32>
    %c2_181 = arith.constant 2 : index
    %c1_182 = arith.constant 1 : index
    %c0_183 = arith.constant 0 : index
    %393 = vector.load %arg5[%c2_181, %c1_182, %c0_183] : memref<3x8x128xf32, #tpu.memory_space<vmem>>, vector<1x1x32xf32>
    %394 = vector.shape_cast %393 : vector<1x1x32xf32> to vector<1x32xf32>
    %c2_184 = arith.constant 2 : index
    %c2_185 = arith.constant 2 : index
    %c0_186 = arith.constant 0 : index
    %395 = vector.load %arg5[%c2_184, %c2_185, %c0_186] : memref<3x8x128xf32, #tpu.memory_space<vmem>>, vector<1x1x32xf32>
    %396 = vector.shape_cast %395 : vector<1x1x32xf32> to vector<1x32xf32>
    %c2_187 = arith.constant 2 : index
    %c3_188 = arith.constant 3 : index
    %c0_189 = arith.constant 0 : index
    %397 = vector.load %arg5[%c2_187, %c3_188, %c0_189] : memref<3x8x128xf32, #tpu.memory_space<vmem>>, vector<1x1x32xf32>
    %398 = vector.shape_cast %397 : vector<1x1x32xf32> to vector<1x32xf32>
    %c2_190 = arith.constant 2 : index
    %c4_191 = arith.constant 4 : index
    %c0_192 = arith.constant 0 : index
    %399 = vector.load %arg5[%c2_190, %c4_191, %c0_192] : memref<3x8x128xf32, #tpu.memory_space<vmem>>, vector<1x1x64xf32>
    %400 = vector.shape_cast %399 : vector<1x1x64xf32> to vector<1x64xf32>
    %c2_193 = arith.constant 2 : index
    %c5_194 = arith.constant 5 : index
    %c0_195 = arith.constant 0 : index
    %401 = vector.load %arg5[%c2_193, %c5_194, %c0_195] : memref<3x8x128xf32, #tpu.memory_space<vmem>>, vector<1x1x32xf32>
    %402 = vector.shape_cast %401 : vector<1x1x32xf32> to vector<1x32xf32>
    %c2_196 = arith.constant 2 : index
    %c6_197 = arith.constant 6 : index
    %c0_198 = arith.constant 0 : index
    %403 = vector.load %arg5[%c2_196, %c6_197, %c0_198] : memref<3x8x128xf32, #tpu.memory_space<vmem>>, vector<1x1x32xf32>
    %404 = vector.shape_cast %403 : vector<1x1x32xf32> to vector<1x32xf32>
    %c2_199 = arith.constant 2 : index
    %c7_200 = arith.constant 7 : index
    %c0_201 = arith.constant 0 : index
    %405 = vector.load %arg5[%c2_199, %c7_200, %c0_201] : memref<3x8x128xf32, #tpu.memory_space<vmem>>, vector<1x1x32xf32>
    %406 = vector.shape_cast %405 : vector<1x1x32xf32> to vector<1x32xf32>
    %cst_202 = arith.constant dense<0.000000e+00> : vector<16x96xf32>
    %407 = tpu.matmul %384, %386, %cst_202 {dimension_numbers = #tpu.dot_dimension_numbers<[1], [0], [0], [1], [0, 0, 1, 1], [], []>} : vector<16x32xf32>, vector<32x96xf32>, vector<16x96xf32> -> vector<16x96xf32>
    %408 = vector.broadcast %392 : vector<1x96xf32> to vector<16x96xf32>
    %409 = arith.addf %407, %408 : vector<16x96xf32>
    %410 = vector.extract_strided_slice %409 {offsets = [0, 0], sizes = [16, 8], strides = [1, 1]} : vector<16x96xf32> to vector<16x8xf32>
    %411 = vector.extract_strided_slice %409 {offsets = [0, 32], sizes = [16, 8], strides = [1, 1]} : vector<16x96xf32> to vector<16x8xf32>
    %412 = vector.extract_strided_slice %409 {offsets = [0, 64], sizes = [16, 8], strides = [1, 1]} : vector<16x96xf32> to vector<16x8xf32>
    %cst_203 = arith.constant dense<0.000000e+00> : vector<16x16xf32>
    %413 = tpu.matmul %410, %411, %cst_203 {dimension_numbers = #tpu.dot_dimension_numbers<[1], [1], [0], [0], [0, 0, 1, 0], [], []>} : vector<16x8xf32>, vector<16x8xf32>, vector<16x16xf32> -> vector<16x16xf32>
    %414 = arith.addf %413, %42 : vector<16x16xf32>
    %cst_204 = arith.constant dense<0xFF800000> : vector<16xf32>
    %415 = vector.multi_reduction <maximumf>, %414, %cst_204 [1] : vector<16x16xf32> to vector<16xf32>
    %416 = vector.shape_cast %415 : vector<16xf32> to vector<16x1xf32>
    %417 = vector.broadcast %416 : vector<16x1xf32> to vector<16x16xf32>
    %418 = arith.subf %414, %417 : vector<16x16xf32>
    %419 = math.exp %418 : vector<16x16xf32>
    %cst_205 = arith.constant dense<0.000000e+00> : vector<16xf32>
    %420 = vector.multi_reduction <add>, %419, %cst_205 [1] : vector<16x16xf32> to vector<16xf32>
    %421 = vector.shape_cast %420 : vector<16xf32> to vector<16x1xf32>
    %422 = tpu.reciprocal %421 {approx = true} : vector<16x1xf32> -> vector<16x1xf32>
    %423 = vector.broadcast %422 : vector<16x1xf32> to vector<16x16xf32>
    %424 = arith.mulf %419, %423 : vector<16x16xf32>
    %cst_206 = arith.constant dense<0.000000e+00> : vector<16x8xf32>
    %425 = tpu.matmul %424, %412, %cst_206 {dimension_numbers = #tpu.dot_dimension_numbers<[1], [0], [0], [1], [0, 0, 1, 1], [], []>} : vector<16x16xf32>, vector<16x8xf32>, vector<16x8xf32> -> vector<16x8xf32>
    %c2_207 = arith.constant 2 : index
    %c32_208 = arith.constant 32 : index
    %c0_209 = arith.constant 0 : index
    %426 = vector.load %arg4[%c2_207, %c32_208, %c0_209] : memref<3x160x128xf32, #tpu.memory_space<vmem>>, vector<1x8x32xf32>
    %427 = vector.shape_cast %426 : vector<1x8x32xf32> to vector<8x32xf32>
    %cst_210 = arith.constant dense<0.000000e+00> : vector<16x32xf32>
    %428 = tpu.matmul %425, %427, %cst_210 {dimension_numbers = #tpu.dot_dimension_numbers<[1], [0], [0], [1], [0, 0, 1, 1], [], []>} : vector<16x8xf32>, vector<8x32xf32>, vector<16x32xf32> -> vector<16x32xf32>
    %429 = vector.extract_strided_slice %409 {offsets = [0, 8], sizes = [16, 8], strides = [1, 1]} : vector<16x96xf32> to vector<16x8xf32>
    %430 = vector.extract_strided_slice %409 {offsets = [0, 40], sizes = [16, 8], strides = [1, 1]} : vector<16x96xf32> to vector<16x8xf32>
    %431 = vector.extract_strided_slice %409 {offsets = [0, 72], sizes = [16, 8], strides = [1, 1]} : vector<16x96xf32> to vector<16x8xf32>
    %cst_211 = arith.constant dense<0.000000e+00> : vector<16x16xf32>
    %432 = tpu.matmul %429, %430, %cst_211 {dimension_numbers = #tpu.dot_dimension_numbers<[1], [1], [0], [0], [0, 0, 1, 0], [], []>} : vector<16x8xf32>, vector<16x8xf32>, vector<16x16xf32> -> vector<16x16xf32>
    %433 = arith.addf %432, %42 : vector<16x16xf32>
    %cst_212 = arith.constant dense<0xFF800000> : vector<16xf32>
    %434 = vector.multi_reduction <maximumf>, %433, %cst_212 [1] : vector<16x16xf32> to vector<16xf32>
    %435 = vector.shape_cast %434 : vector<16xf32> to vector<16x1xf32>
    %436 = vector.broadcast %435 : vector<16x1xf32> to vector<16x16xf32>
    %437 = arith.subf %433, %436 : vector<16x16xf32>
    %438 = math.exp %437 : vector<16x16xf32>
    %cst_213 = arith.constant dense<0.000000e+00> : vector<16xf32>
    %439 = vector.multi_reduction <add>, %438, %cst_213 [1] : vector<16x16xf32> to vector<16xf32>
    %440 = vector.shape_cast %439 : vector<16xf32> to vector<16x1xf32>
    %441 = tpu.reciprocal %440 {approx = true} : vector<16x1xf32> -> vector<16x1xf32>
    %442 = vector.broadcast %441 : vector<16x1xf32> to vector<16x16xf32>
    %443 = arith.mulf %438, %442 : vector<16x16xf32>
    %cst_214 = arith.constant dense<0.000000e+00> : vector<16x8xf32>
    %444 = tpu.matmul %443, %431, %cst_214 {dimension_numbers = #tpu.dot_dimension_numbers<[1], [0], [0], [1], [0, 0, 1, 1], [], []>} : vector<16x16xf32>, vector<16x8xf32>, vector<16x8xf32> -> vector<16x8xf32>
    %c2_215 = arith.constant 2 : index
    %c40_216 = arith.constant 40 : index
    %c0_217 = arith.constant 0 : index
    %445 = vector.load %arg4[%c2_215, %c40_216, %c0_217] : memref<3x160x128xf32, #tpu.memory_space<vmem>>, vector<1x8x32xf32>
    %446 = vector.shape_cast %445 : vector<1x8x32xf32> to vector<8x32xf32>
    %cst_218 = arith.constant dense<0.000000e+00> : vector<16x32xf32>
    %447 = tpu.matmul %444, %446, %cst_218 {dimension_numbers = #tpu.dot_dimension_numbers<[1], [0], [0], [1], [0, 0, 1, 1], [], []>} : vector<16x8xf32>, vector<8x32xf32>, vector<16x32xf32> -> vector<16x32xf32>
    %448 = arith.addf %428, %447 : vector<16x32xf32>
    %449 = vector.extract_strided_slice %409 {offsets = [0, 16], sizes = [16, 8], strides = [1, 1]} : vector<16x96xf32> to vector<16x8xf32>
    %450 = vector.extract_strided_slice %409 {offsets = [0, 48], sizes = [16, 8], strides = [1, 1]} : vector<16x96xf32> to vector<16x8xf32>
    %451 = vector.extract_strided_slice %409 {offsets = [0, 80], sizes = [16, 8], strides = [1, 1]} : vector<16x96xf32> to vector<16x8xf32>
    %cst_219 = arith.constant dense<0.000000e+00> : vector<16x16xf32>
    %452 = tpu.matmul %449, %450, %cst_219 {dimension_numbers = #tpu.dot_dimension_numbers<[1], [1], [0], [0], [0, 0, 1, 0], [], []>} : vector<16x8xf32>, vector<16x8xf32>, vector<16x16xf32> -> vector<16x16xf32>
    %453 = arith.addf %452, %42 : vector<16x16xf32>
    %cst_220 = arith.constant dense<0xFF800000> : vector<16xf32>
    %454 = vector.multi_reduction <maximumf>, %453, %cst_220 [1] : vector<16x16xf32> to vector<16xf32>
    %455 = vector.shape_cast %454 : vector<16xf32> to vector<16x1xf32>
    %456 = vector.broadcast %455 : vector<16x1xf32> to vector<16x16xf32>
    %457 = arith.subf %453, %456 : vector<16x16xf32>
    %458 = math.exp %457 : vector<16x16xf32>
    %cst_221 = arith.constant dense<0.000000e+00> : vector<16xf32>
    %459 = vector.multi_reduction <add>, %458, %cst_221 [1] : vector<16x16xf32> to vector<16xf32>
    %460 = vector.shape_cast %459 : vector<16xf32> to vector<16x1xf32>
    %461 = tpu.reciprocal %460 {approx = true} : vector<16x1xf32> -> vector<16x1xf32>
    %462 = vector.broadcast %461 : vector<16x1xf32> to vector<16x16xf32>
    %463 = arith.mulf %458, %462 : vector<16x16xf32>
    %cst_222 = arith.constant dense<0.000000e+00> : vector<16x8xf32>
    %464 = tpu.matmul %463, %451, %cst_222 {dimension_numbers = #tpu.dot_dimension_numbers<[1], [0], [0], [1], [0, 0, 1, 1], [], []>} : vector<16x16xf32>, vector<16x8xf32>, vector<16x8xf32> -> vector<16x8xf32>
    %c2_223 = arith.constant 2 : index
    %c48_224 = arith.constant 48 : index
    %c0_225 = arith.constant 0 : index
    %465 = vector.load %arg4[%c2_223, %c48_224, %c0_225] : memref<3x160x128xf32, #tpu.memory_space<vmem>>, vector<1x8x32xf32>
    %466 = vector.shape_cast %465 : vector<1x8x32xf32> to vector<8x32xf32>
    %cst_226 = arith.constant dense<0.000000e+00> : vector<16x32xf32>
    %467 = tpu.matmul %464, %466, %cst_226 {dimension_numbers = #tpu.dot_dimension_numbers<[1], [0], [0], [1], [0, 0, 1, 1], [], []>} : vector<16x8xf32>, vector<8x32xf32>, vector<16x32xf32> -> vector<16x32xf32>
    %468 = arith.addf %448, %467 : vector<16x32xf32>
    %469 = vector.extract_strided_slice %409 {offsets = [0, 24], sizes = [16, 8], strides = [1, 1]} : vector<16x96xf32> to vector<16x8xf32>
    %470 = vector.extract_strided_slice %409 {offsets = [0, 56], sizes = [16, 8], strides = [1, 1]} : vector<16x96xf32> to vector<16x8xf32>
    %471 = vector.extract_strided_slice %409 {offsets = [0, 88], sizes = [16, 8], strides = [1, 1]} : vector<16x96xf32> to vector<16x8xf32>
    %cst_227 = arith.constant dense<0.000000e+00> : vector<16x16xf32>
    %472 = tpu.matmul %469, %470, %cst_227 {dimension_numbers = #tpu.dot_dimension_numbers<[1], [1], [0], [0], [0, 0, 1, 0], [], []>} : vector<16x8xf32>, vector<16x8xf32>, vector<16x16xf32> -> vector<16x16xf32>
    %473 = arith.addf %472, %42 : vector<16x16xf32>
    %cst_228 = arith.constant dense<0xFF800000> : vector<16xf32>
    %474 = vector.multi_reduction <maximumf>, %473, %cst_228 [1] : vector<16x16xf32> to vector<16xf32>
    %475 = vector.shape_cast %474 : vector<16xf32> to vector<16x1xf32>
    %476 = vector.broadcast %475 : vector<16x1xf32> to vector<16x16xf32>
    %477 = arith.subf %473, %476 : vector<16x16xf32>
    %478 = math.exp %477 : vector<16x16xf32>
    %cst_229 = arith.constant dense<0.000000e+00> : vector<16xf32>
    %479 = vector.multi_reduction <add>, %478, %cst_229 [1] : vector<16x16xf32> to vector<16xf32>
    %480 = vector.shape_cast %479 : vector<16xf32> to vector<16x1xf32>
    %481 = tpu.reciprocal %480 {approx = true} : vector<16x1xf32> -> vector<16x1xf32>
    %482 = vector.broadcast %481 : vector<16x1xf32> to vector<16x16xf32>
    %483 = arith.mulf %478, %482 : vector<16x16xf32>
    %cst_230 = arith.constant dense<0.000000e+00> : vector<16x8xf32>
    %484 = tpu.matmul %483, %471, %cst_230 {dimension_numbers = #tpu.dot_dimension_numbers<[1], [0], [0], [1], [0, 0, 1, 1], [], []>} : vector<16x16xf32>, vector<16x8xf32>, vector<16x8xf32> -> vector<16x8xf32>
    %c2_231 = arith.constant 2 : index
    %c56_232 = arith.constant 56 : index
    %c0_233 = arith.constant 0 : index
    %485 = vector.load %arg4[%c2_231, %c56_232, %c0_233] : memref<3x160x128xf32, #tpu.memory_space<vmem>>, vector<1x8x32xf32>
    %486 = vector.shape_cast %485 : vector<1x8x32xf32> to vector<8x32xf32>
    %cst_234 = arith.constant dense<0.000000e+00> : vector<16x32xf32>
    %487 = tpu.matmul %484, %486, %cst_234 {dimension_numbers = #tpu.dot_dimension_numbers<[1], [0], [0], [1], [0, 0, 1, 1], [], []>} : vector<16x8xf32>, vector<8x32xf32>, vector<16x32xf32> -> vector<16x32xf32>
    %488 = arith.addf %468, %487 : vector<16x32xf32>
    %489 = vector.broadcast %394 : vector<1x32xf32> to vector<16x32xf32>
    %490 = arith.addf %488, %489 : vector<16x32xf32>
    %491 = arith.addf %384, %490 : vector<16x32xf32>
    %cst_235 = arith.constant dense<0.000000e+00> : vector<16xf32>
    %492 = vector.multi_reduction <add>, %491, %cst_235 [1] : vector<16x32xf32> to vector<16xf32>
    %493 = vector.shape_cast %492 : vector<16xf32> to vector<16x1xf32>
    %cst_236 = arith.constant 3.200000e+01 : f32
    %494 = vector.broadcast %cst_236 : f32 to vector<16x1xf32>
    %495 = arith.divf %493, %494 : vector<16x1xf32>
    %496 = vector.broadcast %495 : vector<16x1xf32> to vector<16x32xf32>
    %497 = arith.subf %491, %496 : vector<16x32xf32>
    %498 = arith.mulf %497, %497 : vector<16x32xf32>
    %cst_237 = arith.constant dense<0.000000e+00> : vector<16xf32>
    %499 = vector.multi_reduction <add>, %498, %cst_237 [1] : vector<16x32xf32> to vector<16xf32>
    %500 = vector.shape_cast %499 : vector<16xf32> to vector<16x1xf32>
    %cst_238 = arith.constant 3.200000e+01 : f32
    %501 = vector.broadcast %cst_238 : f32 to vector<16x1xf32>
    %502 = arith.divf %500, %501 : vector<16x1xf32>
    %503 = vector.broadcast %495 : vector<16x1xf32> to vector<16x32xf32>
    %504 = arith.subf %491, %503 : vector<16x32xf32>
    %cst_239 = arith.constant 9.99999996E-13 : f32
    %505 = vector.broadcast %cst_239 : f32 to vector<16x1xf32>
    %506 = arith.addf %502, %505 : vector<16x1xf32>
    %507 = math.rsqrt %506 : vector<16x1xf32>
    %508 = vector.broadcast %507 : vector<16x1xf32> to vector<16x32xf32>
    %509 = arith.mulf %504, %508 : vector<16x32xf32>
    %510 = vector.broadcast %396 : vector<1x32xf32> to vector<16x32xf32>
    %511 = arith.mulf %509, %510 : vector<16x32xf32>
    %512 = vector.broadcast %398 : vector<1x32xf32> to vector<16x32xf32>
    %513 = arith.addf %511, %512 : vector<16x32xf32>
    %cst_240 = arith.constant dense<0.000000e+00> : vector<16x64xf32>
    %514 = tpu.matmul %513, %388, %cst_240 {dimension_numbers = #tpu.dot_dimension_numbers<[1], [0], [0], [1], [0, 0, 1, 1], [], []>} : vector<16x32xf32>, vector<32x64xf32>, vector<16x64xf32> -> vector<16x64xf32>
    %515 = vector.broadcast %400 : vector<1x64xf32> to vector<16x64xf32>
    %516 = arith.addf %514, %515 : vector<16x64xf32>
    %cst_241 = arith.constant 5.000000e-01 : f32
    %517 = vector.broadcast %cst_241 : f32 to vector<16x64xf32>
    %518 = arith.mulf %517, %516 : vector<16x64xf32>
    %cst_242 = arith.constant 4.471500e-02 : f32
    %519 = vector.broadcast %cst_242 : f32 to vector<16x64xf32>
    %520 = arith.mulf %519, %516 : vector<16x64xf32>
    %521 = arith.mulf %520, %516 : vector<16x64xf32>
    %522 = arith.mulf %521, %516 : vector<16x64xf32>
    %523 = arith.addf %516, %522 : vector<16x64xf32>
    %cst_243 = arith.constant 0.797884583 : f32
    %524 = vector.broadcast %cst_243 : f32 to vector<16x64xf32>
    %525 = arith.mulf %524, %523 : vector<16x64xf32>
    %526 = math.tanh %525 : vector<16x64xf32>
    %cst_244 = arith.constant 1.000000e+00 : f32
    %527 = vector.broadcast %cst_244 : f32 to vector<16x64xf32>
    %528 = arith.addf %527, %526 : vector<16x64xf32>
    %529 = arith.mulf %518, %528 : vector<16x64xf32>
    %cst_245 = arith.constant dense<0.000000e+00> : vector<16x32xf32>
    %530 = tpu.matmul %529, %390, %cst_245 {dimension_numbers = #tpu.dot_dimension_numbers<[1], [0], [0], [1], [0, 0, 1, 1], [], []>} : vector<16x64xf32>, vector<64x32xf32>, vector<16x32xf32> -> vector<16x32xf32>
    %531 = vector.broadcast %402 : vector<1x32xf32> to vector<16x32xf32>
    %532 = arith.addf %530, %531 : vector<16x32xf32>
    %533 = arith.addf %513, %532 : vector<16x32xf32>
    %cst_246 = arith.constant dense<0.000000e+00> : vector<16xf32>
    %534 = vector.multi_reduction <add>, %533, %cst_246 [1] : vector<16x32xf32> to vector<16xf32>
    %535 = vector.shape_cast %534 : vector<16xf32> to vector<16x1xf32>
    %cst_247 = arith.constant 3.200000e+01 : f32
    %536 = vector.broadcast %cst_247 : f32 to vector<16x1xf32>
    %537 = arith.divf %535, %536 : vector<16x1xf32>
    %538 = vector.broadcast %537 : vector<16x1xf32> to vector<16x32xf32>
    %539 = arith.subf %533, %538 : vector<16x32xf32>
    %540 = arith.mulf %539, %539 : vector<16x32xf32>
    %cst_248 = arith.constant dense<0.000000e+00> : vector<16xf32>
    %541 = vector.multi_reduction <add>, %540, %cst_248 [1] : vector<16x32xf32> to vector<16xf32>
    %542 = vector.shape_cast %541 : vector<16xf32> to vector<16x1xf32>
    %cst_249 = arith.constant 3.200000e+01 : f32
    %543 = vector.broadcast %cst_249 : f32 to vector<16x1xf32>
    %544 = arith.divf %542, %543 : vector<16x1xf32>
    %545 = vector.broadcast %537 : vector<16x1xf32> to vector<16x32xf32>
    %546 = arith.subf %533, %545 : vector<16x32xf32>
    %cst_250 = arith.constant 9.99999996E-13 : f32
    %547 = vector.broadcast %cst_250 : f32 to vector<16x1xf32>
    %548 = arith.addf %544, %547 : vector<16x1xf32>
    %549 = math.rsqrt %548 : vector<16x1xf32>
    %550 = vector.broadcast %549 : vector<16x1xf32> to vector<16x32xf32>
    %551 = arith.mulf %546, %550 : vector<16x32xf32>
    %552 = vector.broadcast %404 : vector<1x32xf32> to vector<16x32xf32>
    %553 = arith.mulf %551, %552 : vector<16x32xf32>
    %554 = vector.broadcast %406 : vector<1x32xf32> to vector<16x32xf32>
    %555 = arith.addf %553, %554 : vector<16x32xf32>
    %c88 = arith.constant 88 : index
    %c0_251 = arith.constant 0 : index
    %556 = vector.load %arg6[%c88, %c0_251] : memref<120x128xf32, #tpu.memory_space<vmem>>, vector<32x128xf32>
    %cst_252 = arith.constant dense<0.000000e+00> : vector<16x128xf32>
    %557 = tpu.matmul %555, %556, %cst_252 {dimension_numbers = #tpu.dot_dimension_numbers<[1], [0], [0], [1], [0, 0, 1, 1], [], []>} : vector<16x32xf32>, vector<32x128xf32>, vector<16x128xf32> -> vector<16x128xf32>
    %c66 = arith.constant 66 : index
    %c0_253 = arith.constant 0 : index
    %558 = vector.load %arg6[%c66, %c0_253] : memref<120x128xf32, #tpu.memory_space<vmem>>, vector<1x128xf32>
    %559 = vector.broadcast %558 : vector<1x128xf32> to vector<16x128xf32>
    %560 = arith.addf %557, %559 : vector<16x128xf32>
    %cst_254 = arith.constant dense<0xFF800000> : vector<16xf32>
    %561 = vector.multi_reduction <maximumf>, %560, %cst_254 [1] : vector<16x128xf32> to vector<16xf32>
    %562 = vector.shape_cast %561 : vector<16xf32> to vector<16x1xf32>
    %563 = vector.broadcast %562 : vector<16x1xf32> to vector<16x128xf32>
    %564 = arith.subf %560, %563 : vector<16x128xf32>
    %565 = math.exp %564 : vector<16x128xf32>
    %cst_255 = arith.constant dense<0.000000e+00> : vector<16xf32>
    %566 = vector.multi_reduction <add>, %565, %cst_255 [1] : vector<16x128xf32> to vector<16xf32>
    %567 = vector.shape_cast %566 : vector<16xf32> to vector<16x1xf32>
    %568 = vector.broadcast %567 : vector<16x1xf32> to vector<16x128xf32>
    %569 = arith.divf %565, %568 : vector<16x128xf32>
    %c0_256 = arith.constant 0 : index
    %c0_257 = arith.constant 0 : index
    %570 = vector.load %arg7[%c0_256, %c0_257] : memref<16x128xf32, #tpu.memory_space<vmem>>, vector<16x128xf32>
    tpu.vector_store %arg7[%c0_256, %c0_257], %569 {strides = array<i32>} : memref<16x128xf32, #tpu.memory_space<vmem>>, vector<16x128xf32>,
    return
  }
  func.func @transform_0(%arg0: i32) -> (i32, i32) {
    %c0_i32 = arith.constant 0 : i32
    %c0_i32_0 = arith.constant 0 : i32
    %c0_i32_1 = arith.constant 0 : i32
    return %c0_i32, %c0_i32_0 : i32, i32
  }
  func.func @transform_1(%arg0: i32) -> (i32, i32) {
    %c0_i32 = arith.constant 0 : i32
    %c0_i32_0 = arith.constant 0 : i32
    %c0_i32_1 = arith.constant 0 : i32
    return %c0_i32, %c0_i32_0 : i32, i32
  }
  func.func @transform_2(%arg0: i32) -> (i32, i32) {
    %c0_i32 = arith.constant 0 : i32
    %c0_i32_0 = arith.constant 0 : i32
    %c0_i32_1 = arith.constant 0 : i32
    return %c0_i32, %c0_i32_0 : i32, i32
  }
  func.func @transform_3(%arg0: i32) -> (i32, i32, i32) {
    %c0_i32 = arith.constant 0 : i32
    %c0_i32_0 = arith.constant 0 : i32
    %c0_i32_1 = arith.constant 0 : i32
    %c0_i32_2 = arith.constant 0 : i32
    return %c0_i32, %c0_i32_0, %c0_i32_1 : i32, i32, i32
  }
  func.func @transform_4(%arg0: i32) -> (i32, i32, i32) {
    %c0_i32 = arith.constant 0 : i32
    %c0_i32_0 = arith.constant 0 : i32
    %c0_i32_1 = arith.constant 0 : i32
    %c0_i32_2 = arith.constant 0 : i32
    return %c0_i32, %c0_i32_0, %c0_i32_1 : i32, i32, i32
  }
  func.func @transform_5(%arg0: i32) -> (i32, i32) {
    %c0_i32 = arith.constant 0 : i32
    %c0_i32_0 = arith.constant 0 : i32
    %c0_i32_1 = arith.constant 0 : i32
    return %c0_i32, %c0_i32_0 : i32, i32
  }
  func.func @transform_6(%arg0: i32) -> (i32, i32) {
    %c0_i32 = arith.constant 0 : i32
    %c0_i32_0 = arith.constant 0 : i32
    %c0_i32_1 = arith.constant 0 : i32
    return %c0_i32, %c0_i32_0 : i32, i32
  }
}

</mosaic_0001>

<llo_original>
// kernel: thuc_news_bert_forward.1
$region0: #{thuc_news_bert_forward.1}
  #allocation0 [shape = 'u32[]', space=smem, size = 0x4, offset = 0x4, fixed_abs, tag = 'smem constant byte address 0x4 - core index']
  #allocation1 [shape = 'u32[144,128]{1,0:T(1,128)}', space=vmem, size = 0x12000, scoped, tag = 'internal scratch']
  %s0 = inlined_call_operand.vmem [shape: s32[16,1], index: 0, kind: input, shape index: {}]
  %s1 = inlined_call_operand.vmem [shape: s32[1,16], index: 1, kind: input, shape index: {}]
  %s2 = inlined_call_operand.hbm [shape: f32[16,32], index: 2, kind: input, shape index: {}]
  %s3 = inlined_call_operand.hbm [shape: f32[3,160,128], index: 3, kind: input, shape index: {}]
  %s4 = inlined_call_operand.vmem [shape: f32[3,8,128], index: 4, kind: input, shape index: {}]
  %s5 = inlined_call_operand.hbm [shape: f32[120,128], index: 5, kind: input, shape index: {}]
  %s6 = inlined_call_operand.vmem [shape: f32[16,128], index: 6, kind: output, shape index: {}]
  %s7 = sld [smem:[#allocation0]]
  $region46: #{thuc_news_bert_forward.1} parent=0
    _
  %s9 = ssub.s32 1, %s7
  %s10 = scalar_select 0, %s9, %s7
  $region1: #{thuc_news_bert_forward.1} parent=0
    #allocation2 [shape = 'u8[8192]{0}', space=vmem, size = 0x2000, scoped, tag = 'input window, operand 2, single buffered']
    #allocation3 [shape = 's32[1]{0}', space=sflag, size = 0x4, scoped, tag = 'scoped memory for thuc_news_bert_forward.1']
    #allocation4 [shape = 'u8[245760]{0}', space=vmem, size = 0x3c000, scoped, tag = 'input window, operand 3, single buffered']
    #allocation5 [shape = 's32[1]{0}', space=sflag, size = 0x4, scoped, tag = 'scoped memory for thuc_news_bert_forward.1']
    #allocation6 [shape = 'u8[61440]{0}', space=vmem, size = 0xf000, scoped, tag = 'input window, operand 5, single buffered']
    %11 = vsyncpa [#allocation3], 0
    %12 = vsyncpa [#allocation5], 0
    // Predicated region
    $region2: #{thuc_news_bert_forward.1} parent=1 // pred_check
      _
    $region3: #{thuc_news_bert_forward.1} parent=1 // pred_check_branch
      %14 = sbr.rel (0) target = $region5
    $region4: #{thuc_news_bert_forward.1} parent=1 // pred_region
      _
    $region5: #{thuc_news_bert_forward.1} parent=1 // pred_fallthru
      _
    // Predicated region
    $region6: #{thuc_news_bert_forward.1} parent=1 // pred_check
      _
    $region7: #{thuc_news_bert_forward.1} parent=1 // pred_check_branch
      %16 = sbr.rel (0) target = $region9
    $region8: #{thuc_news_bert_forward.1} parent=1 // pred_region
      _
    $region9: #{thuc_news_bert_forward.1} parent=1 // pred_fallthru
      _
    // Predicated region
    $region10: #{thuc_news_bert_forward.1} parent=1 // pred_check
      _
    $region11: #{thuc_news_bert_forward.1} parent=1 // pred_check_branch
      %18 = sbr.rel (0) target = $region13
    $region12: #{thuc_news_bert_forward.1} parent=1 // pred_region
      %s20 = ssub.s32 256, 256
      %21 = vsyncadd [#allocation3], %s20
      %s22 = sshll.u32 [#allocation2], 4
      %s23 = int_to_ptr.vmem [resolvable:$true] %s22
      %28 = dma.hbm_to_vmem [thread:$0]  %s2, 256, %s23, [#allocation3], 128, 128, 8
    $region13: #{thuc_news_bert_forward.1} parent=1 // pred_fallthru
      _
    // Predicated region
    $region14: #{thuc_news_bert_forward.1} parent=1 // pred_check
      _
    $region15: #{thuc_news_bert_forward.1} parent=1 // pred_check_branch
      %30 = sbr.rel (0) target = $region17
    $region16: #{thuc_news_bert_forward.1} parent=1 // pred_region
      %s32 = ssub.s32 7680, 7680
      %33 = vsyncadd [#allocation5], %s32
      %s34 = sshll.u32 [#allocation4], 4
      %s35 = int_to_ptr.vmem [resolvable:$true] %s34
      %40 = dma.hbm_to_vmem [thread:$0]  %s3, 7680, %s35, [#allocation5], 128, 128, 8
    $region17: #{thuc_news_bert_forward.1} parent=1 // pred_fallthru
      _
    // Predicated region
    $region18: #{thuc_news_bert_forward.1} parent=1 // pred_check
      _
    $region19: #{thuc_news_bert_forward.1} parent=1 // pred_check_branch
      %42 = sbr.rel (0) target = $region21
    $region20: #{thuc_news_bert_forward.1} parent=1 // pred_region
      _
    $region21: #{thuc_news_bert_forward.1} parent=1 // pred_fallthru
      _
    // Predicated region
    $region22: #{thuc_news_bert_forward.1} parent=1 // pred_check
      _
    $region23: #{thuc_news_bert_forward.1} parent=1 // pred_check_branch
      %44 = sbr.rel (0) target = $region25
    $region24: #{thuc_news_bert_forward.1} parent=1 // pred_region
      %s46 = ssub.s32 1920, 1920
      %47 = vsyncadd [#allocation5], %s46
      %s48 = sshll.u32 [#allocation6], 4
      %s49 = int_to_ptr.vmem [resolvable:$true] %s48
      %54 = dma.hbm_to_vmem [thread:$0]  %s5, 1920, %s49, [#allocation5], 128, 128, 8
    $region25: #{thuc_news_bert_forward.1} parent=1 // pred_fallthru
      _
    // Predicated region
    $region26: #{thuc_news_bert_forward.1} parent=1 // pred_check
      _
    $region27: #{thuc_news_bert_forward.1} parent=1 // pred_check_branch
      %56 = sbr.rel (0) target = $region29
    $region28: #{thuc_news_bert_forward.1} parent=1 // pred_region
      %57 = dma.done [#allocation3], 256
    $region29: #{thuc_news_bert_forward.1} parent=1 // pred_fallthru
      _
    // Predicated region
    $region30: #{thuc_news_bert_forward.1} parent=1 // pred_check
      _
    $region31: #{thuc_news_bert_forward.1} parent=1 // pred_check_branch
      %59 = sbr.rel (0) target = $region33
    $region32: #{thuc_news_bert_forward.1} parent=1 // pred_region
      %60 = dma.done [#allocation5], 7680
    $region33: #{thuc_news_bert_forward.1} parent=1 // pred_fallthru
      _
    // Predicated region
    $region34: #{thuc_news_bert_forward.1} parent=1 // pred_check
      _
    $region35: #{thuc_news_bert_forward.1} parent=1 // pred_check_branch
      %62 = sbr.rel (0) target = $region37
    $region36: #{thuc_news_bert_forward.1} parent=1 // pred_region
      %63 = dma.done [#allocation5], 1920
    $region37: #{thuc_news_bert_forward.1} parent=1 // pred_fallthru
      _
    %v64 = vld [vmem:[%s0] sm:$0xff]
    %v65 = vld [vmem:[%s0 + $0x8] sm:$0xff]
    %v66 = vlaneseq
    %v67 = vand.u32 %v66, 127
    %68 = vset.pattern.permute.xlu0 0
    %69 = vperm.xlu0 %68, %v64
    %v70 = vpop.permute.xlu0 %69
    %71 = vset.pattern.permute.xlu0 0
    %72 = vperm.xlu0 %71, %v65
    %v73 = vpop.permute.xlu0 %72
    %vm74 = vcmp.eq.s32.totalorder %v70, %v67
    %vm75 = vcmp.eq.s32.totalorder %v73, %v67
    %v76 = vsel %vm74, 1, 0
    %v77 = vsel %vm75, 1, 0
    %v78 = vcvt.s32.f32 %v76
    %v79 = vcvt.s32.f32 %v77
    %v80 = vld [vmem:[#allocation6] sm:$0xff]
    %v81 = vld [vmem:[#allocation6 + $0x8] sm:$0xff]
    %v82 = vld [vmem:[#allocation6 + $0x10] sm:$0xff]
    %v83 = vld [vmem:[#allocation6 + $0x18] sm:$0xff]
    %v84 = vld [vmem:[#allocation6 + $0x20] sm:$0xff]
    %v85 = vld [vmem:[#allocation6 + $0x28] sm:$0xff]
    %v86 = vld [vmem:[#allocation6 + $0x30] sm:$0xff]
    %v87 = vld [vmem:[#allocation6 + $0x38] sm:$0xff]
    %v88 = vld [vmem:[#allocation2] sm:$0xff]
    %v89 = vld [vmem:[#allocation2 + $0x8] sm:$0xff]
    %vm90 = vcmask 523264
    %v92 = vsel %vm90, %v78, 0
    %v95 = vsel %vm90, %v79, 0
    %97 = vmatprep.subr.mxu0 0.0
    %98 = vmatpush1.msra.mxu0 %v80
    %99 = vmatprep.subr.mxu0 0.0
    %100 = vmatpush1.msra.mxu0 %v81
    %101 = vmatprep.subr.mxu0 0.0
    %102 = vmatpush1.msra.mxu0 %v82
    %103 = vmatprep.subr.mxu0 0.0
    %104 = vmatpush1.msra.mxu0 %v83
    %105 = vmatprep.subr.mxu0 0.0
    %106 = vmatpush1.msra.mxu0 %v84
    %107 = vmatprep.subr.mxu0 0.0
    %108 = vmatpush1.msra.mxu0 %v85
    %109 = vmatprep.subr.mxu0 0.0
    %110 = vmatpush1.msra.mxu0 %v86
    %111 = vmatprep.subr.mxu0 0.0
    %112 = vmatpush1.msra.mxu0 %v87
    %113 = vmatprep.subr.mxu0 0.0
    %114 = vmatpush1.msra.mxu0 0.0
    %115 = vmatprep.subr.mxu0 0.0
    %116 = vmatpush1.msra.mxu0 0.0
    %117 = vmatprep.subr.mxu0 0.0
    %118 = vmatpush1.msra.mxu0 0.0
    %119 = vmatprep.subr.mxu0 0.0
    %120 = vmatpush1.msra.mxu0 0.0
    %121 = vmatprep.subr.mxu0 0.0
    %122 = vmatpush1.msra.mxu0 0.0
    %123 = vmatprep.subr.mxu0 0.0
    %124 = vmatpush1.msra.mxu0 0.0
    %125 = vmatprep.subr.mxu0 0.0
    %126 = vmatpush1.msra.mxu0 0.0
    %127 = vmatprep.subr.mxu0 0.0
    %128 = vmatpush1.msra.mxu0 0.0
    %129 = vmatprep.subr.mxu0 0.0
    %130 = vmatpush1.msra.mxu0 0.0
    %131 = vmatprep.subr.mxu0 0.0
    %132 = vmatpush1.msra.mxu0 0.0
    %133 = vmatprep.subr.mxu0 0.0
    %134 = vmatpush1.msra.mxu0 0.0
    %135 = vmatprep.subr.mxu0 0.0
    %136 = vmatpush1.msra.mxu0 0.0
    %137 = vmatprep.subr.mxu0 0.0
    %138 = vmatpush1.msra.mxu0 0.0
    %139 = vmatprep.subr.mxu0 0.0
    %140 = vmatpush1.msra.mxu0 0.0
    %141 = vmatprep.subr.mxu0 0.0
    %142 = vmatpush1.msra.mxu0 0.0
    %143 = vmatprep.subr.mxu0 0.0
    %144 = vmatpush1.msra.mxu0 0.0
    %145 = vmatprep.subr.mxu0 0.0
    %146 = vmatpush1.msra.mxu0 0.0
    %147 = vmatprep.subr.mxu0 0.0
    %148 = vmatpush1.msra.mxu0 0.0
    %149 = vmatprep.subr.mxu0 0.0
    %150 = vmatpush1.msra.mxu0 0.0
    %151 = vmatprep.subr.mxu0 0.0
    %152 = vmatpush1.msra.mxu0 0.0
    %153 = vmatprep.subr.mxu0 0.0
    %154 = vmatpush1.msra.mxu0 0.0
    %155 = vmatprep.subr.mxu0 0.0
    %156 = vmatpush1.msra.mxu0 0.0
    %157 = vmatprep.subr.mxu0 0.0
    %158 = vmatpush1.msra.mxu0 0.0
    %159 = vmatprep.subr.mxu0 0.0
    %160 = vmatpush1.msra.mxu0 0.0
    %161 = vmatprep.mubr.f32.mxu0 0.0
    %162 = vmatmul.mubr.f32.gmra.mrb[0].mxu0 %v92
    %v163 = vpop.f32.mrb[0].mxu0
    %v164 = vadd.f32 %v88, %v163
    %v165 = vpop.f32.mrb[0].mxu0
    %166 = vmatprep.mubr.f32.mxu0 0.0
    %167 = vmatmul.mubr.f32.gmra.mrb[0].mxu0 %v95
    %v168 = vpop.f32.mrb[0].mxu0
    %v169 = vadd.f32 %v89, %v168
    %v170 = vpop.f32.mrb[0].mxu0
    %171 = vdwg.mxu0
    %v172 = vld [vmem:[#allocation6 + $0x40] sm:$0x1]
    %v173 = vld [vmem:[#allocation6 + $0x41] sm:$0x1]
    %vm174 = vcmask 261120
    %v175 = vsel %vm174, %v164, 0.0
    %176 = vadd.xlane.f32.xlu0 %v175
    %v177 = vpop.xlane.xlu0 %176
    %v178 = vsel %vm174, %v169, 0.0
    %179 = vadd.xlane.f32.xlu0 %v178
    %v180 = vpop.xlane.xlu0 %179
    %v181 = vrcp.pop 32.0
    %v182 = vmul.f32 %v177, %v181
    %v183 = vmul.f32 %v180, %v181
    %v184 = vsub.f32 %v164, %v182
    %v185 = vsub.f32 %v169, %v183
    %v186 = vmul.f32 %v184, %v184
    %v187 = vmul.f32 %v185, %v185
    %v188 = vsel %vm174, %v186, 0.0
    %189 = vadd.xlane.f32.xlu0 %v188
    %v190 = vpop.xlane.xlu0 %189
    %v191 = vsel %vm174, %v187, 0.0
    %192 = vadd.xlane.f32.xlu0 %v191
    %v193 = vpop.xlane.xlu0 %192
    %v194 = vmul.f32 %v190, %v181
    %v195 = vmul.f32 %v193, %v181
    %v196 = vadd.f32 %v194, 1e-12
    %v197 = vadd.f32 %v195, 1e-12
    %v198 = vrsqrt.pop %v196
    %v199 = vrsqrt.pop %v197
    %v200 = vmul.f32 %v184, %v198
    %v201 = vmul.f32 %v185, %v199
    %v202 = vlaneseq
    %v203 = vshrl.u32 %v202, 7
    %v204 = vsub.s32 0, %v203
    %v205 = vrot.slane %v172, %v204
    %v206 = vmul.f32 %v200, %v205
    %v207 = vmul.f32 %v201, %v205
    %v208 = vlaneseq
    %v209 = vshrl.u32 %v208, 7
    %v210 = vsub.s32 0, %v209
    %v211 = vrot.slane %v173, %v210
    %v212 = vadd.f32 %v206, %v211
    %v213 = vadd.f32 %v207, %v211
    %v214 = vld [vmem:[#allocation6 + $0x48] sm:$0xff]
    %v215 = vld [vmem:[#allocation6 + $0x50] sm:$0xff]
    %v216 = vld [vmem:[%s1] sm:$0x1]
    %vm217 = vcmp.gt.s32.totalorder %v216, 0
    %v218 = vsel %vm217, 0.0, -10000.0
    %v220 = vlaneseq
    %v221 = vshrl.u32 %v220, 7
    %v222 = vsub.s32 0, %v221
    %v223 = vrot.slane %v218, %v222
    %v225 = vadd.f32 %v214, %v223
    %v226 = vadd.f32 %v215, %v223
    %v227 = vld [vmem:[#allocation4] sm:$0xff]
    %v228 = vld [vmem:[#allocation4 + $0x8] sm:$0xff]
    %v229 = vld [vmem:[#allocation4 + $0x10] sm:$0xff]
    %v230 = vld [vmem:[#allocation4 + $0x18] sm:$0xff]
    %v231 = vld [vmem:[#allocation4 + $0x40] sm:$0xff]
    %v232 = vld [vmem:[#allocation4 + $0x48] sm:$0xff]
    %v233 = vld [vmem:[#allocation4 + $0x50] sm:$0xff]
    %v234 = vld [vmem:[#allocation4 + $0x58] sm:$0xff]
    %v235 = vld [vmem:[#allocation4 + $0x60] sm:$0xff]
    %v236 = vld [vmem:[#allocation4 + $0x68] sm:$0xff]
    %v237 = vld [vmem:[#allocation4 + $0x70] sm:$0xff]
    %v238 = vld [vmem:[#allocation4 + $0x78] sm:$0xff]
    %v239 = vld [vmem:[#allocation4 + $0x80] sm:$0xff]
    %v240 = vld [vmem:[#allocation4 + $0x88] sm:$0xff]
    %v241 = vld [vmem:[#allocation4 + $0x90] sm:$0xff]
    %v242 = vld [vmem:[#allocation4 + $0x98] sm:$0xff]
    %v243 = vld [vmem:[%s4] sm:$0x1]
    %v244 = vld [vmem:[%s4 + $0x1] sm:$0x1]
    %v245 = vld [vmem:[%s4 + $0x2] sm:$0x1]
    %v246 = vld [vmem:[%s4 + $0x3] sm:$0x1]
    %v247 = vld [vmem:[%s4 + $0x4] sm:$0x1]
    %v248 = vld [vmem:[%s4 + $0x5] sm:$0x1]
    %v249 = vld [vmem:[%s4 + $0x6] sm:$0x1]
    %v250 = vld [vmem:[%s4 + $0x7] sm:$0x1]
    %v251 = vlaneseq
    %v252 = vshrl.u32 %v251, 7
    %v253 = vsub.s32 0, %v252
    %v254 = vrot.slane %v243, %v253
    %v256 = vsel %vm174, %v212, 0
    %v259 = vsel %vm174, %v213, 0
    %261 = vmatprep.subr.mxu0 0.0
    %262 = vmatpush1.msra.mxu0 %v227
    %263 = vmatprep.subr.mxu0 0.0
    %264 = vmatpush1.msra.mxu0 %v228
    %265 = vmatprep.subr.mxu0 0.0
    %266 = vmatpush1.msra.mxu0 %v229
    %267 = vmatprep.subr.mxu0 0.0
    %268 = vmatpush1.msra.mxu0 %v230
    %269 = vmatprep.subr.mxu0 0.0
    %270 = vmatpush1.msra.mxu0 0.0
    %271 = vmatprep.subr.mxu0 0.0
    %272 = vmatpush1.msra.mxu0 0.0
    %273 = vmatprep.subr.mxu0 0.0
    %274 = vmatpush1.msra.mxu0 0.0
    %275 = vmatprep.subr.mxu0 0.0
    %276 = vmatpush1.msra.mxu0 0.0
    %277 = vmatprep.subr.mxu0 0.0
    %278 = vmatpush1.msra.mxu0 0.0
    %279 = vmatprep.subr.mxu0 0.0
    %280 = vmatpush1.msra.mxu0 0.0
    %281 = vmatprep.subr.mxu0 0.0
    %282 = vmatpush1.msra.mxu0 0.0
    %283 = vmatprep.subr.mxu0 0.0
    %284 = vmatpush1.msra.mxu0 0.0
    %285 = vmatprep.subr.mxu0 0.0
    %286 = vmatpush1.msra.mxu0 0.0
    %287 = vmatprep.subr.mxu0 0.0
    %288 = vmatpush1.msra.mxu0 0.0
    %289 = vmatprep.subr.mxu0 0.0
    %290 = vmatpush1.msra.mxu0 0.0
    %291 = vmatprep.subr.mxu0 0.0
    %292 = vmatpush1.msra.mxu0 0.0
    %293 = vmatprep.subr.mxu0 0.0
    %294 = vmatpush1.msra.mxu0 0.0
    %295 = vmatprep.subr.mxu0 0.0
    %296 = vmatpush1.msra.mxu0 0.0
    %297 = vmatprep.subr.mxu0 0.0
    %298 = vmatpush1.msra.mxu0 0.0
    %299 = vmatprep.subr.mxu0 0.0
    %300 = vmatpush1.msra.mxu0 0.0
    %301 = vmatprep.subr.mxu0 0.0
    %302 = vmatpush1.msra.mxu0 0.0
    %303 = vmatprep.subr.mxu0 0.0
    %304 = vmatpush1.msra.mxu0 0.0
    %305 = vmatprep.subr.mxu0 0.0
    %306 = vmatpush1.msra.mxu0 0.0
    %307 = vmatprep.subr.mxu0 0.0
    %308 = vmatpush1.msra.mxu0 0.0
    %309 = vmatprep.subr.mxu0 0.0
    %310 = vmatpush1.msra.mxu0 0.0
    %311 = vmatprep.subr.mxu0 0.0
    %312 = vmatpush1.msra.mxu0 0.0
    %313 = vmatprep.subr.mxu0 0.0
    %314 = vmatpush1.msra.mxu0 0.0
    %315 = vmatprep.subr.mxu0 0.0
    %316 = vmatpush1.msra.mxu0 0.0
    %317 = vmatprep.subr.mxu0 0.0
    %318 = vmatpush1.msra.mxu0 0.0
    %319 = vmatprep.subr.mxu0 0.0
    %320 = vmatpush1.msra.mxu0 0.0
    %321 = vmatprep.subr.mxu0 0.0
    %322 = vmatpush1.msra.mxu0 0.0
    %323 = vmatprep.subr.mxu0 0.0
    %324 = vmatpush1.msra.mxu0 0.0
    %325 = vmatprep.mubr.f32.mxu0 0.0
    %326 = vmatmul.mubr.f32.gmra.mrb[0].mxu0 %v256
    %v327 = vpop.f32.mrb[0].mxu0
    %v328 = vadd.f32 %v254, %v327
    %v329 = vpop.f32.mrb[0].mxu0
    %330 = vmatprep.mubr.f32.mxu0 0.0
    %331 = vmatmul.mubr.f32.gmra.mrb[0].mxu0 %v259
    %v332 = vpop.f32.mrb[0].mxu0
    %v333 = vadd.f32 %v254, %v332
    %v334 = vpop.f32.mrb[0].mxu0
    %335 = vdwg.mxu0
    %338 = vrot.lane.b32.xlu0 %v328, 96
    %v339 = vpop.permute.xlu0 %338
    %340 = vrot.lane.b32.xlu0 %v333, 96
    %v341 = vpop.permute.xlu0 %340
    %vm342 = vcmask 64512
    %v343 = vsel %vm342, %v328, 0
    %v345 = vsel %vm342, %v333, 0
    %v347 = vsel %vm342, %v339, 0
    %v349 = vsel %vm342, %v341, 0
    %351 = vmatprep.subr.mxu0 0.0
    %352 = vmatpush1.xpose.msra.mxu0 %v347
    %353 = vmatprep.subr.mxu0 0.0
    %354 = vmatpush1.xpose.msra.mxu0 %v349
    %355 = vmatprep.subr.mxu0 0.0
    %356 = vmatpush1.xpose.msra.mxu0 0.0
    %357 = vmatprep.subr.mxu0 0.0
    %358 = vmatpush1.xpose.msra.mxu0 0.0
    %359 = vmatprep.subr.mxu0 0.0
    %360 = vmatpush1.xpose.msra.mxu0 0.0
    %361 = vmatprep.subr.mxu0 0.0
    %362 = vmatpush1.xpose.msra.mxu0 0.0
    %363 = vmatprep.subr.mxu0 0.0
    %364 = vmatpush1.xpose.msra.mxu0 0.0
    %365 = vmatprep.subr.mxu0 0.0
    %366 = vmatpush1.xpose.msra.mxu0 0.0
    %367 = vmatprep.subr.mxu0 0.0
    %368 = vmatpush1.xpose.msra.mxu0 0.0
    %369 = vmatprep.subr.mxu0 0.0
    %370 = vmatpush1.xpose.msra.mxu0 0.0
    %371 = vmatprep.subr.mxu0 0.0
    %372 = vmatpush1.xpose.msra.mxu0 0.0
    %373 = vmatprep.subr.mxu0 0.0
    %374 = vmatpush1.xpose.msra.mxu0 0.0
    %375 = vmatprep.subr.mxu0 0.0
    %376 = vmatpush1.xpose.msra.mxu0 0.0
    %377 = vmatprep.subr.mxu0 0.0
    %378 = vmatpush1.xpose.msra.mxu0 0.0
    %379 = vmatprep.subr.mxu0 0.0
    %380 = vmatpush1.xpose.msra.mxu0 0.0
    %381 = vmatprep.subr.mxu0 0.0
    %382 = vmatpush1.xpose.msra.mxu0 0.0
    %383 = vmatprep.subr.mxu0 0.0
    %384 = vmatpush1.xpose.msra.mxu0 0.0
    %385 = vmatprep.subr.mxu0 0.0
    %386 = vmatpush1.xpose.msra.mxu0 0.0
    %387 = vmatprep.subr.mxu0 0.0
    %388 = vmatpush1.xpose.msra.mxu0 0.0
    %389 = vmatprep.subr.mxu0 0.0
    %390 = vmatpush1.xpose.msra.mxu0 0.0
    %391 = vmatprep.subr.mxu0 0.0
    %392 = vmatpush1.xpose.msra.mxu0 0.0
    %393 = vmatprep.subr.mxu0 0.0
    %394 = vmatpush1.xpose.msra.mxu0 0.0
    %395 = vmatprep.subr.mxu0 0.0
    %396 = vmatpush1.xpose.msra.mxu0 0.0
    %397 = vmatprep.subr.mxu0 0.0
    %398 = vmatpush1.xpose.msra.mxu0 0.0
    %399 = vmatprep.subr.mxu0 0.0
    %400 = vmatpush1.xpose.msra.mxu0 0.0
    %401 = vmatprep.subr.mxu0 0.0
    %402 = vmatpush1.xpose.msra.mxu0 0.0
    %403 = vmatprep.subr.mxu0 0.0
    %404 = vmatpush1.xpose.msra.mxu0 0.0
    %405 = vmatprep.subr.mxu0 0.0
    %406 = vmatpush1.xpose.msra.mxu0 0.0
    %407 = vmatprep.subr.mxu0 0.0
    %408 = vmatpush1.xpose.msra.mxu0 0.0
    %409 = vmatprep.subr.mxu0 0.0
    %410 = vmatpush1.xpose.msra.mxu0 0.0
    %411 = vmatprep.subr.mxu0 0.0
    %412 = vmatpush1.xpose.msra.mxu0 0.0
    %413 = vmatprep.subr.mxu0 0.0
    %414 = vmatpush1.xpose.msra.mxu0 0.0
    %415 = vmatprep.mubr.f32.mxu0 0.0
    %416 = vmatmul.mubr.f32.gmra.mrb[0].mxu0 %v343
    %v417 = vpop.f32.mrb[0].mxu0
    %v418 = vadd.f32 %v225, %v417
    %v419 = vpop.f32.mrb[0].mxu0
    %420 = vmatprep.mubr.f32.mxu0 0.0
    %421 = vmatmul.mubr.f32.gmra.mrb[0].mxu0 %v345
    %v422 = vpop.f32.mrb[0].mxu0
    %v423 = vadd.f32 %v226, %v422
    %v424 = vpop.f32.mrb[0].mxu0
    %425 = vdwg.mxu0
    %vm426 = vcmask 130048
    %v427 = vsel %vm426, %v418, -inf
    %428 = vmax.xlane.f32.xlu0 %v427
    %v429 = vpop.xlane.xlu0 %428
    %v430 = vsel %vm426, %v423, -inf
    %431 = vmax.xlane.f32.xlu0 %v430
    %v432 = vpop.xlane.xlu0 %431
    %v433 = vsub.f32 %v418, %v429
    %v434 = vsub.f32 %v423, %v432
    %v435 = vmul.f32 %v433, 1.442695
    %v436 = vpow.pop %v435
    %v437 = vmul.f32 %v434, 1.442695
    %v438 = vpow.pop %v437
    %v439 = vsel %vm426, %v436, 0.0
    %440 = vadd.xlane.f32.xlu0 %v439
    %v441 = vpop.xlane.xlu0 %440
    %v442 = vsel %vm426, %v438, 0.0
    %443 = vadd.xlane.f32.xlu0 %v442
    %v444 = vpop.xlane.xlu0 %443
    %v445 = vrcp.pop %v441
    %v446 = vrcp.pop %v444
    %v447 = vmul.f32 %v436, %v445
    %v448 = vmul.f32 %v438, %v446
    %449 = vrot.lane.b32.xlu0 %v328, 64
    %v450 = vpop.permute.xlu0 %449
    %451 = vrot.lane.b32.xlu0 %v333, 64
    %v452 = vpop.permute.xlu0 %451
    %v456 = vsel %vm426, %v447, 0
    %v459 = vsel %vm426, %v448, 0
    %461 = vmatprep.subr.mxu0 0.0
    %462 = vmatpush1.msra.mxu0 %v450
    %463 = vmatprep.subr.mxu0 0.0
    %464 = vmatpush1.msra.mxu0 %v452
    %465 = vmatprep.subr.mxu0 0.0
    %466 = vmatpush1.msra.mxu0 0.0
    %467 = vmatprep.subr.mxu0 0.0
    %468 = vmatpush1.msra.mxu0 0.0
    %469 = vmatprep.subr.mxu0 0.0
    %470 = vmatpush1.msra.mxu0 0.0
    %471 = vmatprep.subr.mxu0 0.0
    %472 = vmatpush1.msra.mxu0 0.0
    %473 = vmatprep.subr.mxu0 0.0
    %474 = vmatpush1.msra.mxu0 0.0
    %475 = vmatprep.subr.mxu0 0.0
    %476 = vmatpush1.msra.mxu0 0.0
    %477 = vmatprep.subr.mxu0 0.0
    %478 = vmatpush1.msra.mxu0 0.0
    %479 = vmatprep.subr.mxu0 0.0
    %480 = vmatpush1.msra.mxu0 0.0
    %481 = vmatprep.subr.mxu0 0.0
    %482 = vmatpush1.msra.mxu0 0.0
    %483 = vmatprep.subr.mxu0 0.0
    %484 = vmatpush1.msra.mxu0 0.0
    %485 = vmatprep.subr.mxu0 0.0
    %486 = vmatpush1.msra.mxu0 0.0
    %487 = vmatprep.subr.mxu0 0.0
    %488 = vmatpush1.msra.mxu0 0.0
    %489 = vmatprep.subr.mxu0 0.0
    %490 = vmatpush1.msra.mxu0 0.0
    %491 = vmatprep.subr.mxu0 0.0
    %492 = vmatpush1.msra.mxu0 0.0
    %493 = vmatprep.subr.mxu0 0.0
    %494 = vmatpush1.msra.mxu0 0.0
    %495 = vmatprep.subr.mxu0 0.0
    %496 = vmatpush1.msra.mxu0 0.0
    %497 = vmatprep.subr.mxu0 0.0
    %498 = vmatpush1.msra.mxu0 0.0
    %499 = vmatprep.subr.mxu0 0.0
    %500 = vmatpush1.msra.mxu0 0.0
    %501 = vmatprep.subr.mxu0 0.0
    %502 = vmatpush1.msra.mxu0 0.0
    %503 = vmatprep.subr.mxu0 0.0
    %504 = vmatpush1.msra.mxu0 0.0
    %505 = vmatprep.subr.mxu0 0.0
    %506 = vmatpush1.msra.mxu0 0.0
    %507 = vmatprep.subr.mxu0 0.0
    %508 = vmatpush1.msra.mxu0 0.0
    %509 = vmatprep.subr.mxu0 0.0
    %510 = vmatpush1.msra.mxu0 0.0
    %511 = vmatprep.subr.mxu0 0.0
    %512 = vmatpush1.msra.mxu0 0.0
    %513 = vmatprep.subr.mxu0 0.0
    %514 = vmatpush1.msra.mxu0 0.0
    %515 = vmatprep.subr.mxu0 0.0
    %516 = vmatpush1.msra.mxu0 0.0
    %517 = vmatprep.subr.mxu0 0.0
    %518 = vmatpush1.msra.mxu0 0.0
    %519 = vmatprep.subr.mxu0 0.0
    %520 = vmatpush1.msra.mxu0 0.0
    %521 = vmatprep.subr.mxu0 0.0
    %522 = vmatpush1.msra.mxu0 0.0
    %523 = vmatprep.subr.mxu0 0.0
    %524 = vmatpush1.msra.mxu0 0.0
    %525 = vmatprep.mubr.f32.mxu0 0.0
    %526 = vmatmul.mubr.f32.gmra.mrb[0].mxu0 %v456
    %v527 = vpop.f32.mrb[0].mxu0
    %v528 = vadd.f32 0.0, %v527
    %v529 = vpop.f32.mrb[0].mxu0
    %530 = vmatprep.mubr.f32.mxu0 0.0
    %531 = vmatmul.mubr.f32.gmra.mrb[0].mxu0 %v459
    %v532 = vpop.f32.mrb[0].mxu0
    %v533 = vadd.f32 0.0, %v532
    %v534 = vpop.f32.mrb[0].mxu0
    %535 = vdwg.mxu0
    %v536 = vld [vmem:[#allocation4 + $0x20] sm:$0xff]
    %537 = vrot.lane.b32.xlu0 %v328, 120
    %v538 = vpop.permute.xlu0 %537
    %539 = vrot.lane.b32.xlu0 %v333, 120
    %v540 = vpop.permute.xlu0 %539
    %541 = vrot.lane.b32.xlu0 %v328, 88
    %v542 = vpop.permute.xlu0 %541
    %543 = vrot.lane.b32.xlu0 %v333, 88
    %v544 = vpop.permute.xlu0 %543
    %v545 = vsel %vm342, %v538, 0
    %v547 = vsel %vm342, %v540, 0
    %v549 = vsel %vm342, %v542, 0
    %v551 = vsel %vm342, %v544, 0
    %553 = vmatprep.subr.mxu0 0.0
    %554 = vmatpush1.xpose.msra.mxu0 %v549
    %555 = vmatprep.subr.mxu0 0.0
    %556 = vmatpush1.xpose.msra.mxu0 %v551
    %557 = vmatprep.subr.mxu0 0.0
    %558 = vmatpush1.xpose.msra.mxu0 0.0
    %559 = vmatprep.subr.mxu0 0.0
    %560 = vmatpush1.xpose.msra.mxu0 0.0
    %561 = vmatprep.subr.mxu0 0.0
    %562 = vmatpush1.xpose.msra.mxu0 0.0
    %563 = vmatprep.subr.mxu0 0.0
    %564 = vmatpush1.xpose.msra.mxu0 0.0
    %565 = vmatprep.subr.mxu0 0.0
    %566 = vmatpush1.xpose.msra.mxu0 0.0
    %567 = vmatprep.subr.mxu0 0.0
    %568 = vmatpush1.xpose.msra.mxu0 0.0
    %569 = vmatprep.subr.mxu0 0.0
    %570 = vmatpush1.xpose.msra.mxu0 0.0
    %571 = vmatprep.subr.mxu0 0.0
    %572 = vmatpush1.xpose.msra.mxu0 0.0
    %573 = vmatprep.subr.mxu0 0.0
    %574 = vmatpush1.xpose.msra.mxu0 0.0
    %575 = vmatprep.subr.mxu0 0.0
    %576 = vmatpush1.xpose.msra.mxu0 0.0
    %577 = vmatprep.subr.mxu0 0.0
    %578 = vmatpush1.xpose.msra.mxu0 0.0
    %579 = vmatprep.subr.mxu0 0.0
    %580 = vmatpush1.xpose.msra.mxu0 0.0
    %581 = vmatprep.subr.mxu0 0.0
    %582 = vmatpush1.xpose.msra.mxu0 0.0
    %583 = vmatprep.subr.mxu0 0.0
    %584 = vmatpush1.xpose.msra.mxu0 0.0
    %585 = vmatprep.subr.mxu0 0.0
    %586 = vmatpush1.xpose.msra.mxu0 0.0
    %587 = vmatprep.subr.mxu0 0.0
    %588 = vmatpush1.xpose.msra.mxu0 0.0
    %589 = vmatprep.subr.mxu0 0.0
    %590 = vmatpush1.xpose.msra.mxu0 0.0
    %591 = vmatprep.subr.mxu0 0.0
    %592 = vmatpush1.xpose.msra.mxu0 0.0
    %593 = vmatprep.subr.mxu0 0.0
    %594 = vmatpush1.xpose.msra.mxu0 0.0
    %595 = vmatprep.subr.mxu0 0.0
    %596 = vmatpush1.xpose.msra.mxu0 0.0
    %597 = vmatprep.subr.mxu0 0.0
    %598 = vmatpush1.xpose.msra.mxu0 0.0
    %599 = vmatprep.subr.mxu0 0.0
    %600 = vmatpush1.xpose.msra.mxu0 0.0
    %601 = vmatprep.subr.mxu0 0.0
    %602 = vmatpush1.xpose.msra.mxu0 0.0
    %603 = vmatprep.subr.mxu0 0.0
    %604 = vmatpush1.xpose.msra.mxu0 0.0
    %605 = vmatprep.subr.mxu0 0.0
    %606 = vmatpush1.xpose.msra.mxu0 0.0
    %607 = vmatprep.subr.mxu0 0.0
    %608 = vmatpush1.xpose.msra.mxu0 0.0
    %609 = vmatprep.subr.mxu0 0.0
    %610 = vmatpush1.xpose.msra.mxu0 0.0
    %611 = vmatprep.subr.mxu0 0.0
    %612 = vmatpush1.xpose.msra.mxu0 0.0
    %613 = vmatprep.subr.mxu0 0.0
    %614 = vmatpush1.xpose.msra.mxu0 0.0
    %615 = vmatprep.subr.mxu0 0.0
    %616 = vmatpush1.xpose.msra.mxu0 0.0
    %617 = vmatprep.mubr.f32.mxu0 0.0
    %618 = vmatmul.mubr.f32.gmra.mrb[0].mxu0 %v545
    %v619 = vpop.f32.mrb[0].mxu0
    %v620 = vadd.f32 %v225, %v619
    %v621 = vpop.f32.mrb[0].mxu0
    %622 = vmatprep.mubr.f32.mxu0 0.0
    %623 = vmatmul.mubr.f32.gmra.mrb[0].mxu0 %v547
    %v624 = vpop.f32.mrb[0].mxu0
    %v625 = vadd.f32 %v226, %v624
    %v626 = vpop.f32.mrb[0].mxu0
    %627 = vdwg.mxu0
    %v628 = vsel %vm426, %v620, -inf
    %629 = vmax.xlane.f32.xlu0 %v628
    %v630 = vpop.xlane.xlu0 %629
    %v631 = vsel %vm426, %v625, -inf
    %632 = vmax.xlane.f32.xlu0 %v631
    %v633 = vpop.xlane.xlu0 %632
    %v634 = vsub.f32 %v620, %v630
    %v635 = vsub.f32 %v625, %v633
    %v636 = vmul.f32 %v634, 1.442695
    %v637 = vpow.pop %v636
    %v638 = vmul.f32 %v635, 1.442695
    %v639 = vpow.pop %v638
    %v640 = vsel %vm426, %v637, 0.0
    %641 = vadd.xlane.f32.xlu0 %v640
    %v642 = vpop.xlane.xlu0 %641
    %v643 = vsel %vm426, %v639, 0.0
    %644 = vadd.xlane.f32.xlu0 %v643
    %v645 = vpop.xlane.xlu0 %644
    %v646 = vrcp.pop %v642
    %v647 = vrcp.pop %v645
    %v648 = vmul.f32 %v637, %v646
    %v649 = vmul.f32 %v639, %v647
    %650 = vrot.lane.b32.xlu0 %v328, 56
    %v651 = vpop.permute.xlu0 %650
    %652 = vrot.lane.b32.xlu0 %v333, 56
    %v653 = vpop.permute.xlu0 %652
    %v657 = vsel %vm426, %v648, 0
    %v660 = vsel %vm426, %v649, 0
    %662 = vmatprep.subr.mxu0 0.0
    %663 = vmatpush1.msra.mxu0 %v651
    %664 = vmatprep.subr.mxu0 0.0
    %665 = vmatpush1.msra.mxu0 %v653
    %666 = vmatprep.subr.mxu0 0.0
    %667 = vmatpush1.msra.mxu0 0.0
    %668 = vmatprep.subr.mxu0 0.0
    %669 = vmatpush1.msra.mxu0 0.0
    %670 = vmatprep.subr.mxu0 0.0
    %671 = vmatpush1.msra.mxu0 0.0
    %672 = vmatprep.subr.mxu0 0.0
    %673 = vmatpush1.msra.mxu0 0.0
    %674 = vmatprep.subr.mxu0 0.0
    %675 = vmatpush1.msra.mxu0 0.0
    %676 = vmatprep.subr.mxu0 0.0
    %677 = vmatpush1.msra.mxu0 0.0
    %678 = vmatprep.subr.mxu0 0.0
    %679 = vmatpush1.msra.mxu0 0.0
    %680 = vmatprep.subr.mxu0 0.0
    %681 = vmatpush1.msra.mxu0 0.0
    %682 = vmatprep.subr.mxu0 0.0
    %683 = vmatpush1.msra.mxu0 0.0
    %684 = vmatprep.subr.mxu0 0.0
    %685 = vmatpush1.msra.mxu0 0.0
    %686 = vmatprep.subr.mxu0 0.0
    %687 = vmatpush1.msra.mxu0 0.0
    %688 = vmatprep.subr.mxu0 0.0
    %689 = vmatpush1.msra.mxu0 0.0
    %690 = vmatprep.subr.mxu0 0.0
    %691 = vmatpush1.msra.mxu0 0.0
    %692 = vmatprep.subr.mxu0 0.0
    %693 = vmatpush1.msra.mxu0 0.0
    %694 = vmatprep.subr.mxu0 0.0
    %695 = vmatpush1.msra.mxu0 0.0
    %696 = vmatprep.subr.mxu0 0.0
    %697 = vmatpush1.msra.mxu0 0.0
    %698 = vmatprep.subr.mxu0 0.0
    %699 = vmatpush1.msra.mxu0 0.0
    %700 = vmatprep.subr.mxu0 0.0
    %701 = vmatpush1.msra.mxu0 0.0
    %702 = vmatprep.subr.mxu0 0.0
    %703 = vmatpush1.msra.mxu0 0.0
    %704 = vmatprep.subr.mxu0 0.0
    %705 = vmatpush1.msra.mxu0 0.0
    %706 = vmatprep.subr.mxu0 0.0
    %707 = vmatpush1.msra.mxu0 0.0
    %708 = vmatprep.subr.mxu0 0.0
    %709 = vmatpush1.msra.mxu0 0.0
    %710 = vmatprep.subr.mxu0 0.0
    %711 = vmatpush1.msra.mxu0 0.0
    %712 = vmatprep.subr.mxu0 0.0
    %713 = vmatpush1.msra.mxu0 0.0
    %714 = vmatprep.subr.mxu0 0.0
    %715 = vmatpush1.msra.mxu0 0.0
    %716 = vmatprep.subr.mxu0 0.0
    %717 = vmatpush1.msra.mxu0 0.0
    %718 = vmatprep.subr.mxu0 0.0
    %719 = vmatpush1.msra.mxu0 0.0
    %720 = vmatprep.subr.mxu0 0.0
    %721 = vmatpush1.msra.mxu0 0.0
    %722 = vmatprep.subr.mxu0 0.0
    %723 = vmatpush1.msra.mxu0 0.0
    %724 = vmatprep.subr.mxu0 0.0
    %725 = vmatpush1.msra.mxu0 0.0
    %726 = vmatprep.mubr.f32.mxu0 0.0
    %727 = vmatmul.mubr.f32.gmra.mrb[0].mxu0 %v657
    %v728 = vpop.f32.mrb[0].mxu0
    %v729 = vadd.f32 0.0, %v728
    %v730 = vpop.f32.mrb[0].mxu0
    %731 = vmatprep.mubr.f32.mxu0 0.0
    %732 = vmatmul.mubr.f32.gmra.mrb[0].mxu0 %v660
    %v733 = vpop.f32.mrb[0].mxu0
    %v734 = vadd.f32 0.0, %v733
    %v735 = vpop.f32.mrb[0].mxu0
    %736 = vdwg.mxu0
    %v737 = vld [vmem:[#allocation4 + $0x28] sm:$0xff]
    %v739 = vsel %vm342, %v729, 0
    %v742 = vsel %vm342, %v734, 0
    %744 = vmatprep.subr.mxu0 0.0
    %745 = vmatpush1.msra.mxu0 %v737
    %746 = vmatprep.subr.mxu0 0.0
    %747 = vmatpush1.msra.mxu0 0.0
    %748 = vmatprep.subr.mxu0 0.0
    %749 = vmatpush1.msra.mxu0 0.0
    %750 = vmatprep.subr.mxu0 0.0
    %751 = vmatpush1.msra.mxu0 0.0
    %752 = vmatprep.subr.mxu0 0.0
    %753 = vmatpush1.msra.mxu0 0.0
    %754 = vmatprep.subr.mxu0 0.0
    %755 = vmatpush1.msra.mxu0 0.0
    %756 = vmatprep.subr.mxu0 0.0
    %757 = vmatpush1.msra.mxu0 0.0
    %758 = vmatprep.subr.mxu0 0.0
    %759 = vmatpush1.msra.mxu0 0.0
    %760 = vmatprep.subr.mxu0 0.0
    %761 = vmatpush1.msra.mxu0 0.0
    %762 = vmatprep.subr.mxu0 0.0
    %763 = vmatpush1.msra.mxu0 0.0
    %764 = vmatprep.subr.mxu0 0.0
    %765 = vmatpush1.msra.mxu0 0.0
    %766 = vmatprep.subr.mxu0 0.0
    %767 = vmatpush1.msra.mxu0 0.0
    %768 = vmatprep.subr.mxu0 0.0
    %769 = vmatpush1.msra.mxu0 0.0
    %770 = vmatprep.subr.mxu0 0.0
    %771 = vmatpush1.msra.mxu0 0.0
    %772 = vmatprep.subr.mxu0 0.0
    %773 = vmatpush1.msra.mxu0 0.0
    %774 = vmatprep.subr.mxu0 0.0
    %775 = vmatpush1.msra.mxu0 0.0
    %776 = vmatprep.subr.mxu0 0.0
    %777 = vmatpush1.msra.mxu0 0.0
    %778 = vmatprep.subr.mxu0 0.0
    %779 = vmatpush1.msra.mxu0 0.0
    %780 = vmatprep.subr.mxu0 0.0
    %781 = vmatpush1.msra.mxu0 0.0
    %782 = vmatprep.subr.mxu0 0.0
    %783 = vmatpush1.msra.mxu0 0.0
    %784 = vmatprep.subr.mxu0 0.0
    %785 = vmatpush1.msra.mxu0 0.0
    %786 = vmatprep.subr.mxu0 0.0
    %787 = vmatpush1.msra.mxu0 0.0
    %788 = vmatprep.subr.mxu0 0.0
    %789 = vmatpush1.msra.mxu0 0.0
    %790 = vmatprep.subr.mxu0 0.0
    %791 = vmatpush1.msra.mxu0 0.0
    %792 = vmatprep.subr.mxu0 0.0
    %793 = vmatpush1.msra.mxu0 0.0
    %794 = vmatprep.subr.mxu0 0.0
    %795 = vmatpush1.msra.mxu0 0.0
    %796 = vmatprep.subr.mxu0 0.0
    %797 = vmatpush1.msra.mxu0 0.0
    %798 = vmatprep.subr.mxu0 0.0
    %799 = vmatpush1.msra.mxu0 0.0
    %800 = vmatprep.subr.mxu0 0.0
    %801 = vmatpush1.msra.mxu0 0.0
    %802 = vmatprep.subr.mxu0 0.0
    %803 = vmatpush1.msra.mxu0 0.0
    %804 = vmatprep.subr.mxu0 0.0
    %805 = vmatpush1.msra.mxu0 0.0
    %806 = vmatprep.subr.mxu0 0.0
    %807 = vmatpush1.msra.mxu0 0.0
    %808 = vmatprep.mubr.f32.mxu0 0.0
    %809 = vmatmul.mubr.f32.gmra.mrb[0].mxu0 %v739
    %v810 = vpop.f32.mrb[0].mxu0
    %v811 = vadd.f32 0.0, %v810
    %v812 = vpop.f32.mrb[0].mxu0
    %813 = vmatprep.mubr.f32.mxu0 0.0
    %814 = vmatmul.mubr.f32.gmra.mrb[0].mxu0 %v742
    %v815 = vpop.f32.mrb[0].mxu0
    %v816 = vadd.f32 0.0, %v815
    %v817 = vpop.f32.mrb[0].mxu0
    %818 = vdwg.mxu0
    %v820 = vsel %vm342, %v528, 0
    %v823 = vsel %vm342, %v533, 0
    %825 = vmatprep.subr.mxu0 0.0
    %826 = vmatpush1.msra.mxu0 %v536
    %827 = vmatprep.subr.mxu0 0.0
    %828 = vmatpush1.msra.mxu0 0.0
    %829 = vmatprep.subr.mxu0 0.0
    %830 = vmatpush1.msra.mxu0 0.0
    %831 = vmatprep.subr.mxu0 0.0
    %832 = vmatpush1.msra.mxu0 0.0
    %833 = vmatprep.subr.mxu0 0.0
    %834 = vmatpush1.msra.mxu0 0.0
    %835 = vmatprep.subr.mxu0 0.0
    %836 = vmatpush1.msra.mxu0 0.0
    %837 = vmatprep.subr.mxu0 0.0
    %838 = vmatpush1.msra.mxu0 0.0
    %839 = vmatprep.subr.mxu0 0.0
    %840 = vmatpush1.msra.mxu0 0.0
    %841 = vmatprep.subr.mxu0 0.0
    %842 = vmatpush1.msra.mxu0 0.0
    %843 = vmatprep.subr.mxu0 0.0
    %844 = vmatpush1.msra.mxu0 0.0
    %845 = vmatprep.subr.mxu0 0.0
    %846 = vmatpush1.msra.mxu0 0.0
    %847 = vmatprep.subr.mxu0 0.0
    %848 = vmatpush1.msra.mxu0 0.0
    %849 = vmatprep.subr.mxu0 0.0
    %850 = vmatpush1.msra.mxu0 0.0
    %851 = vmatprep.subr.mxu0 0.0
    %852 = vmatpush1.msra.mxu0 0.0
    %853 = vmatprep.subr.mxu0 0.0
    %854 = vmatpush1.msra.mxu0 0.0
    %855 = vmatprep.subr.mxu0 0.0
    %856 = vmatpush1.msra.mxu0 0.0
    %857 = vmatprep.subr.mxu0 0.0
    %858 = vmatpush1.msra.mxu0 0.0
    %859 = vmatprep.subr.mxu0 0.0
    %860 = vmatpush1.msra.mxu0 0.0
    %861 = vmatprep.subr.mxu0 0.0
    %862 = vmatpush1.msra.mxu0 0.0
    %863 = vmatprep.subr.mxu0 0.0
    %864 = vmatpush1.msra.mxu0 0.0
    %865 = vmatprep.subr.mxu0 0.0
    %866 = vmatpush1.msra.mxu0 0.0
    %867 = vmatprep.subr.mxu0 0.0
    %868 = vmatpush1.msra.mxu0 0.0
    %869 = vmatprep.subr.mxu0 0.0
    %870 = vmatpush1.msra.mxu0 0.0
    %871 = vmatprep.subr.mxu0 0.0
    %872 = vmatpush1.msra.mxu0 0.0
    %873 = vmatprep.subr.mxu0 0.0
    %874 = vmatpush1.msra.mxu0 0.0
    %875 = vmatprep.subr.mxu0 0.0
    %876 = vmatpush1.msra.mxu0 0.0
    %877 = vmatprep.subr.mxu0 0.0
    %878 = vmatpush1.msra.mxu0 0.0
    %879 = vmatprep.subr.mxu0 0.0
    %880 = vmatpush1.msra.mxu0 0.0
    %881 = vmatprep.subr.mxu0 0.0
    %882 = vmatpush1.msra.mxu0 0.0
    %883 = vmatprep.subr.mxu0 0.0
    %884 = vmatpush1.msra.mxu0 0.0
    %885 = vmatprep.subr.mxu0 0.0
    %886 = vmatpush1.msra.mxu0 0.0
    %887 = vmatprep.subr.mxu0 0.0
    %888 = vmatpush1.msra.mxu0 0.0
    %889 = vmatprep.mubr.f32.mxu0 0.0
    %890 = vmatmul.mubr.f32.gmra.mrb[0].mxu0 %v820
    %v891 = vpop.f32.mrb[0].mxu0
    %v892 = vadd.f32 %v811, %v891
    %v893 = vpop.f32.mrb[0].mxu0
    %894 = vmatprep.mubr.f32.mxu0 0.0
    %895 = vmatmul.mubr.f32.gmra.mrb[0].mxu0 %v823
    %v896 = vpop.f32.mrb[0].mxu0
    %v897 = vadd.f32 %v816, %v896
    %v898 = vpop.f32.mrb[0].mxu0
    %899 = vdwg.mxu0
    %900 = vrot.lane.b32.xlu0 %v328, 112
    %v901 = vpop.permute.xlu0 %900
    %902 = vrot.lane.b32.xlu0 %v333, 112
    %v903 = vpop.permute.xlu0 %902
    %904 = vrot.lane.b32.xlu0 %v328, 80
    %v905 = vpop.permute.xlu0 %904
    %906 = vrot.lane.b32.xlu0 %v333, 80
    %v907 = vpop.permute.xlu0 %906
    %v908 = vsel %vm342, %v901, 0
    %v910 = vsel %vm342, %v903, 0
    %v912 = vsel %vm342, %v905, 0
    %v914 = vsel %vm342, %v907, 0
    %916 = vmatprep.subr.mxu0 0.0
    %917 = vmatpush1.xpose.msra.mxu0 %v912
    %918 = vmatprep.subr.mxu0 0.0
    %919 = vmatpush1.xpose.msra.mxu0 %v914
    %920 = vmatprep.subr.mxu0 0.0
    %921 = vmatpush1.xpose.msra.mxu0 0.0
    %922 = vmatprep.subr.mxu0 0.0
    %923 = vmatpush1.xpose.msra.mxu0 0.0
    %924 = vmatprep.subr.mxu0 0.0
    %925 = vmatpush1.xpose.msra.mxu0 0.0
    %926 = vmatprep.subr.mxu0 0.0
    %927 = vmatpush1.xpose.msra.mxu0 0.0
    %928 = vmatprep.subr.mxu0 0.0
    %929 = vmatpush1.xpose.msra.mxu0 0.0
    %930 = vmatprep.subr.mxu0 0.0
    %931 = vmatpush1.xpose.msra.mxu0 0.0
    %932 = vmatprep.subr.mxu0 0.0
    %933 = vmatpush1.xpose.msra.mxu0 0.0
    %934 = vmatprep.subr.mxu0 0.0
    %935 = vmatpush1.xpose.msra.mxu0 0.0
    %936 = vmatprep.subr.mxu0 0.0
    %937 = vmatpush1.xpose.msra.mxu0 0.0
    %938 = vmatprep.subr.mxu0 0.0
    %939 = vmatpush1.xpose.msra.mxu0 0.0
    %940 = vmatprep.subr.mxu0 0.0
    %941 = vmatpush1.xpose.msra.mxu0 0.0
    %942 = vmatprep.subr.mxu0 0.0
    %943 = vmatpush1.xpose.msra.mxu0 0.0
    %944 = vmatprep.subr.mxu0 0.0
    %945 = vmatpush1.xpose.msra.mxu0 0.0
    %946 = vmatprep.subr.mxu0 0.0
    %947 = vmatpush1.xpose.msra.mxu0 0.0
    %948 = vmatprep.subr.mxu0 0.0
    %949 = vmatpush1.xpose.msra.mxu0 0.0
    %950 = vmatprep.subr.mxu0 0.0
    %951 = vmatpush1.xpose.msra.mxu0 0.0
    %952 = vmatprep.subr.mxu0 0.0
    %953 = vmatpush1.xpose.msra.mxu0 0.0
    %954 = vmatprep.subr.mxu0 0.0
    %955 = vmatpush1.xpose.msra.mxu0 0.0
    %956 = vmatprep.subr.mxu0 0.0
    %957 = vmatpush1.xpose.msra.mxu0 0.0
    %958 = vmatprep.subr.mxu0 0.0
    %959 = vmatpush1.xpose.msra.mxu0 0.0
    %960 = vmatprep.subr.mxu0 0.0
    %961 = vmatpush1.xpose.msra.mxu0 0.0
    %962 = vmatprep.subr.mxu0 0.0
    %963 = vmatpush1.xpose.msra.mxu0 0.0
    %964 = vmatprep.subr.mxu0 0.0
    %965 = vmatpush1.xpose.msra.mxu0 0.0
    %966 = vmatprep.subr.mxu0 0.0
    %967 = vmatpush1.xpose.msra.mxu0 0.0
    %968 = vmatprep.subr.mxu0 0.0
    %969 = vmatpush1.xpose.msra.mxu0 0.0
    %970 = vmatprep.subr.mxu0 0.0
    %971 = vmatpush1.xpose.msra.mxu0 0.0
    %972 = vmatprep.subr.mxu0 0.0
    %973 = vmatpush1.xpose.msra.mxu0 0.0
    %974 = vmatprep.subr.mxu0 0.0
    %975 = vmatpush1.xpose.msra.mxu0 0.0
    %976 = vmatprep.subr.mxu0 0.0
    %977 = vmatpush1.xpose.msra.mxu0 0.0
    %978 = vmatprep.subr.mxu0 0.0
    %979 = vmatpush1.xpose.msra.mxu0 0.0
    %980 = vmatprep.mubr.f32.mxu0 0.0
    %981 = vmatmul.mubr.f32.gmra.mrb[0].mxu0 %v908
    %v982 = vpop.f32.mrb[0].mxu0
    %v983 = vadd.f32 %v225, %v982
    %v984 = vpop.f32.mrb[0].mxu0
    %985 = vmatprep.mubr.f32.mxu0 0.0
    %986 = vmatmul.mubr.f32.gmra.mrb[0].mxu0 %v910
    %v987 = vpop.f32.mrb[0].mxu0
    %v988 = vadd.f32 %v226, %v987
    %v989 = vpop.f32.mrb[0].mxu0
    %990 = vdwg.mxu0
    %v991 = vsel %vm426, %v983, -inf
    %992 = vmax.xlane.f32.xlu0 %v991
    %v993 = vpop.xlane.xlu0 %992
    %v994 = vsel %vm426, %v988, -inf
    %995 = vmax.xlane.f32.xlu0 %v994
    %v996 = vpop.xlane.xlu0 %995
    %v997 = vsub.f32 %v983, %v993
    %v998 = vsub.f32 %v988, %v996
    %v999 = vmul.f32 %v997, 1.442695
    %v1000 = vpow.pop %v999
    %v1001 = vmul.f32 %v998, 1.442695
    %v1002 = vpow.pop %v1001
    %v1003 = vsel %vm426, %v1000, 0.0
    %1004 = vadd.xlane.f32.xlu0 %v1003
    %v1005 = vpop.xlane.xlu0 %1004
    %v1006 = vsel %vm426, %v1002, 0.0
    %1007 = vadd.xlane.f32.xlu0 %v1006
    %v1008 = vpop.xlane.xlu0 %1007
    %v1009 = vrcp.pop %v1005
    %v1010 = vrcp.pop %v1008
    %v1011 = vmul.f32 %v1000, %v1009
    %v1012 = vmul.f32 %v1002, %v1010
    %1013 = vrot.lane.b32.xlu0 %v328, 48
    %v1014 = vpop.permute.xlu0 %1013
    %1015 = vrot.lane.b32.xlu0 %v333, 48
    %v1016 = vpop.permute.xlu0 %1015
    %v1020 = vsel %vm426, %v1011, 0
    %v1023 = vsel %vm426, %v1012, 0
    %1025 = vmatprep.subr.mxu0 0.0
    %1026 = vmatpush1.msra.mxu0 %v1014
    %1027 = vmatprep.subr.mxu0 0.0
    %1028 = vmatpush1.msra.mxu0 %v1016
    %1029 = vmatprep.subr.mxu0 0.0
    %1030 = vmatpush1.msra.mxu0 0.0
    %1031 = vmatprep.subr.mxu0 0.0
    %1032 = vmatpush1.msra.mxu0 0.0
    %1033 = vmatprep.subr.mxu0 0.0
    %1034 = vmatpush1.msra.mxu0 0.0
    %1035 = vmatprep.subr.mxu0 0.0
    %1036 = vmatpush1.msra.mxu0 0.0
    %1037 = vmatprep.subr.mxu0 0.0
    %1038 = vmatpush1.msra.mxu0 0.0
    %1039 = vmatprep.subr.mxu0 0.0
    %1040 = vmatpush1.msra.mxu0 0.0
    %1041 = vmatprep.subr.mxu0 0.0
    %1042 = vmatpush1.msra.mxu0 0.0
    %1043 = vmatprep.subr.mxu0 0.0
    %1044 = vmatpush1.msra.mxu0 0.0
    %1045 = vmatprep.subr.mxu0 0.0
    %1046 = vmatpush1.msra.mxu0 0.0
    %1047 = vmatprep.subr.mxu0 0.0
    %1048 = vmatpush1.msra.mxu0 0.0
    %1049 = vmatprep.subr.mxu0 0.0
    %1050 = vmatpush1.msra.mxu0 0.0
    %1051 = vmatprep.subr.mxu0 0.0
    %1052 = vmatpush1.msra.mxu0 0.0
    %1053 = vmatprep.subr.mxu0 0.0
    %1054 = vmatpush1.msra.mxu0 0.0
    %1055 = vmatprep.subr.mxu0 0.0
    %1056 = vmatpush1.msra.mxu0 0.0
    %1057 = vmatprep.subr.mxu0 0.0
    %1058 = vmatpush1.msra.mxu0 0.0
    %1059 = vmatprep.subr.mxu0 0.0
    %1060 = vmatpush1.msra.mxu0 0.0
    %1061 = vmatprep.subr.mxu0 0.0
    %1062 = vmatpush1.msra.mxu0 0.0
    %1063 = vmatprep.subr.mxu0 0.0
    %1064 = vmatpush1.msra.mxu0 0.0
    %1065 = vmatprep.subr.mxu0 0.0
    %1066 = vmatpush1.msra.mxu0 0.0
    %1067 = vmatprep.subr.mxu0 0.0
    %1068 = vmatpush1.msra.mxu0 0.0
    %1069 = vmatprep.subr.mxu0 0.0
    %1070 = vmatpush1.msra.mxu0 0.0
    %1071 = vmatprep.subr.mxu0 0.0
    %1072 = vmatpush1.msra.mxu0 0.0
    %1073 = vmatprep.subr.mxu0 0.0
    %1074 = vmatpush1.msra.mxu0 0.0
    %1075 = vmatprep.subr.mxu0 0.0
    %1076 = vmatpush1.msra.mxu0 0.0
    %1077 = vmatprep.subr.mxu0 0.0
    %1078 = vmatpush1.msra.mxu0 0.0
    %1079 = vmatprep.subr.mxu0 0.0
    %1080 = vmatpush1.msra.mxu0 0.0
    %1081 = vmatprep.subr.mxu0 0.0
    %1082 = vmatpush1.msra.mxu0 0.0
    %1083 = vmatprep.subr.mxu0 0.0
    %1084 = vmatpush1.msra.mxu0 0.0
    %1085 = vmatprep.subr.mxu0 0.0
    %1086 = vmatpush1.msra.mxu0 0.0
    %1087 = vmatprep.subr.mxu0 0.0
    %1088 = vmatpush1.msra.mxu0 0.0
    %1089 = vmatprep.mubr.f32.mxu0 0.0
    %1090 = vmatmul.mubr.f32.gmra.mrb[0].mxu0 %v1020
    %v1091 = vpop.f32.mrb[0].mxu0
    %v1092 = vadd.f32 0.0, %v1091
    %v1093 = vpop.f32.mrb[0].mxu0
    %1094 = vmatprep.mubr.f32.mxu0 0.0
    %1095 = vmatmul.mubr.f32.gmra.mrb[0].mxu0 %v1023
    %v1096 = vpop.f32.mrb[0].mxu0
    %v1097 = vadd.f32 0.0, %v1096
    %v1098 = vpop.f32.mrb[0].mxu0
    %1099 = vdwg.mxu0
    %v1100 = vld [vmem:[#allocation4 + $0x30] sm:$0xff]
    %v1102 = vsel %vm342, %v1092, 0
    %v1105 = vsel %vm342, %v1097, 0
    %1107 = vmatprep.subr.mxu0 0.0
    %1108 = vmatpush1.msra.mxu0 %v1100
    %1109 = vmatprep.subr.mxu0 0.0
    %1110 = vmatpush1.msra.mxu0 0.0
    %1111 = vmatprep.subr.mxu0 0.0
    %1112 = vmatpush1.msra.mxu0 0.0
    %1113 = vmatprep.subr.mxu0 0.0
    %1114 = vmatpush1.msra.mxu0 0.0
    %1115 = vmatprep.subr.mxu0 0.0
    %1116 = vmatpush1.msra.mxu0 0.0
    %1117 = vmatprep.subr.mxu0 0.0
    %1118 = vmatpush1.msra.mxu0 0.0
    %1119 = vmatprep.subr.mxu0 0.0
    %1120 = vmatpush1.msra.mxu0 0.0
    %1121 = vmatprep.subr.mxu0 0.0
    %1122 = vmatpush1.msra.mxu0 0.0
    %1123 = vmatprep.subr.mxu0 0.0
    %1124 = vmatpush1.msra.mxu0 0.0
    %1125 = vmatprep.subr.mxu0 0.0
    %1126 = vmatpush1.msra.mxu0 0.0
    %1127 = vmatprep.subr.mxu0 0.0
    %1128 = vmatpush1.msra.mxu0 0.0
    %1129 = vmatprep.subr.mxu0 0.0
    %1130 = vmatpush1.msra.mxu0 0.0
    %1131 = vmatprep.subr.mxu0 0.0
    %1132 = vmatpush1.msra.mxu0 0.0
    %1133 = vmatprep.subr.mxu0 0.0
    %1134 = vmatpush1.msra.mxu0 0.0
    %1135 = vmatprep.subr.mxu0 0.0
    %1136 = vmatpush1.msra.mxu0 0.0
    %1137 = vmatprep.subr.mxu0 0.0
    %1138 = vmatpush1.msra.mxu0 0.0
    %1139 = vmatprep.subr.mxu0 0.0
    %1140 = vmatpush1.msra.mxu0 0.0
    %1141 = vmatprep.subr.mxu0 0.0
    %1142 = vmatpush1.msra.mxu0 0.0
    %1143 = vmatprep.subr.mxu0 0.0
    %1144 = vmatpush1.msra.mxu0 0.0
    %1145 = vmatprep.subr.mxu0 0.0
    %1146 = vmatpush1.msra.mxu0 0.0
    %1147 = vmatprep.subr.mxu0 0.0
    %1148 = vmatpush1.msra.mxu0 0.0
    %1149 = vmatprep.subr.mxu0 0.0
    %1150 = vmatpush1.msra.mxu0 0.0
    %1151 = vmatprep.subr.mxu0 0.0
    %1152 = vmatpush1.msra.mxu0 0.0
    %1153 = vmatprep.subr.mxu0 0.0
    %1154 = vmatpush1.msra.mxu0 0.0
    %1155 = vmatprep.subr.mxu0 0.0
    %1156 = vmatpush1.msra.mxu0 0.0
    %1157 = vmatprep.subr.mxu0 0.0
    %1158 = vmatpush1.msra.mxu0 0.0
    %1159 = vmatprep.subr.mxu0 0.0
    %1160 = vmatpush1.msra.mxu0 0.0
    %1161 = vmatprep.subr.mxu0 0.0
    %1162 = vmatpush1.msra.mxu0 0.0
    %1163 = vmatprep.subr.mxu0 0.0
    %1164 = vmatpush1.msra.mxu0 0.0
    %1165 = vmatprep.subr.mxu0 0.0
    %1166 = vmatpush1.msra.mxu0 0.0
    %1167 = vmatprep.subr.mxu0 0.0
    %1168 = vmatpush1.msra.mxu0 0.0
    %1169 = vmatprep.subr.mxu0 0.0
    %1170 = vmatpush1.msra.mxu0 0.0
    %1171 = vmatprep.mubr.f32.mxu0 0.0
    %1172 = vmatmul.mubr.f32.gmra.mrb[0].mxu0 %v1102
    %v1173 = vpop.f32.mrb[0].mxu0
    %v1174 = vadd.f32 0.0, %v1173
    %v1175 = vpop.f32.mrb[0].mxu0
    %1176 = vmatprep.mubr.f32.mxu0 0.0
    %1177 = vmatmul.mubr.f32.gmra.mrb[0].mxu0 %v1105
    %v1178 = vpop.f32.mrb[0].mxu0
    %v1179 = vadd.f32 0.0, %v1178
    %v1180 = vpop.f32.mrb[0].mxu0
    %1181 = vdwg.mxu0
    %v1182 = vadd.f32 %v892, %v1174
    %v1183 = vadd.f32 %v897, %v1179
    %1184 = vrot.lane.b32.xlu0 %v328, 104
    %v1185 = vpop.permute.xlu0 %1184
    %1186 = vrot.lane.b32.xlu0 %v333, 104
    %v1187 = vpop.permute.xlu0 %1186
    %1188 = vrot.lane.b32.xlu0 %v328, 72
    %v1189 = vpop.permute.xlu0 %1188
    %1190 = vrot.lane.b32.xlu0 %v333, 72
    %v1191 = vpop.permute.xlu0 %1190
    %v1192 = vsel %vm342, %v1185, 0
    %v1194 = vsel %vm342, %v1187, 0
    %v1196 = vsel %vm342, %v1189, 0
    %v1198 = vsel %vm342, %v1191, 0
    %1200 = vmatprep.subr.mxu0 0.0
    %1201 = vmatpush1.xpose.msra.mxu0 %v1196
    %1202 = vmatprep.subr.mxu0 0.0
    %1203 = vmatpush1.xpose.msra.mxu0 %v1198
    %1204 = vmatprep.subr.mxu0 0.0
    %1205 = vmatpush1.xpose.msra.mxu0 0.0
    %1206 = vmatprep.subr.mxu0 0.0
    %1207 = vmatpush1.xpose.msra.mxu0 0.0
    %1208 = vmatprep.subr.mxu0 0.0
    %1209 = vmatpush1.xpose.msra.mxu0 0.0
    %1210 = vmatprep.subr.mxu0 0.0
    %1211 = vmatpush1.xpose.msra.mxu0 0.0
    %1212 = vmatprep.subr.mxu0 0.0
    %1213 = vmatpush1.xpose.msra.mxu0 0.0
    %1214 = vmatprep.subr.mxu0 0.0
    %1215 = vmatpush1.xpose.msra.mxu0 0.0
    %1216 = vmatprep.subr.mxu0 0.0
    %1217 = vmatpush1.xpose.msra.mxu0 0.0
    %1218 = vmatprep.subr.mxu0 0.0
    %1219 = vmatpush1.xpose.msra.mxu0 0.0
    %1220 = vmatprep.subr.mxu0 0.0
    %1221 = vmatpush1.xpose.msra.mxu0 0.0
    %1222 = vmatprep.subr.mxu0 0.0
    %1223 = vmatpush1.xpose.msra.mxu0 0.0
    %1224 = vmatprep.subr.mxu0 0.0
    %1225 = vmatpush1.xpose.msra.mxu0 0.0
    %1226 = vmatprep.subr.mxu0 0.0
    %1227 = vmatpush1.xpose.msra.mxu0 0.0
    %1228 = vmatprep.subr.mxu0 0.0
    %1229 = vmatpush1.xpose.msra.mxu0 0.0
    %1230 = vmatprep.subr.mxu0 0.0
    %1231 = vmatpush1.xpose.msra.mxu0 0.0
    %1232 = vmatprep.subr.mxu0 0.0
    %1233 = vmatpush1.xpose.msra.mxu0 0.0
    %1234 = vmatprep.subr.mxu0 0.0
    %1235 = vmatpush1.xpose.msra.mxu0 0.0
    %1236 = vmatprep.subr.mxu0 0.0
    %1237 = vmatpush1.xpose.msra.mxu0 0.0
    %1238 = vmatprep.subr.mxu0 0.0
    %1239 = vmatpush1.xpose.msra.mxu0 0.0
    %1240 = vmatprep.subr.mxu0 0.0
    %1241 = vmatpush1.xpose.msra.mxu0 0.0
    %1242 = vmatprep.subr.mxu0 0.0
    %1243 = vmatpush1.xpose.msra.mxu0 0.0
    %1244 = vmatprep.subr.mxu0 0.0
    %1245 = vmatpush1.xpose.msra.mxu0 0.0
    %1246 = vmatprep.subr.mxu0 0.0
    %1247 = vmatpush1.xpose.msra.mxu0 0.0
    %1248 = vmatprep.subr.mxu0 0.0
    %1249 = vmatpush1.xpose.msra.mxu0 0.0
    %1250 = vmatprep.subr.mxu0 0.0
    %1251 = vmatpush1.xpose.msra.mxu0 0.0
    %1252 = vmatprep.subr.mxu0 0.0
    %1253 = vmatpush1.xpose.msra.mxu0 0.0
    %1254 = vmatprep.subr.mxu0 0.0
    %1255 = vmatpush1.xpose.msra.mxu0 0.0
    %1256 = vmatprep.subr.mxu0 0.0
    %1257 = vmatpush1.xpose.msra.mxu0 0.0
    %1258 = vmatprep.subr.mxu0 0.0
    %1259 = vmatpush1.xpose.msra.mxu0 0.0
    %1260 = vmatprep.subr.mxu0 0.0
    %1261 = vmatpush1.xpose.msra.mxu0 0.0
    %1262 = vmatprep.subr.mxu0 0.0
    %1263 = vmatpush1.xpose.msra.mxu0 0.0
    %1264 = vmatprep.mubr.f32.mxu0 0.0
    %1265 = vmatmul.mubr.f32.gmra.mrb[0].mxu0 %v1192
    %v1266 = vpop.f32.mrb[0].mxu0
    %v1267 = vadd.f32 %v225, %v1266
    %v1268 = vpop.f32.mrb[0].mxu0
    %1269 = vmatprep.mubr.f32.mxu0 0.0
    %1270 = vmatmul.mubr.f32.gmra.mrb[0].mxu0 %v1194
    %v1271 = vpop.f32.mrb[0].mxu0
    %v1272 = vadd.f32 %v226, %v1271
    %v1273 = vpop.f32.mrb[0].mxu0
    %1274 = vdwg.mxu0
    %v1275 = vsel %vm426, %v1267, -inf
    %1276 = vmax.xlane.f32.xlu0 %v1275
    %v1277 = vpop.xlane.xlu0 %1276
    %v1278 = vsel %vm426, %v1272, -inf
    %1279 = vmax.xlane.f32.xlu0 %v1278
    %v1280 = vpop.xlane.xlu0 %1279
    %v1281 = vsub.f32 %v1267, %v1277
    %v1282 = vsub.f32 %v1272, %v1280
    %v1283 = vmul.f32 %v1281, 1.442695
    %v1284 = vpow.pop %v1283
    %v1285 = vmul.f32 %v1282, 1.442695
    %v1286 = vpow.pop %v1285
    %v1287 = vsel %vm426, %v1284, 0.0
    %1288 = vadd.xlane.f32.xlu0 %v1287
    %v1289 = vpop.xlane.xlu0 %1288
    %v1290 = vsel %vm426, %v1286, 0.0
    %1291 = vadd.xlane.f32.xlu0 %v1290
    %v1292 = vpop.xlane.xlu0 %1291
    %v1293 = vrcp.pop %v1289
    %v1294 = vrcp.pop %v1292
    %v1295 = vmul.f32 %v1284, %v1293
    %v1296 = vmul.f32 %v1286, %v1294
    %1297 = vrot.lane.b32.xlu0 %v328, 40
    %v1298 = vpop.permute.xlu0 %1297
    %1299 = vrot.lane.b32.xlu0 %v333, 40
    %v1300 = vpop.permute.xlu0 %1299
    %v1304 = vsel %vm426, %v1295, 0
    %v1307 = vsel %vm426, %v1296, 0
    %1309 = vmatprep.subr.mxu0 0.0
    %1310 = vmatpush1.msra.mxu0 %v1298
    %1311 = vmatprep.subr.mxu0 0.0
    %1312 = vmatpush1.msra.mxu0 %v1300
    %1313 = vmatprep.subr.mxu0 0.0
    %1314 = vmatpush1.msra.mxu0 0.0
    %1315 = vmatprep.subr.mxu0 0.0
    %1316 = vmatpush1.msra.mxu0 0.0
    %1317 = vmatprep.subr.mxu0 0.0
    %1318 = vmatpush1.msra.mxu0 0.0
    %1319 = vmatprep.subr.mxu0 0.0
    %1320 = vmatpush1.msra.mxu0 0.0
    %1321 = vmatprep.subr.mxu0 0.0
    %1322 = vmatpush1.msra.mxu0 0.0
    %1323 = vmatprep.subr.mxu0 0.0
    %1324 = vmatpush1.msra.mxu0 0.0
    %1325 = vmatprep.subr.mxu0 0.0
    %1326 = vmatpush1.msra.mxu0 0.0
    %1327 = vmatprep.subr.mxu0 0.0
    %1328 = vmatpush1.msra.mxu0 0.0
    %1329 = vmatprep.subr.mxu0 0.0
    %1330 = vmatpush1.msra.mxu0 0.0
    %1331 = vmatprep.subr.mxu0 0.0
    %1332 = vmatpush1.msra.mxu0 0.0
    %1333 = vmatprep.subr.mxu0 0.0
    %1334 = vmatpush1.msra.mxu0 0.0
    %1335 = vmatprep.subr.mxu0 0.0
    %1336 = vmatpush1.msra.mxu0 0.0
    %1337 = vmatprep.subr.mxu0 0.0
    %1338 = vmatpush1.msra.mxu0 0.0
    %1339 = vmatprep.subr.mxu0 0.0
    %1340 = vmatpush1.msra.mxu0 0.0
    %1341 = vmatprep.subr.mxu0 0.0
    %1342 = vmatpush1.msra.mxu0 0.0
    %1343 = vmatprep.subr.mxu0 0.0
    %1344 = vmatpush1.msra.mxu0 0.0
    %1345 = vmatprep.subr.mxu0 0.0
    %1346 = vmatpush1.msra.mxu0 0.0
    %1347 = vmatprep.subr.mxu0 0.0
    %1348 = vmatpush1.msra.mxu0 0.0
    %1349 = vmatprep.subr.mxu0 0.0
    %1350 = vmatpush1.msra.mxu0 0.0
    %1351 = vmatprep.subr.mxu0 0.0
    %1352 = vmatpush1.msra.mxu0 0.0
    %1353 = vmatprep.subr.mxu0 0.0
    %1354 = vmatpush1.msra.mxu0 0.0
    %1355 = vmatprep.subr.mxu0 0.0
    %1356 = vmatpush1.msra.mxu0 0.0
    %1357 = vmatprep.subr.mxu0 0.0
    %1358 = vmatpush1.msra.mxu0 0.0
    %1359 = vmatprep.subr.mxu0 0.0
    %1360 = vmatpush1.msra.mxu0 0.0
    %1361 = vmatprep.subr.mxu0 0.0
    %1362 = vmatpush1.msra.mxu0 0.0
    %1363 = vmatprep.subr.mxu0 0.0
    %1364 = vmatpush1.msra.mxu0 0.0
    %1365 = vmatprep.subr.mxu0 0.0
    %1366 = vmatpush1.msra.mxu0 0.0
    %1367 = vmatprep.subr.mxu0 0.0
    %1368 = vmatpush1.msra.mxu0 0.0
    %1369 = vmatprep.subr.mxu0 0.0
    %1370 = vmatpush1.msra.mxu0 0.0
    %1371 = vmatprep.subr.mxu0 0.0
    %1372 = vmatpush1.msra.mxu0 0.0
    %1373 = vmatprep.mubr.f32.mxu0 0.0
    %1374 = vmatmul.mubr.f32.gmra.mrb[0].mxu0 %v1304
    %v1375 = vpop.f32.mrb[0].mxu0
    %v1376 = vadd.f32 0.0, %v1375
    %v1377 = vpop.f32.mrb[0].mxu0
    %1378 = vmatprep.mubr.f32.mxu0 0.0
    %1379 = vmatmul.mubr.f32.gmra.mrb[0].mxu0 %v1307
    %v1380 = vpop.f32.mrb[0].mxu0
    %v1381 = vadd.f32 0.0, %v1380
    %v1382 = vpop.f32.mrb[0].mxu0
    %1383 = vdwg.mxu0
    %v1384 = vld [vmem:[#allocation4 + $0x38] sm:$0xff]
    %v1386 = vsel %vm342, %v1376, 0
    %v1389 = vsel %vm342, %v1381, 0
    %1391 = vmatprep.subr.mxu0 0.0
    %1392 = vmatpush1.msra.mxu0 %v1384
    %1393 = vmatprep.subr.mxu0 0.0
    %1394 = vmatpush1.msra.mxu0 0.0
    %1395 = vmatprep.subr.mxu0 0.0
    %1396 = vmatpush1.msra.mxu0 0.0
    %1397 = vmatprep.subr.mxu0 0.0
    %1398 = vmatpush1.msra.mxu0 0.0
    %1399 = vmatprep.subr.mxu0 0.0
    %1400 = vmatpush1.msra.mxu0 0.0
    %1401 = vmatprep.subr.mxu0 0.0
    %1402 = vmatpush1.msra.mxu0 0.0
    %1403 = vmatprep.subr.mxu0 0.0
    %1404 = vmatpush1.msra.mxu0 0.0
    %1405 = vmatprep.subr.mxu0 0.0
    %1406 = vmatpush1.msra.mxu0 0.0
    %1407 = vmatprep.subr.mxu0 0.0
    %1408 = vmatpush1.msra.mxu0 0.0
    %1409 = vmatprep.subr.mxu0 0.0
    %1410 = vmatpush1.msra.mxu0 0.0
    %1411 = vmatprep.subr.mxu0 0.0
    %1412 = vmatpush1.msra.mxu0 0.0
    %1413 = vmatprep.subr.mxu0 0.0
    %1414 = vmatpush1.msra.mxu0 0.0
    %1415 = vmatprep.subr.mxu0 0.0
    %1416 = vmatpush1.msra.mxu0 0.0
    %1417 = vmatprep.subr.mxu0 0.0
    %1418 = vmatpush1.msra.mxu0 0.0
    %1419 = vmatprep.subr.mxu0 0.0
    %1420 = vmatpush1.msra.mxu0 0.0
    %1421 = vmatprep.subr.mxu0 0.0
    %1422 = vmatpush1.msra.mxu0 0.0
    %1423 = vmatprep.subr.mxu0 0.0
    %1424 = vmatpush1.msra.mxu0 0.0
    %1425 = vmatprep.subr.mxu0 0.0
    %1426 = vmatpush1.msra.mxu0 0.0
    %1427 = vmatprep.subr.mxu0 0.0
    %1428 = vmatpush1.msra.mxu0 0.0
    %1429 = vmatprep.subr.mxu0 0.0
    %1430 = vmatpush1.msra.mxu0 0.0
    %1431 = vmatprep.subr.mxu0 0.0
    %1432 = vmatpush1.msra.mxu0 0.0
    %1433 = vmatprep.subr.mxu0 0.0
    %1434 = vmatpush1.msra.mxu0 0.0
    %1435 = vmatprep.subr.mxu0 0.0
    %1436 = vmatpush1.msra.mxu0 0.0
    %1437 = vmatprep.subr.mxu0 0.0
    %1438 = vmatpush1.msra.mxu0 0.0
    %1439 = vmatprep.subr.mxu0 0.0
    %1440 = vmatpush1.msra.mxu0 0.0
    %1441 = vmatprep.subr.mxu0 0.0
    %1442 = vmatpush1.msra.mxu0 0.0
    %1443 = vmatprep.subr.mxu0 0.0
    %1444 = vmatpush1.msra.mxu0 0.0
    %1445 = vmatprep.subr.mxu0 0.0
    %1446 = vmatpush1.msra.mxu0 0.0
    %1447 = vmatprep.subr.mxu0 0.0
    %1448 = vmatpush1.msra.mxu0 0.0
    %1449 = vmatprep.subr.mxu0 0.0
    %1450 = vmatpush1.msra.mxu0 0.0
    %1451 = vmatprep.subr.mxu0 0.0
    %1452 = vmatpush1.msra.mxu0 0.0
    %1453 = vmatprep.subr.mxu0 0.0
    %1454 = vmatpush1.msra.mxu0 0.0
    %1455 = vmatprep.mubr.f32.mxu0 0.0
    %1456 = vmatmul.mubr.f32.gmra.mrb[0].mxu0 %v1386
    %v1457 = vpop.f32.mrb[0].mxu0
    %v1458 = vadd.f32 0.0, %v1457
    %v1459 = vpop.f32.mrb[0].mxu0
    %1460 = vmatprep.mubr.f32.mxu0 0.0
    %1461 = vmatmul.mubr.f32.gmra.mrb[0].mxu0 %v1389
    %v1462 = vpop.f32.mrb[0].mxu0
    %v1463 = vadd.f32 0.0, %v1462
    %v1464 = vpop.f32.mrb[0].mxu0
    %1465 = vdwg.mxu0
    %v1466 = vadd.f32 %v1182, %v1458
    %v1467 = vadd.f32 %v1183, %v1463
    %v1468 = vlaneseq
    %v1469 = vshrl.u32 %v1468, 7
    %v1470 = vsub.s32 0, %v1469
    %v1471 = vrot.slane %v244, %v1470
    %v1472 = vadd.f32 %v1466, %v1471
    %v1473 = vadd.f32 %v1467, %v1471
    %v1474 = vadd.f32 %v212, %v1472
    %v1475 = vadd.f32 %v213, %v1473
    %v1476 = vsel %vm174, %v1474, 0.0
    %1477 = vadd.xlane.f32.xlu0 %v1476
    %v1478 = vpop.xlane.xlu0 %1477
    %v1479 = vsel %vm174, %v1475, 0.0
    %1480 = vadd.xlane.f32.xlu0 %v1479
    %v1481 = vpop.xlane.xlu0 %1480
    %v1482 = vmul.f32 %v1478, %v181
    %v1483 = vmul.f32 %v1481, %v181
    %v1484 = vsub.f32 %v1474, %v1482
    %v1485 = vsub.f32 %v1475, %v1483
    %v1486 = vmul.f32 %v1484, %v1484
    %v1487 = vmul.f32 %v1485, %v1485
    %v1488 = vsel %vm174, %v1486, 0.0
    %1489 = vadd.xlane.f32.xlu0 %v1488
    %v1490 = vpop.xlane.xlu0 %1489
    %v1491 = vsel %vm174, %v1487, 0.0
    %1492 = vadd.xlane.f32.xlu0 %v1491
    %v1493 = vpop.xlane.xlu0 %1492
    %v1494 = vmul.f32 %v1490, %v181
    %v1495 = vmul.f32 %v1493, %v181
    %v1496 = vadd.f32 %v1494, 1e-12
    %v1497 = vadd.f32 %v1495, 1e-12
    %v1498 = vrsqrt.pop %v1496
    %v1499 = vrsqrt.pop %v1497
    %v1500 = vmul.f32 %v1484, %v1498
    %v1501 = vmul.f32 %v1485, %v1499
    %v1502 = vlaneseq
    %v1503 = vshrl.u32 %v1502, 7
    %v1504 = vsub.s32 0, %v1503
    %v1505 = vrot.slane %v245, %v1504
    %v1506 = vmul.f32 %v1500, %v1505
    %v1507 = vmul.f32 %v1501, %v1505
    %v1508 = vlaneseq
    %v1509 = vshrl.u32 %v1508, 7
    %v1510 = vsub.s32 0, %v1509
    %v1511 = vrot.slane %v246, %v1510
    %v1512 = vadd.f32 %v1506, %v1511
    %v1513 = vadd.f32 %v1507, %v1511
    %v1514 = vlaneseq
    %v1515 = vshrl.u32 %v1514, 7
    %v1516 = vsub.s32 0, %v1515
    %v1517 = vrot.slane %v247, %v1516
    %v1519 = vsel %vm174, %v1512, 0
    %v1522 = vsel %vm174, %v1513, 0
    %1524 = vmatprep.subr.mxu0 0.0
    %1525 = vmatpush1.msra.mxu0 %v231
    %1526 = vmatprep.subr.mxu0 0.0
    %1527 = vmatpush1.msra.mxu0 %v232
    %1528 = vmatprep.subr.mxu0 0.0
    %1529 = vmatpush1.msra.mxu0 %v233
    %1530 = vmatprep.subr.mxu0 0.0
    %1531 = vmatpush1.msra.mxu0 %v234
    %1532 = vmatprep.subr.mxu0 0.0
    %1533 = vmatpush1.msra.mxu0 0.0
    %1534 = vmatprep.subr.mxu0 0.0
    %1535 = vmatpush1.msra.mxu0 0.0
    %1536 = vmatprep.subr.mxu0 0.0
    %1537 = vmatpush1.msra.mxu0 0.0
    %1538 = vmatprep.subr.mxu0 0.0
    %1539 = vmatpush1.msra.mxu0 0.0
    %1540 = vmatprep.subr.mxu0 0.0
    %1541 = vmatpush1.msra.mxu0 0.0
    %1542 = vmatprep.subr.mxu0 0.0
    %1543 = vmatpush1.msra.mxu0 0.0
    %1544 = vmatprep.subr.mxu0 0.0
    %1545 = vmatpush1.msra.mxu0 0.0
    %1546 = vmatprep.subr.mxu0 0.0
    %1547 = vmatpush1.msra.mxu0 0.0
    %1548 = vmatprep.subr.mxu0 0.0
    %1549 = vmatpush1.msra.mxu0 0.0
    %1550 = vmatprep.subr.mxu0 0.0
    %1551 = vmatpush1.msra.mxu0 0.0
    %1552 = vmatprep.subr.mxu0 0.0
    %1553 = vmatpush1.msra.mxu0 0.0
    %1554 = vmatprep.subr.mxu0 0.0
    %1555 = vmatpush1.msra.mxu0 0.0
    %1556 = vmatprep.subr.mxu0 0.0
    %1557 = vmatpush1.msra.mxu0 0.0
    %1558 = vmatprep.subr.mxu0 0.0
    %1559 = vmatpush1.msra.mxu0 0.0
    %1560 = vmatprep.subr.mxu0 0.0
    %1561 = vmatpush1.msra.mxu0 0.0
    %1562 = vmatprep.subr.mxu0 0.0
    %1563 = vmatpush1.msra.mxu0 0.0
    %1564 = vmatprep.subr.mxu0 0.0
    %1565 = vmatpush1.msra.mxu0 0.0
    %1566 = vmatprep.subr.mxu0 0.0
    %1567 = vmatpush1.msra.mxu0 0.0
    %1568 = vmatprep.subr.mxu0 0.0
    %1569 = vmatpush1.msra.mxu0 0.0
    %1570 = vmatprep.subr.mxu0 0.0
    %1571 = vmatpush1.msra.mxu0 0.0
    %1572 = vmatprep.subr.mxu0 0.0
    %1573 = vmatpush1.msra.mxu0 0.0
    %1574 = vmatprep.subr.mxu0 0.0
    %1575 = vmatpush1.msra.mxu0 0.0
    %1576 = vmatprep.subr.mxu0 0.0
    %1577 = vmatpush1.msra.mxu0 0.0
    %1578 = vmatprep.subr.mxu0 0.0
    %1579 = vmatpush1.msra.mxu0 0.0
    %1580 = vmatprep.subr.mxu0 0.0
    %1581 = vmatpush1.msra.mxu0 0.0
    %1582 = vmatprep.subr.mxu0 0.0
    %1583 = vmatpush1.msra.mxu0 0.0
    %1584 = vmatprep.subr.mxu0 0.0
    %1585 = vmatpush1.msra.mxu0 0.0
    %1586 = vmatprep.subr.mxu0 0.0
    %1587 = vmatpush1.msra.mxu0 0.0
    %1588 = vmatprep.mubr.f32.mxu0 0.0
    %1589 = vmatmul.mubr.f32.gmra.mrb[0].mxu0 %v1519
    %v1590 = vpop.f32.mrb[0].mxu0
    %v1591 = vadd.f32 %v1517, %v1590
    %v1592 = vpop.f32.mrb[0].mxu0
    %1593 = vmatprep.mubr.f32.mxu0 0.0
    %1594 = vmatmul.mubr.f32.gmra.mrb[0].mxu0 %v1522
    %v1595 = vpop.f32.mrb[0].mxu0
    %v1596 = vadd.f32 %v1517, %v1595
    %v1597 = vpop.f32.mrb[0].mxu0
    %1598 = vdwg.mxu0
    %v1599 = vmul.f32 %v1591, 0.5
    %v1600 = vmul.f32 %v1596, 0.5
    %v1601 = vmul.f32 %v1591, 0.044715
    %v1602 = vmul.f32 %v1596, 0.044715
    %v1603 = vmul.f32 %v1601, %v1591
    %v1604 = vmul.f32 %v1602, %v1596
    %v1605 = vmul.f32 %v1603, %v1591
    %v1606 = vmul.f32 %v1604, %v1596
    %v1607 = vadd.f32 %v1591, %v1605
    %v1608 = vadd.f32 %v1596, %v1606
    %v1609 = vmul.f32 %v1607, 0.7978846
    %v1610 = vmul.f32 %v1608, 0.7978846
    %v1611 = vtanh.pop %v1609
    %v1612 = vtanh.pop %v1610
    %v1613 = vadd.f32 %v1611, 1.0
    %v1614 = vadd.f32 %v1612, 1.0
    %v1615 = vmul.f32 %v1599, %v1613
    %v1616 = vmul.f32 %v1600, %v1614
    %v1617 = vlaneseq
    %v1618 = vshrl.u32 %v1617, 7
    %v1619 = vsub.s32 0, %v1618
    %v1620 = vrot.slane %v248, %v1619
    %v1622 = vsel %vm90, %v1615, 0
    %v1625 = vsel %vm90, %v1616, 0
    %1627 = vmatprep.subr.mxu0 0.0
    %1628 = vmatpush1.msra.mxu0 %v235
    %1629 = vmatprep.subr.mxu0 0.0
    %1630 = vmatpush1.msra.mxu0 %v236
    %1631 = vmatprep.subr.mxu0 0.0
    %1632 = vmatpush1.msra.mxu0 %v237
    %1633 = vmatprep.subr.mxu0 0.0
    %1634 = vmatpush1.msra.mxu0 %v238
    %1635 = vmatprep.subr.mxu0 0.0
    %1636 = vmatpush1.msra.mxu0 %v239
    %1637 = vmatprep.subr.mxu0 0.0
    %1638 = vmatpush1.msra.mxu0 %v240
    %1639 = vmatprep.subr.mxu0 0.0
    %1640 = vmatpush1.msra.mxu0 %v241
    %1641 = vmatprep.subr.mxu0 0.0
    %1642 = vmatpush1.msra.mxu0 %v242
    %1643 = vmatprep.subr.mxu0 0.0
    %1644 = vmatpush1.msra.mxu0 0.0
    %1645 = vmatprep.subr.mxu0 0.0
    %1646 = vmatpush1.msra.mxu0 0.0
    %1647 = vmatprep.subr.mxu0 0.0
    %1648 = vmatpush1.msra.mxu0 0.0
    %1649 = vmatprep.subr.mxu0 0.0
    %1650 = vmatpush1.msra.mxu0 0.0
    %1651 = vmatprep.subr.mxu0 0.0
    %1652 = vmatpush1.msra.mxu0 0.0
    %1653 = vmatprep.subr.mxu0 0.0
    %1654 = vmatpush1.msra.mxu0 0.0
    %1655 = vmatprep.subr.mxu0 0.0
    %1656 = vmatpush1.msra.mxu0 0.0
    %1657 = vmatprep.subr.mxu0 0.0
    %1658 = vmatpush1.msra.mxu0 0.0
    %1659 = vmatprep.subr.mxu0 0.0
    %1660 = vmatpush1.msra.mxu0 0.0
    %1661 = vmatprep.subr.mxu0 0.0
    %1662 = vmatpush1.msra.mxu0 0.0
    %1663 = vmatprep.subr.mxu0 0.0
    %1664 = vmatpush1.msra.mxu0 0.0
    %1665 = vmatprep.subr.mxu0 0.0
    %1666 = vmatpush1.msra.mxu0 0.0
    %1667 = vmatprep.subr.mxu0 0.0
    %1668 = vmatpush1.msra.mxu0 0.0
    %1669 = vmatprep.subr.mxu0 0.0
    %1670 = vmatpush1.msra.mxu0 0.0
    %1671 = vmatprep.subr.mxu0 0.0
    %1672 = vmatpush1.msra.mxu0 0.0
    %1673 = vmatprep.subr.mxu0 0.0
    %1674 = vmatpush1.msra.mxu0 0.0
    %1675 = vmatprep.subr.mxu0 0.0
    %1676 = vmatpush1.msra.mxu0 0.0
    %1677 = vmatprep.subr.mxu0 0.0
    %1678 = vmatpush1.msra.mxu0 0.0
    %1679 = vmatprep.subr.mxu0 0.0
    %1680 = vmatpush1.msra.mxu0 0.0
    %1681 = vmatprep.subr.mxu0 0.0
    %1682 = vmatpush1.msra.mxu0 0.0
    %1683 = vmatprep.subr.mxu0 0.0
    %1684 = vmatpush1.msra.mxu0 0.0
    %1685 = vmatprep.subr.mxu0 0.0
    %1686 = vmatpush1.msra.mxu0 0.0
    %1687 = vmatprep.subr.mxu0 0.0
    %1688 = vmatpush1.msra.mxu0 0.0
    %1689 = vmatprep.subr.mxu0 0.0
    %1690 = vmatpush1.msra.mxu0 0.0
    %1691 = vmatprep.mubr.f32.mxu0 0.0
    %1692 = vmatmul.mubr.f32.gmra.mrb[0].mxu0 %v1622
    %v1693 = vpop.f32.mrb[0].mxu0
    %v1694 = vadd.f32 %v1620, %v1693
    %v1695 = vpop.f32.mrb[0].mxu0
    %1696 = vmatprep.mubr.f32.mxu0 0.0
    %1697 = vmatmul.mubr.f32.gmra.mrb[0].mxu0 %v1625
    %v1698 = vpop.f32.mrb[0].mxu0
    %v1699 = vadd.f32 %v1620, %v1698
    %v1700 = vpop.f32.mrb[0].mxu0
    %1701 = vdwg.mxu0
    %v1702 = vadd.f32 %v1512, %v1694
    %v1703 = vadd.f32 %v1513, %v1699
    %v1704 = vsel %vm174, %v1702, 0.0
    %1705 = vadd.xlane.f32.xlu0 %v1704
    %v1706 = vpop.xlane.xlu0 %1705
    %v1707 = vsel %vm174, %v1703, 0.0
    %1708 = vadd.xlane.f32.xlu0 %v1707
    %v1709 = vpop.xlane.xlu0 %1708
    %v1710 = vmul.f32 %v1706, %v181
    %v1711 = vmul.f32 %v1709, %v181
    %v1712 = vsub.f32 %v1702, %v1710
    %v1713 = vsub.f32 %v1703, %v1711
    %v1714 = vmul.f32 %v1712, %v1712
    %v1715 = vmul.f32 %v1713, %v1713
    %v1716 = vsel %vm174, %v1714, 0.0
    %1717 = vadd.xlane.f32.xlu0 %v1716
    %v1718 = vpop.xlane.xlu0 %1717
    %v1719 = vsel %vm174, %v1715, 0.0
    %1720 = vadd.xlane.f32.xlu0 %v1719
    %v1721 = vpop.xlane.xlu0 %1720
    %v1722 = vmul.f32 %v1718, %v181
    %v1723 = vmul.f32 %v1721, %v181
    %v1724 = vadd.f32 %v1722, 1e-12
    %v1725 = vadd.f32 %v1723, 1e-12
    %v1726 = vrsqrt.pop %v1724
    %v1727 = vrsqrt.pop %v1725
    %v1728 = vmul.f32 %v1712, %v1726
    %v1729 = vmul.f32 %v1713, %v1727
    %v1730 = vlaneseq
    %v1731 = vshrl.u32 %v1730, 7
    %v1732 = vsub.s32 0, %v1731
    %v1733 = vrot.slane %v249, %v1732
    %v1734 = vmul.f32 %v1728, %v1733
    %v1735 = vmul.f32 %v1729, %v1733
    %v1736 = vlaneseq
    %v1737 = vshrl.u32 %v1736, 7
    %v1738 = vsub.s32 0, %v1737
    %v1739 = vrot.slane %v250, %v1738
    %v1740 = vadd.f32 %v1734, %v1739
    %v1741 = vadd.f32 %v1735, %v1739
    %s1742 = scalar_lea.vmem [#allocation4], 160
    %v1743 = vld [vmem:[%s1742] sm:$0xff]
    %v1744 = vld [vmem:[%s1742 + $0x8] sm:$0xff]
    %v1745 = vld [vmem:[%s1742 + $0x10] sm:$0xff]
    %v1746 = vld [vmem:[%s1742 + $0x18] sm:$0xff]
    %v1747 = vld [vmem:[%s1742 + $0x40] sm:$0xff]
    %v1748 = vld [vmem:[%s1742 + $0x48] sm:$0xff]
    %v1749 = vld [vmem:[%s1742 + $0x50] sm:$0xff]
    %v1750 = vld [vmem:[%s1742 + $0x58] sm:$0xff]
    %v1751 = vld [vmem:[%s1742 + $0x60] sm:$0xff]
    %v1752 = vld [vmem:[%s1742 + $0x68] sm:$0xff]
    %v1753 = vld [vmem:[%s1742 + $0x70] sm:$0xff]
    %v1754 = vld [vmem:[%s1742 + $0x78] sm:$0xff]
    %v1755 = vld [vmem:[%s1742 + $0x80] sm:$0xff]
    %v1756 = vld [vmem:[%s1742 + $0x88] sm:$0xff]
    %v1757 = vld [vmem:[%s1742 + $0x90] sm:$0xff]
    %v1758 = vld [vmem:[%s1742 + $0x98] sm:$0xff]
    %s1759 = scalar_lea.vmem %s4, 8
    %v1760 = vld [vmem:[%s1759] sm:$0x1]
    %v1761 = vld [vmem:[%s1759 + $0x1] sm:$0x1]
    %v1762 = vld [vmem:[%s1759 + $0x2] sm:$0x1]
    %v1763 = vld [vmem:[%s1759 + $0x3] sm:$0x1]
    %v1764 = vld [vmem:[%s1759 + $0x4] sm:$0x1]
    %v1765 = vld [vmem:[%s1759 + $0x5] sm:$0x1]
    %v1766 = vld [vmem:[%s1759 + $0x6] sm:$0x1]
    %v1767 = vld [vmem:[%s1759 + $0x7] sm:$0x1]
    %v1768 = vlaneseq
    %v1769 = vshrl.u32 %v1768, 7
    %v1770 = vsub.s32 0, %v1769
    %v1771 = vrot.slane %v1760, %v1770
    %v1773 = vsel %vm174, %v1740, 0
    %v1776 = vsel %vm174, %v1741, 0
    %1778 = vmatprep.subr.mxu0 0.0
    %1779 = vmatpush1.msra.mxu0 %v1743
    %1780 = vmatprep.subr.mxu0 0.0
    %1781 = vmatpush1.msra.mxu0 %v1744
    %1782 = vmatprep.subr.mxu0 0.0
    %1783 = vmatpush1.msra.mxu0 %v1745
    %1784 = vmatprep.subr.mxu0 0.0
    %1785 = vmatpush1.msra.mxu0 %v1746
    %1786 = vmatprep.subr.mxu0 0.0
    %1787 = vmatpush1.msra.mxu0 0.0
    %1788 = vmatprep.subr.mxu0 0.0
    %1789 = vmatpush1.msra.mxu0 0.0
    %1790 = vmatprep.subr.mxu0 0.0
    %1791 = vmatpush1.msra.mxu0 0.0
    %1792 = vmatprep.subr.mxu0 0.0
    %1793 = vmatpush1.msra.mxu0 0.0
    %1794 = vmatprep.subr.mxu0 0.0
    %1795 = vmatpush1.msra.mxu0 0.0
    %1796 = vmatprep.subr.mxu0 0.0
    %1797 = vmatpush1.msra.mxu0 0.0
    %1798 = vmatprep.subr.mxu0 0.0
    %1799 = vmatpush1.msra.mxu0 0.0
    %1800 = vmatprep.subr.mxu0 0.0
    %1801 = vmatpush1.msra.mxu0 0.0
    %1802 = vmatprep.subr.mxu0 0.0
    %1803 = vmatpush1.msra.mxu0 0.0
    %1804 = vmatprep.subr.mxu0 0.0
    %1805 = vmatpush1.msra.mxu0 0.0
    %1806 = vmatprep.subr.mxu0 0.0
    %1807 = vmatpush1.msra.mxu0 0.0
    %1808 = vmatprep.subr.mxu0 0.0
    %1809 = vmatpush1.msra.mxu0 0.0
    %1810 = vmatprep.subr.mxu0 0.0
    %1811 = vmatpush1.msra.mxu0 0.0
    %1812 = vmatprep.subr.mxu0 0.0
    %1813 = vmatpush1.msra.mxu0 0.0
    %1814 = vmatprep.subr.mxu0 0.0
    %1815 = vmatpush1.msra.mxu0 0.0
    %1816 = vmatprep.subr.mxu0 0.0
    %1817 = vmatpush1.msra.mxu0 0.0
    %1818 = vmatprep.subr.mxu0 0.0
    %1819 = vmatpush1.msra.mxu0 0.0
    %1820 = vmatprep.subr.mxu0 0.0
    %1821 = vmatpush1.msra.mxu0 0.0
    %1822 = vmatprep.subr.mxu0 0.0
    %1823 = vmatpush1.msra.mxu0 0.0
    %1824 = vmatprep.subr.mxu0 0.0
    %1825 = vmatpush1.msra.mxu0 0.0
    %1826 = vmatprep.subr.mxu0 0.0
    %1827 = vmatpush1.msra.mxu0 0.0
    %1828 = vmatprep.subr.mxu0 0.0
    %1829 = vmatpush1.msra.mxu0 0.0
    %1830 = vmatprep.subr.mxu0 0.0
    %1831 = vmatpush1.msra.mxu0 0.0
    %1832 = vmatprep.subr.mxu0 0.0
    %1833 = vmatpush1.msra.mxu0 0.0
    %1834 = vmatprep.subr.mxu0 0.0
    %1835 = vmatpush1.msra.mxu0 0.0
    %1836 = vmatprep.subr.mxu0 0.0
    %1837 = vmatpush1.msra.mxu0 0.0
    %1838 = vmatprep.subr.mxu0 0.0
    %1839 = vmatpush1.msra.mxu0 0.0
    %1840 = vmatprep.subr.mxu0 0.0
    %1841 = vmatpush1.msra.mxu0 0.0
    %1842 = vmatprep.mubr.f32.mxu0 0.0
    %1843 = vmatmul.mubr.f32.gmra.mrb[0].mxu0 %v1773
    %v1844 = vpop.f32.mrb[0].mxu0
    %v1845 = vadd.f32 %v1771, %v1844
    %v1846 = vpop.f32.mrb[0].mxu0
    %1847 = vmatprep.mubr.f32.mxu0 0.0
    %1848 = vmatmul.mubr.f32.gmra.mrb[0].mxu0 %v1776
    %v1849 = vpop.f32.mrb[0].mxu0
    %v1850 = vadd.f32 %v1771, %v1849
    %v1851 = vpop.f32.mrb[0].mxu0
    %1852 = vdwg.mxu0
    %1855 = vrot.lane.b32.xlu0 %v1845, 96
    %v1856 = vpop.permute.xlu0 %1855
    %1857 = vrot.lane.b32.xlu0 %v1850, 96
    %v1858 = vpop.permute.xlu0 %1857
    %v1859 = vsel %vm342, %v1845, 0
    %v1861 = vsel %vm342, %v1850, 0
    %v1863 = vsel %vm342, %v1856, 0
    %v1865 = vsel %vm342, %v1858, 0
    %1867 = vmatprep.subr.mxu0 0.0
    %1868 = vmatpush1.xpose.msra.mxu0 %v1863
    %1869 = vmatprep.subr.mxu0 0.0
    %1870 = vmatpush1.xpose.msra.mxu0 %v1865
    %1871 = vmatprep.subr.mxu0 0.0
    %1872 = vmatpush1.xpose.msra.mxu0 0.0
    %1873 = vmatprep.subr.mxu0 0.0
    %1874 = vmatpush1.xpose.msra.mxu0 0.0
    %1875 = vmatprep.subr.mxu0 0.0
    %1876 = vmatpush1.xpose.msra.mxu0 0.0
    %1877 = vmatprep.subr.mxu0 0.0
    %1878 = vmatpush1.xpose.msra.mxu0 0.0
    %1879 = vmatprep.subr.mxu0 0.0
    %1880 = vmatpush1.xpose.msra.mxu0 0.0
    %1881 = vmatprep.subr.mxu0 0.0
    %1882 = vmatpush1.xpose.msra.mxu0 0.0
    %1883 = vmatprep.subr.mxu0 0.0
    %1884 = vmatpush1.xpose.msra.mxu0 0.0
    %1885 = vmatprep.subr.mxu0 0.0
    %1886 = vmatpush1.xpose.msra.mxu0 0.0
    %1887 = vmatprep.subr.mxu0 0.0
    %1888 = vmatpush1.xpose.msra.mxu0 0.0
    %1889 = vmatprep.subr.mxu0 0.0
    %1890 = vmatpush1.xpose.msra.mxu0 0.0
    %1891 = vmatprep.subr.mxu0 0.0
    %1892 = vmatpush1.xpose.msra.mxu0 0.0
    %1893 = vmatprep.subr.mxu0 0.0
    %1894 = vmatpush1.xpose.msra.mxu0 0.0
    %1895 = vmatprep.subr.mxu0 0.0
    %1896 = vmatpush1.xpose.msra.mxu0 0.0
    %1897 = vmatprep.subr.mxu0 0.0
    %1898 = vmatpush1.xpose.msra.mxu0 0.0
    %1899 = vmatprep.subr.mxu0 0.0
    %1900 = vmatpush1.xpose.msra.mxu0 0.0
    %1901 = vmatprep.subr.mxu0 0.0
    %1902 = vmatpush1.xpose.msra.mxu0 0.0
    %1903 = vmatprep.subr.mxu0 0.0
    %1904 = vmatpush1.xpose.msra.mxu0 0.0
    %1905 = vmatprep.subr.mxu0 0.0
    %1906 = vmatpush1.xpose.msra.mxu0 0.0
    %1907 = vmatprep.subr.mxu0 0.0
    %1908 = vmatpush1.xpose.msra.mxu0 0.0
    %1909 = vmatprep.subr.mxu0 0.0
    %1910 = vmatpush1.xpose.msra.mxu0 0.0
    %1911 = vmatprep.subr.mxu0 0.0
    %1912 = vmatpush1.xpose.msra.mxu0 0.0
    %1913 = vmatprep.subr.mxu0 0.0
    %1914 = vmatpush1.xpose.msra.mxu0 0.0
    %1915 = vmatprep.subr.mxu0 0.0
    %1916 = vmatpush1.xpose.msra.mxu0 0.0
    %1917 = vmatprep.subr.mxu0 0.0
    %1918 = vmatpush1.xpose.msra.mxu0 0.0
    %1919 = vmatprep.subr.mxu0 0.0
    %1920 = vmatpush1.xpose.msra.mxu0 0.0
    %1921 = vmatprep.subr.mxu0 0.0
    %1922 = vmatpush1.xpose.msra.mxu0 0.0
    %1923 = vmatprep.subr.mxu0 0.0
    %1924 = vmatpush1.xpose.msra.mxu0 0.0
    %1925 = vmatprep.subr.mxu0 0.0
    %1926 = vmatpush1.xpose.msra.mxu0 0.0
    %1927 = vmatprep.subr.mxu0 0.0
    %1928 = vmatpush1.xpose.msra.mxu0 0.0
    %1929 = vmatprep.subr.mxu0 0.0
    %1930 = vmatpush1.xpose.msra.mxu0 0.0
    %1931 = vmatprep.mubr.f32.mxu0 0.0
    %1932 = vmatmul.mubr.f32.gmra.mrb[0].mxu0 %v1859
    %v1933 = vpop.f32.mrb[0].mxu0
    %v1934 = vadd.f32 %v225, %v1933
    %v1935 = vpop.f32.mrb[0].mxu0
    %1936 = vmatprep.mubr.f32.mxu0 0.0
    %1937 = vmatmul.mubr.f32.gmra.mrb[0].mxu0 %v1861
    %v1938 = vpop.f32.mrb[0].mxu0
    %v1939 = vadd.f32 %v226, %v1938
    %v1940 = vpop.f32.mrb[0].mxu0
    %1941 = vdwg.mxu0
    %v1942 = vsel %vm426, %v1934, -inf
    %1943 = vmax.xlane.f32.xlu0 %v1942
    %v1944 = vpop.xlane.xlu0 %1943
    %v1945 = vsel %vm426, %v1939, -inf
    %1946 = vmax.xlane.f32.xlu0 %v1945
    %v1947 = vpop.xlane.xlu0 %1946
    %v1948 = vsub.f32 %v1934, %v1944
    %v1949 = vsub.f32 %v1939, %v1947
    %v1950 = vmul.f32 %v1948, 1.442695
    %v1951 = vpow.pop %v1950
    %v1952 = vmul.f32 %v1949, 1.442695
    %v1953 = vpow.pop %v1952
    %v1954 = vsel %vm426, %v1951, 0.0
    %1955 = vadd.xlane.f32.xlu0 %v1954
    %v1956 = vpop.xlane.xlu0 %1955
    %v1957 = vsel %vm426, %v1953, 0.0
    %1958 = vadd.xlane.f32.xlu0 %v1957
    %v1959 = vpop.xlane.xlu0 %1958
    %v1960 = vrcp.pop %v1956
    %v1961 = vrcp.pop %v1959
    %v1962 = vmul.f32 %v1951, %v1960
    %v1963 = vmul.f32 %v1953, %v1961
    %1964 = vrot.lane.b32.xlu0 %v1845, 64
    %v1965 = vpop.permute.xlu0 %1964
    %1966 = vrot.lane.b32.xlu0 %v1850, 64
    %v1967 = vpop.permute.xlu0 %1966
    %v1971 = vsel %vm426, %v1962, 0
    %v1974 = vsel %vm426, %v1963, 0
    %1976 = vmatprep.subr.mxu0 0.0
    %1977 = vmatpush1.msra.mxu0 %v1965
    %1978 = vmatprep.subr.mxu0 0.0
    %1979 = vmatpush1.msra.mxu0 %v1967
    %1980 = vmatprep.subr.mxu0 0.0
    %1981 = vmatpush1.msra.mxu0 0.0
    %1982 = vmatprep.subr.mxu0 0.0
    %1983 = vmatpush1.msra.mxu0 0.0
    %1984 = vmatprep.subr.mxu0 0.0
    %1985 = vmatpush1.msra.mxu0 0.0
    %1986 = vmatprep.subr.mxu0 0.0
    %1987 = vmatpush1.msra.mxu0 0.0
    %1988 = vmatprep.subr.mxu0 0.0
    %1989 = vmatpush1.msra.mxu0 0.0
    %1990 = vmatprep.subr.mxu0 0.0
    %1991 = vmatpush1.msra.mxu0 0.0
    %1992 = vmatprep.subr.mxu0 0.0
    %1993 = vmatpush1.msra.mxu0 0.0
    %1994 = vmatprep.subr.mxu0 0.0
    %1995 = vmatpush1.msra.mxu0 0.0
    %1996 = vmatprep.subr.mxu0 0.0
    %1997 = vmatpush1.msra.mxu0 0.0
    %1998 = vmatprep.subr.mxu0 0.0
    %1999 = vmatpush1.msra.mxu0 0.0
    %2000 = vmatprep.subr.mxu0 0.0
    %2001 = vmatpush1.msra.mxu0 0.0
    %2002 = vmatprep.subr.mxu0 0.0
    %2003 = vmatpush1.msra.mxu0 0.0
    %2004 = vmatprep.subr.mxu0 0.0
    %2005 = vmatpush1.msra.mxu0 0.0
    %2006 = vmatprep.subr.mxu0 0.0
    %2007 = vmatpush1.msra.mxu0 0.0
    %2008 = vmatprep.subr.mxu0 0.0
    %2009 = vmatpush1.msra.mxu0 0.0
    %2010 = vmatprep.subr.mxu0 0.0
    %2011 = vmatpush1.msra.mxu0 0.0
    %2012 = vmatprep.subr.mxu0 0.0
    %2013 = vmatpush1.msra.mxu0 0.0
    %2014 = vmatprep.subr.mxu0 0.0
    %2015 = vmatpush1.msra.mxu0 0.0
    %2016 = vmatprep.subr.mxu0 0.0
    %2017 = vmatpush1.msra.mxu0 0.0
    %2018 = vmatprep.subr.mxu0 0.0
    %2019 = vmatpush1.msra.mxu0 0.0
    %2020 = vmatprep.subr.mxu0 0.0
    %2021 = vmatpush1.msra.mxu0 0.0
    %2022 = vmatprep.subr.mxu0 0.0
    %2023 = vmatpush1.msra.mxu0 0.0
    %2024 = vmatprep.subr.mxu0 0.0
    %2025 = vmatpush1.msra.mxu0 0.0
    %2026 = vmatprep.subr.mxu0 0.0
    %2027 = vmatpush1.msra.mxu0 0.0
    %2028 = vmatprep.subr.mxu0 0.0
    %2029 = vmatpush1.msra.mxu0 0.0
    %2030 = vmatprep.subr.mxu0 0.0
    %2031 = vmatpush1.msra.mxu0 0.0
    %2032 = vmatprep.subr.mxu0 0.0
    %2033 = vmatpush1.msra.mxu0 0.0
    %2034 = vmatprep.subr.mxu0 0.0
    %2035 = vmatpush1.msra.mxu0 0.0
    %2036 = vmatprep.subr.mxu0 0.0
    %2037 = vmatpush1.msra.mxu0 0.0
    %2038 = vmatprep.subr.mxu0 0.0
    %2039 = vmatpush1.msra.mxu0 0.0
    %2040 = vmatprep.mubr.f32.mxu0 0.0
    %2041 = vmatmul.mubr.f32.gmra.mrb[0].mxu0 %v1971
    %v2042 = vpop.f32.mrb[0].mxu0
    %v2043 = vadd.f32 0.0, %v2042
    %v2044 = vpop.f32.mrb[0].mxu0
    %2045 = vmatprep.mubr.f32.mxu0 0.0
    %2046 = vmatmul.mubr.f32.gmra.mrb[0].mxu0 %v1974
    %v2047 = vpop.f32.mrb[0].mxu0
    %v2048 = vadd.f32 0.0, %v2047
    %v2049 = vpop.f32.mrb[0].mxu0
    %2050 = vdwg.mxu0
    %v2051 = vld [vmem:[%s1742 + $0x20] sm:$0xff]
    %2052 = vrot.lane.b32.xlu0 %v1845, 120
    %v2053 = vpop.permute.xlu0 %2052
    %2054 = vrot.lane.b32.xlu0 %v1850, 120
    %v2055 = vpop.permute.xlu0 %2054
    %2056 = vrot.lane.b32.xlu0 %v1845, 88
    %v2057 = vpop.permute.xlu0 %2056
    %2058 = vrot.lane.b32.xlu0 %v1850, 88
    %v2059 = vpop.permute.xlu0 %2058
    %v2060 = vsel %vm342, %v2053, 0
    %v2062 = vsel %vm342, %v2055, 0
    %v2064 = vsel %vm342, %v2057, 0
    %v2066 = vsel %vm342, %v2059, 0
    %2068 = vmatprep.subr.mxu0 0.0
    %2069 = vmatpush1.xpose.msra.mxu0 %v2064
    %2070 = vmatprep.subr.mxu0 0.0
    %2071 = vmatpush1.xpose.msra.mxu0 %v2066
    %2072 = vmatprep.subr.mxu0 0.0
    %2073 = vmatpush1.xpose.msra.mxu0 0.0
    %2074 = vmatprep.subr.mxu0 0.0
    %2075 = vmatpush1.xpose.msra.mxu0 0.0
    %2076 = vmatprep.subr.mxu0 0.0
    %2077 = vmatpush1.xpose.msra.mxu0 0.0
    %2078 = vmatprep.subr.mxu0 0.0
    %2079 = vmatpush1.xpose.msra.mxu0 0.0
    %2080 = vmatprep.subr.mxu0 0.0
    %2081 = vmatpush1.xpose.msra.mxu0 0.0
    %2082 = vmatprep.subr.mxu0 0.0
    %2083 = vmatpush1.xpose.msra.mxu0 0.0
    %2084 = vmatprep.subr.mxu0 0.0
    %2085 = vmatpush1.xpose.msra.mxu0 0.0
    %2086 = vmatprep.subr.mxu0 0.0
    %2087 = vmatpush1.xpose.msra.mxu0 0.0
    %2088 = vmatprep.subr.mxu0 0.0
    %2089 = vmatpush1.xpose.msra.mxu0 0.0
    %2090 = vmatprep.subr.mxu0 0.0
    %2091 = vmatpush1.xpose.msra.mxu0 0.0
    %2092 = vmatprep.subr.mxu0 0.0
    %2093 = vmatpush1.xpose.msra.mxu0 0.0
    %2094 = vmatprep.subr.mxu0 0.0
    %2095 = vmatpush1.xpose.msra.mxu0 0.0
    %2096 = vmatprep.subr.mxu0 0.0
    %2097 = vmatpush1.xpose.msra.mxu0 0.0
    %2098 = vmatprep.subr.mxu0 0.0
    %2099 = vmatpush1.xpose.msra.mxu0 0.0
    %2100 = vmatprep.subr.mxu0 0.0
    %2101 = vmatpush1.xpose.msra.mxu0 0.0
    %2102 = vmatprep.subr.mxu0 0.0
    %2103 = vmatpush1.xpose.msra.mxu0 0.0
    %2104 = vmatprep.subr.mxu0 0.0
    %2105 = vmatpush1.xpose.msra.mxu0 0.0
    %2106 = vmatprep.subr.mxu0 0.0
    %2107 = vmatpush1.xpose.msra.mxu0 0.0
    %2108 = vmatprep.subr.mxu0 0.0
    %2109 = vmatpush1.xpose.msra.mxu0 0.0
    %2110 = vmatprep.subr.mxu0 0.0
    %2111 = vmatpush1.xpose.msra.mxu0 0.0
    %2112 = vmatprep.subr.mxu0 0.0
    %2113 = vmatpush1.xpose.msra.mxu0 0.0
    %2114 = vmatprep.subr.mxu0 0.0
    %2115 = vmatpush1.xpose.msra.mxu0 0.0
    %2116 = vmatprep.subr.mxu0 0.0
    %2117 = vmatpush1.xpose.msra.mxu0 0.0
    %2118 = vmatprep.subr.mxu0 0.0
    %2119 = vmatpush1.xpose.msra.mxu0 0.0
    %2120 = vmatprep.subr.mxu0 0.0
    %2121 = vmatpush1.xpose.msra.mxu0 0.0
    %2122 = vmatprep.subr.mxu0 0.0
    %2123 = vmatpush1.xpose.msra.mxu0 0.0
    %2124 = vmatprep.subr.mxu0 0.0
    %2125 = vmatpush1.xpose.msra.mxu0 0.0
    %2126 = vmatprep.subr.mxu0 0.0
    %2127 = vmatpush1.xpose.msra.mxu0 0.0
    %2128 = vmatprep.subr.mxu0 0.0
    %2129 = vmatpush1.xpose.msra.mxu0 0.0
    %2130 = vmatprep.subr.mxu0 0.0
    %2131 = vmatpush1.xpose.msra.mxu0 0.0
    %2132 = vmatprep.mubr.f32.mxu0 0.0
    %2133 = vmatmul.mubr.f32.gmra.mrb[0].mxu0 %v2060
    %v2134 = vpop.f32.mrb[0].mxu0
    %v2135 = vadd.f32 %v225, %v2134
    %v2136 = vpop.f32.mrb[0].mxu0
    %2137 = vmatprep.mubr.f32.mxu0 0.0
    %2138 = vmatmul.mubr.f32.gmra.mrb[0].mxu0 %v2062
    %v2139 = vpop.f32.mrb[0].mxu0
    %v2140 = vadd.f32 %v226, %v2139
    %v2141 = vpop.f32.mrb[0].mxu0
    %2142 = vdwg.mxu0
    %v2143 = vsel %vm426, %v2135, -inf
    %2144 = vmax.xlane.f32.xlu0 %v2143
    %v2145 = vpop.xlane.xlu0 %2144
    %v2146 = vsel %vm426, %v2140, -inf
    %2147 = vmax.xlane.f32.xlu0 %v2146
    %v2148 = vpop.xlane.xlu0 %2147
    %v2149 = vsub.f32 %v2135, %v2145
    %v2150 = vsub.f32 %v2140, %v2148
    %v2151 = vmul.f32 %v2149, 1.442695
    %v2152 = vpow.pop %v2151
    %v2153 = vmul.f32 %v2150, 1.442695
    %v2154 = vpow.pop %v2153
    %v2155 = vsel %vm426, %v2152, 0.0
    %2156 = vadd.xlane.f32.xlu0 %v2155
    %v2157 = vpop.xlane.xlu0 %2156
    %v2158 = vsel %vm426, %v2154, 0.0
    %2159 = vadd.xlane.f32.xlu0 %v2158
    %v2160 = vpop.xlane.xlu0 %2159
    %v2161 = vrcp.pop %v2157
    %v2162 = vrcp.pop %v2160
    %v2163 = vmul.f32 %v2152, %v2161
    %v2164 = vmul.f32 %v2154, %v2162
    %2165 = vrot.lane.b32.xlu0 %v1845, 56
    %v2166 = vpop.permute.xlu0 %2165
    %2167 = vrot.lane.b32.xlu0 %v1850, 56
    %v2168 = vpop.permute.xlu0 %2167
    %v2172 = vsel %vm426, %v2163, 0
    %v2175 = vsel %vm426, %v2164, 0
    %2177 = vmatprep.subr.mxu0 0.0
    %2178 = vmatpush1.msra.mxu0 %v2166
    %2179 = vmatprep.subr.mxu0 0.0
    %2180 = vmatpush1.msra.mxu0 %v2168
    %2181 = vmatprep.subr.mxu0 0.0
    %2182 = vmatpush1.msra.mxu0 0.0
    %2183 = vmatprep.subr.mxu0 0.0
    %2184 = vmatpush1.msra.mxu0 0.0
    %2185 = vmatprep.subr.mxu0 0.0
    %2186 = vmatpush1.msra.mxu0 0.0
    %2187 = vmatprep.subr.mxu0 0.0
    %2188 = vmatpush1.msra.mxu0 0.0
    %2189 = vmatprep.subr.mxu0 0.0
    %2190 = vmatpush1.msra.mxu0 0.0
    %2191 = vmatprep.subr.mxu0 0.0
    %2192 = vmatpush1.msra.mxu0 0.0
    %2193 = vmatprep.subr.mxu0 0.0
    %2194 = vmatpush1.msra.mxu0 0.0
    %2195 = vmatprep.subr.mxu0 0.0
    %2196 = vmatpush1.msra.mxu0 0.0
    %2197 = vmatprep.subr.mxu0 0.0
    %2198 = vmatpush1.msra.mxu0 0.0
    %2199 = vmatprep.subr.mxu0 0.0
    %2200 = vmatpush1.msra.mxu0 0.0
    %2201 = vmatprep.subr.mxu0 0.0
    %2202 = vmatpush1.msra.mxu0 0.0
    %2203 = vmatprep.subr.mxu0 0.0
    %2204 = vmatpush1.msra.mxu0 0.0
    %2205 = vmatprep.subr.mxu0 0.0
    %2206 = vmatpush1.msra.mxu0 0.0
    %2207 = vmatprep.subr.mxu0 0.0
    %2208 = vmatpush1.msra.mxu0 0.0
    %2209 = vmatprep.subr.mxu0 0.0
    %2210 = vmatpush1.msra.mxu0 0.0
    %2211 = vmatprep.subr.mxu0 0.0
    %2212 = vmatpush1.msra.mxu0 0.0
    %2213 = vmatprep.subr.mxu0 0.0
    %2214 = vmatpush1.msra.mxu0 0.0
    %2215 = vmatprep.subr.mxu0 0.0
    %2216 = vmatpush1.msra.mxu0 0.0
    %2217 = vmatprep.subr.mxu0 0.0
    %2218 = vmatpush1.msra.mxu0 0.0
    %2219 = vmatprep.subr.mxu0 0.0
    %2220 = vmatpush1.msra.mxu0 0.0
    %2221 = vmatprep.subr.mxu0 0.0
    %2222 = vmatpush1.msra.mxu0 0.0
    %2223 = vmatprep.subr.mxu0 0.0
    %2224 = vmatpush1.msra.mxu0 0.0
    %2225 = vmatprep.subr.mxu0 0.0
    %2226 = vmatpush1.msra.mxu0 0.0
    %2227 = vmatprep.subr.mxu0 0.0
    %2228 = vmatpush1.msra.mxu0 0.0
    %2229 = vmatprep.subr.mxu0 0.0
    %2230 = vmatpush1.msra.mxu0 0.0
    %2231 = vmatprep.subr.mxu0 0.0
    %2232 = vmatpush1.msra.mxu0 0.0
    %2233 = vmatprep.subr.mxu0 0.0
    %2234 = vmatpush1.msra.mxu0 0.0
    %2235 = vmatprep.subr.mxu0 0.0
    %2236 = vmatpush1.msra.mxu0 0.0
    %2237 = vmatprep.subr.mxu0 0.0
    %2238 = vmatpush1.msra.mxu0 0.0
    %2239 = vmatprep.subr.mxu0 0.0
    %2240 = vmatpush1.msra.mxu0 0.0
    %2241 = vmatprep.mubr.f32.mxu0 0.0
    %2242 = vmatmul.mubr.f32.gmra.mrb[0].mxu0 %v2172
    %v2243 = vpop.f32.mrb[0].mxu0
    %v2244 = vadd.f32 0.0, %v2243
    %v2245 = vpop.f32.mrb[0].mxu0
    %2246 = vmatprep.mubr.f32.mxu0 0.0
    %2247 = vmatmul.mubr.f32.gmra.mrb[0].mxu0 %v2175
    %v2248 = vpop.f32.mrb[0].mxu0
    %v2249 = vadd.f32 0.0, %v2248
    %v2250 = vpop.f32.mrb[0].mxu0
    %2251 = vdwg.mxu0
    %v2252 = vld [vmem:[%s1742 + $0x28] sm:$0xff]
    %v2254 = vsel %vm342, %v2244, 0
    %v2257 = vsel %vm342, %v2249, 0
    %2259 = vmatprep.subr.mxu0 0.0
    %2260 = vmatpush1.msra.mxu0 %v2252
    %2261 = vmatprep.subr.mxu0 0.0
    %2262 = vmatpush1.msra.mxu0 0.0
    %2263 = vmatprep.subr.mxu0 0.0
    %2264 = vmatpush1.msra.mxu0 0.0
    %2265 = vmatprep.subr.mxu0 0.0
    %2266 = vmatpush1.msra.mxu0 0.0
    %2267 = vmatprep.subr.mxu0 0.0
    %2268 = vmatpush1.msra.mxu0 0.0
    %2269 = vmatprep.subr.mxu0 0.0
    %2270 = vmatpush1.msra.mxu0 0.0
    %2271 = vmatprep.subr.mxu0 0.0
    %2272 = vmatpush1.msra.mxu0 0.0
    %2273 = vmatprep.subr.mxu0 0.0
    %2274 = vmatpush1.msra.mxu0 0.0
    %2275 = vmatprep.subr.mxu0 0.0
    %2276 = vmatpush1.msra.mxu0 0.0
    %2277 = vmatprep.subr.mxu0 0.0
    %2278 = vmatpush1.msra.mxu0 0.0
    %2279 = vmatprep.subr.mxu0 0.0
    %2280 = vmatpush1.msra.mxu0 0.0
    %2281 = vmatprep.subr.mxu0 0.0
    %2282 = vmatpush1.msra.mxu0 0.0
    %2283 = vmatprep.subr.mxu0 0.0
    %2284 = vmatpush1.msra.mxu0 0.0
    %2285 = vmatprep.subr.mxu0 0.0
    %2286 = vmatpush1.msra.mxu0 0.0
    %2287 = vmatprep.subr.mxu0 0.0
    %2288 = vmatpush1.msra.mxu0 0.0
    %2289 = vmatprep.subr.mxu0 0.0
    %2290 = vmatpush1.msra.mxu0 0.0
    %2291 = vmatprep.subr.mxu0 0.0
    %2292 = vmatpush1.msra.mxu0 0.0
    %2293 = vmatprep.subr.mxu0 0.0
    %2294 = vmatpush1.msra.mxu0 0.0
    %2295 = vmatprep.subr.mxu0 0.0
    %2296 = vmatpush1.msra.mxu0 0.0
    %2297 = vmatprep.subr.mxu0 0.0
    %2298 = vmatpush1.msra.mxu0 0.0
    %2299 = vmatprep.subr.mxu0 0.0
    %2300 = vmatpush1.msra.mxu0 0.0
    %2301 = vmatprep.subr.mxu0 0.0
    %2302 = vmatpush1.msra.mxu0 0.0
    %2303 = vmatprep.subr.mxu0 0.0
    %2304 = vmatpush1.msra.mxu0 0.0
    %2305 = vmatprep.subr.mxu0 0.0
    %2306 = vmatpush1.msra.mxu0 0.0
    %2307 = vmatprep.subr.mxu0 0.0
    %2308 = vmatpush1.msra.mxu0 0.0
    %2309 = vmatprep.subr.mxu0 0.0
    %2310 = vmatpush1.msra.mxu0 0.0
    %2311 = vmatprep.subr.mxu0 0.0
    %2312 = vmatpush1.msra.mxu0 0.0
    %2313 = vmatprep.subr.mxu0 0.0
    %2314 = vmatpush1.msra.mxu0 0.0
    %2315 = vmatprep.subr.mxu0 0.0
    %2316 = vmatpush1.msra.mxu0 0.0
    %2317 = vmatprep.subr.mxu0 0.0
    %2318 = vmatpush1.msra.mxu0 0.0
    %2319 = vmatprep.subr.mxu0 0.0
    %2320 = vmatpush1.msra.mxu0 0.0
    %2321 = vmatprep.subr.mxu0 0.0
    %2322 = vmatpush1.msra.mxu0 0.0
    %2323 = vmatprep.mubr.f32.mxu0 0.0
    %2324 = vmatmul.mubr.f32.gmra.mrb[0].mxu0 %v2254
    %v2325 = vpop.f32.mrb[0].mxu0
    %v2326 = vadd.f32 0.0, %v2325
    %v2327 = vpop.f32.mrb[0].mxu0
    %2328 = vmatprep.mubr.f32.mxu0 0.0
    %2329 = vmatmul.mubr.f32.gmra.mrb[0].mxu0 %v2257
    %v2330 = vpop.f32.mrb[0].mxu0
    %v2331 = vadd.f32 0.0, %v2330
    %v2332 = vpop.f32.mrb[0].mxu0
    %2333 = vdwg.mxu0
    %v2335 = vsel %vm342, %v2043, 0
    %v2338 = vsel %vm342, %v2048, 0
    %2340 = vmatprep.subr.mxu0 0.0
    %2341 = vmatpush1.msra.mxu0 %v2051
    %2342 = vmatprep.subr.mxu0 0.0
    %2343 = vmatpush1.msra.mxu0 0.0
    %2344 = vmatprep.subr.mxu0 0.0
    %2345 = vmatpush1.msra.mxu0 0.0
    %2346 = vmatprep.subr.mxu0 0.0
    %2347 = vmatpush1.msra.mxu0 0.0
    %2348 = vmatprep.subr.mxu0 0.0
    %2349 = vmatpush1.msra.mxu0 0.0
    %2350 = vmatprep.subr.mxu0 0.0
    %2351 = vmatpush1.msra.mxu0 0.0
    %2352 = vmatprep.subr.mxu0 0.0
    %2353 = vmatpush1.msra.mxu0 0.0
    %2354 = vmatprep.subr.mxu0 0.0
    %2355 = vmatpush1.msra.mxu0 0.0
    %2356 = vmatprep.subr.mxu0 0.0
    %2357 = vmatpush1.msra.mxu0 0.0
    %2358 = vmatprep.subr.mxu0 0.0
    %2359 = vmatpush1.msra.mxu0 0.0
    %2360 = vmatprep.subr.mxu0 0.0
    %2361 = vmatpush1.msra.mxu0 0.0
    %2362 = vmatprep.subr.mxu0 0.0
    %2363 = vmatpush1.msra.mxu0 0.0
    %2364 = vmatprep.subr.mxu0 0.0
    %2365 = vmatpush1.msra.mxu0 0.0
    %2366 = vmatprep.subr.mxu0 0.0
    %2367 = vmatpush1.msra.mxu0 0.0
    %2368 = vmatprep.subr.mxu0 0.0
    %2369 = vmatpush1.msra.mxu0 0.0
    %2370 = vmatprep.subr.mxu0 0.0
    %2371 = vmatpush1.msra.mxu0 0.0
    %2372 = vmatprep.subr.mxu0 0.0
    %2373 = vmatpush1.msra.mxu0 0.0
    %2374 = vmatprep.subr.mxu0 0.0
    %2375 = vmatpush1.msra.mxu0 0.0
    %2376 = vmatprep.subr.mxu0 0.0
    %2377 = vmatpush1.msra.mxu0 0.0
    %2378 = vmatprep.subr.mxu0 0.0
    %2379 = vmatpush1.msra.mxu0 0.0
    %2380 = vmatprep.subr.mxu0 0.0
    %2381 = vmatpush1.msra.mxu0 0.0
    %2382 = vmatprep.subr.mxu0 0.0
    %2383 = vmatpush1.msra.mxu0 0.0
    %2384 = vmatprep.subr.mxu0 0.0
    %2385 = vmatpush1.msra.mxu0 0.0
    %2386 = vmatprep.subr.mxu0 0.0
    %2387 = vmatpush1.msra.mxu0 0.0
    %2388 = vmatprep.subr.mxu0 0.0
    %2389 = vmatpush1.msra.mxu0 0.0
    %2390 = vmatprep.subr.mxu0 0.0
    %2391 = vmatpush1.msra.mxu0 0.0
    %2392 = vmatprep.subr.mxu0 0.0
    %2393 = vmatpush1.msra.mxu0 0.0
    %2394 = vmatprep.subr.mxu0 0.0
    %2395 = vmatpush1.msra.mxu0 0.0
    %2396 = vmatprep.subr.mxu0 0.0
    %2397 = vmatpush1.msra.mxu0 0.0
    %2398 = vmatprep.subr.mxu0 0.0
    %2399 = vmatpush1.msra.mxu0 0.0
    %2400 = vmatprep.subr.mxu0 0.0
    %2401 = vmatpush1.msra.mxu0 0.0
    %2402 = vmatprep.subr.mxu0 0.0
    %2403 = vmatpush1.msra.mxu0 0.0
    %2404 = vmatprep.mubr.f32.mxu0 0.0
    %2405 = vmatmul.mubr.f32.gmra.mrb[0].mxu0 %v2335
    %v2406 = vpop.f32.mrb[0].mxu0
    %v2407 = vadd.f32 %v2326, %v2406
    %v2408 = vpop.f32.mrb[0].mxu0
    %2409 = vmatprep.mubr.f32.mxu0 0.0
    %2410 = vmatmul.mubr.f32.gmra.mrb[0].mxu0 %v2338
    %v2411 = vpop.f32.mrb[0].mxu0
    %v2412 = vadd.f32 %v2331, %v2411
    %v2413 = vpop.f32.mrb[0].mxu0
    %2414 = vdwg.mxu0
    %2415 = vrot.lane.b32.xlu0 %v1845, 112
    %v2416 = vpop.permute.xlu0 %2415
    %2417 = vrot.lane.b32.xlu0 %v1850, 112
    %v2418 = vpop.permute.xlu0 %2417
    %2419 = vrot.lane.b32.xlu0 %v1845, 80
    %v2420 = vpop.permute.xlu0 %2419
    %2421 = vrot.lane.b32.xlu0 %v1850, 80
    %v2422 = vpop.permute.xlu0 %2421
    %v2423 = vsel %vm342, %v2416, 0
    %v2425 = vsel %vm342, %v2418, 0
    %v2427 = vsel %vm342, %v2420, 0
    %v2429 = vsel %vm342, %v2422, 0
    %2431 = vmatprep.subr.mxu0 0.0
    %2432 = vmatpush1.xpose.msra.mxu0 %v2427
    %2433 = vmatprep.subr.mxu0 0.0
    %2434 = vmatpush1.xpose.msra.mxu0 %v2429
    %2435 = vmatprep.subr.mxu0 0.0
    %2436 = vmatpush1.xpose.msra.mxu0 0.0
    %2437 = vmatprep.subr.mxu0 0.0
    %2438 = vmatpush1.xpose.msra.mxu0 0.0
    %2439 = vmatprep.subr.mxu0 0.0
    %2440 = vmatpush1.xpose.msra.mxu0 0.0
    %2441 = vmatprep.subr.mxu0 0.0
    %2442 = vmatpush1.xpose.msra.mxu0 0.0
    %2443 = vmatprep.subr.mxu0 0.0
    %2444 = vmatpush1.xpose.msra.mxu0 0.0
    %2445 = vmatprep.subr.mxu0 0.0
    %2446 = vmatpush1.xpose.msra.mxu0 0.0
    %2447 = vmatprep.subr.mxu0 0.0
    %2448 = vmatpush1.xpose.msra.mxu0 0.0
    %2449 = vmatprep.subr.mxu0 0.0
    %2450 = vmatpush1.xpose.msra.mxu0 0.0
    %2451 = vmatprep.subr.mxu0 0.0
    %2452 = vmatpush1.xpose.msra.mxu0 0.0
    %2453 = vmatprep.subr.mxu0 0.0
    %2454 = vmatpush1.xpose.msra.mxu0 0.0
    %2455 = vmatprep.subr.mxu0 0.0
    %2456 = vmatpush1.xpose.msra.mxu0 0.0
    %2457 = vmatprep.subr.mxu0 0.0
    %2458 = vmatpush1.xpose.msra.mxu0 0.0
    %2459 = vmatprep.subr.mxu0 0.0
    %2460 = vmatpush1.xpose.msra.mxu0 0.0
    %2461 = vmatprep.subr.mxu0 0.0
    %2462 = vmatpush1.xpose.msra.mxu0 0.0
    %2463 = vmatprep.subr.mxu0 0.0
    %2464 = vmatpush1.xpose.msra.mxu0 0.0
    %2465 = vmatprep.subr.mxu0 0.0
    %2466 = vmatpush1.xpose.msra.mxu0 0.0
    %2467 = vmatprep.subr.mxu0 0.0
    %2468 = vmatpush1.xpose.msra.mxu0 0.0
    %2469 = vmatprep.subr.mxu0 0.0
    %2470 = vmatpush1.xpose.msra.mxu0 0.0
    %2471 = vmatprep.subr.mxu0 0.0
    %2472 = vmatpush1.xpose.msra.mxu0 0.0
    %2473 = vmatprep.subr.mxu0 0.0
    %2474 = vmatpush1.xpose.msra.mxu0 0.0
    %2475 = vmatprep.subr.mxu0 0.0
    %2476 = vmatpush1.xpose.msra.mxu0 0.0
    %2477 = vmatprep.subr.mxu0 0.0
    %2478 = vmatpush1.xpose.msra.mxu0 0.0
    %2479 = vmatprep.subr.mxu0 0.0
    %2480 = vmatpush1.xpose.msra.mxu0 0.0
    %2481 = vmatprep.subr.mxu0 0.0
    %2482 = vmatpush1.xpose.msra.mxu0 0.0
    %2483 = vmatprep.subr.mxu0 0.0
    %2484 = vmatpush1.xpose.msra.mxu0 0.0
    %2485 = vmatprep.subr.mxu0 0.0
    %2486 = vmatpush1.xpose.msra.mxu0 0.0
    %2487 = vmatprep.subr.mxu0 0.0
    %2488 = vmatpush1.xpose.msra.mxu0 0.0
    %2489 = vmatprep.subr.mxu0 0.0
    %2490 = vmatpush1.xpose.msra.mxu0 0.0
    %2491 = vmatprep.subr.mxu0 0.0
    %2492 = vmatpush1.xpose.msra.mxu0 0.0
    %2493 = vmatprep.subr.mxu0 0.0
    %2494 = vmatpush1.xpose.msra.mxu0 0.0
    %2495 = vmatprep.mubr.f32.mxu0 0.0
    %2496 = vmatmul.mubr.f32.gmra.mrb[0].mxu0 %v2423
    %v2497 = vpop.f32.mrb[0].mxu0
    %v2498 = vadd.f32 %v225, %v2497
    %v2499 = vpop.f32.mrb[0].mxu0
    %2500 = vmatprep.mubr.f32.mxu0 0.0
    %2501 = vmatmul.mubr.f32.gmra.mrb[0].mxu0 %v2425
    %v2502 = vpop.f32.mrb[0].mxu0
    %v2503 = vadd.f32 %v226, %v2502
    %v2504 = vpop.f32.mrb[0].mxu0
    %2505 = vdwg.mxu0
    %v2506 = vsel %vm426, %v2498, -inf
    %2507 = vmax.xlane.f32.xlu0 %v2506
    %v2508 = vpop.xlane.xlu0 %2507
    %v2509 = vsel %vm426, %v2503, -inf
    %2510 = vmax.xlane.f32.xlu0 %v2509
    %v2511 = vpop.xlane.xlu0 %2510
    %v2512 = vsub.f32 %v2498, %v2508
    %v2513 = vsub.f32 %v2503, %v2511
    %v2514 = vmul.f32 %v2512, 1.442695
    %v2515 = vpow.pop %v2514
    %v2516 = vmul.f32 %v2513, 1.442695
    %v2517 = vpow.pop %v2516
    %v2518 = vsel %vm426, %v2515, 0.0
    %2519 = vadd.xlane.f32.xlu0 %v2518
    %v2520 = vpop.xlane.xlu0 %2519
    %v2521 = vsel %vm426, %v2517, 0.0
    %2522 = vadd.xlane.f32.xlu0 %v2521
    %v2523 = vpop.xlane.xlu0 %2522
    %v2524 = vrcp.pop %v2520
    %v2525 = vrcp.pop %v2523
    %v2526 = vmul.f32 %v2515, %v2524
    %v2527 = vmul.f32 %v2517, %v2525
    %2528 = vrot.lane.b32.xlu0 %v1845, 48
    %v2529 = vpop.permute.xlu0 %2528
    %2530 = vrot.lane.b32.xlu0 %v1850, 48
    %v2531 = vpop.permute.xlu0 %2530
    %v2535 = vsel %vm426, %v2526, 0
    %v2538 = vsel %vm426, %v2527, 0
    %2540 = vmatprep.subr.mxu0 0.0
    %2541 = vmatpush1.msra.mxu0 %v2529
    %2542 = vmatprep.subr.mxu0 0.0
    %2543 = vmatpush1.msra.mxu0 %v2531
    %2544 = vmatprep.subr.mxu0 0.0
    %2545 = vmatpush1.msra.mxu0 0.0
    %2546 = vmatprep.subr.mxu0 0.0
    %2547 = vmatpush1.msra.mxu0 0.0
    %2548 = vmatprep.subr.mxu0 0.0
    %2549 = vmatpush1.msra.mxu0 0.0
    %2550 = vmatprep.subr.mxu0 0.0
    %2551 = vmatpush1.msra.mxu0 0.0
    %2552 = vmatprep.subr.mxu0 0.0
    %2553 = vmatpush1.msra.mxu0 0.0
    %2554 = vmatprep.subr.mxu0 0.0
    %2555 = vmatpush1.msra.mxu0 0.0
    %2556 = vmatprep.subr.mxu0 0.0
    %2557 = vmatpush1.msra.mxu0 0.0
    %2558 = vmatprep.subr.mxu0 0.0
    %2559 = vmatpush1.msra.mxu0 0.0
    %2560 = vmatprep.subr.mxu0 0.0
    %2561 = vmatpush1.msra.mxu0 0.0
    %2562 = vmatprep.subr.mxu0 0.0
    %2563 = vmatpush1.msra.mxu0 0.0
    %2564 = vmatprep.subr.mxu0 0.0
    %2565 = vmatpush1.msra.mxu0 0.0
    %2566 = vmatprep.subr.mxu0 0.0
    %2567 = vmatpush1.msra.mxu0 0.0
    %2568 = vmatprep.subr.mxu0 0.0
    %2569 = vmatpush1.msra.mxu0 0.0
    %2570 = vmatprep.subr.mxu0 0.0
    %2571 = vmatpush1.msra.mxu0 0.0
    %2572 = vmatprep.subr.mxu0 0.0
    %2573 = vmatpush1.msra.mxu0 0.0
    %2574 = vmatprep.subr.mxu0 0.0
    %2575 = vmatpush1.msra.mxu0 0.0
    %2576 = vmatprep.subr.mxu0 0.0
    %2577 = vmatpush1.msra.mxu0 0.0
    %2578 = vmatprep.subr.mxu0 0.0
    %2579 = vmatpush1.msra.mxu0 0.0
    %2580 = vmatprep.subr.mxu0 0.0
    %2581 = vmatpush1.msra.mxu0 0.0
    %2582 = vmatprep.subr.mxu0 0.0
    %2583 = vmatpush1.msra.mxu0 0.0
    %2584 = vmatprep.subr.mxu0 0.0
    %2585 = vmatpush1.msra.mxu0 0.0
    %2586 = vmatprep.subr.mxu0 0.0
    %2587 = vmatpush1.msra.mxu0 0.0
    %2588 = vmatprep.subr.mxu0 0.0
    %2589 = vmatpush1.msra.mxu0 0.0
    %2590 = vmatprep.subr.mxu0 0.0
    %2591 = vmatpush1.msra.mxu0 0.0
    %2592 = vmatprep.subr.mxu0 0.0
    %2593 = vmatpush1.msra.mxu0 0.0
    %2594 = vmatprep.subr.mxu0 0.0
    %2595 = vmatpush1.msra.mxu0 0.0
    %2596 = vmatprep.subr.mxu0 0.0
    %2597 = vmatpush1.msra.mxu0 0.0
    %2598 = vmatprep.subr.mxu0 0.0
    %2599 = vmatpush1.msra.mxu0 0.0
    %2600 = vmatprep.subr.mxu0 0.0
    %2601 = vmatpush1.msra.mxu0 0.0
    %2602 = vmatprep.subr.mxu0 0.0
    %2603 = vmatpush1.msra.mxu0 0.0
    %2604 = vmatprep.mubr.f32.mxu0 0.0
    %2605 = vmatmul.mubr.f32.gmra.mrb[0].mxu0 %v2535
    %v2606 = vpop.f32.mrb[0].mxu0
    %v2607 = vadd.f32 0.0, %v2606
    %v2608 = vpop.f32.mrb[0].mxu0
    %2609 = vmatprep.mubr.f32.mxu0 0.0
    %2610 = vmatmul.mubr.f32.gmra.mrb[0].mxu0 %v2538
    %v2611 = vpop.f32.mrb[0].mxu0
    %v2612 = vadd.f32 0.0, %v2611
    %v2613 = vpop.f32.mrb[0].mxu0
    %2614 = vdwg.mxu0
    %v2615 = vld [vmem:[%s1742 + $0x30] sm:$0xff]
    %v2617 = vsel %vm342, %v2607, 0
    %v2620 = vsel %vm342, %v2612, 0
    %2622 = vmatprep.subr.mxu0 0.0
    %2623 = vmatpush1.msra.mxu0 %v2615
    %2624 = vmatprep.subr.mxu0 0.0
    %2625 = vmatpush1.msra.mxu0 0.0
    %2626 = vmatprep.subr.mxu0 0.0
    %2627 = vmatpush1.msra.mxu0 0.0
    %2628 = vmatprep.subr.mxu0 0.0
    %2629 = vmatpush1.msra.mxu0 0.0
    %2630 = vmatprep.subr.mxu0 0.0
    %2631 = vmatpush1.msra.mxu0 0.0
    %2632 = vmatprep.subr.mxu0 0.0
    %2633 = vmatpush1.msra.mxu0 0.0
    %2634 = vmatprep.subr.mxu0 0.0
    %2635 = vmatpush1.msra.mxu0 0.0
    %2636 = vmatprep.subr.mxu0 0.0
    %2637 = vmatpush1.msra.mxu0 0.0
    %2638 = vmatprep.subr.mxu0 0.0
    %2639 = vmatpush1.msra.mxu0 0.0
    %2640 = vmatprep.subr.mxu0 0.0
    %2641 = vmatpush1.msra.mxu0 0.0
    %2642 = vmatprep.subr.mxu0 0.0
    %2643 = vmatpush1.msra.mxu0 0.0
    %2644 = vmatprep.subr.mxu0 0.0
    %2645 = vmatpush1.msra.mxu0 0.0
    %2646 = vmatprep.subr.mxu0 0.0
    %2647 = vmatpush1.msra.mxu0 0.0
    %2648 = vmatprep.subr.mxu0 0.0
    %2649 = vmatpush1.msra.mxu0 0.0
    %2650 = vmatprep.subr.mxu0 0.0
    %2651 = vmatpush1.msra.mxu0 0.0
    %2652 = vmatprep.subr.mxu0 0.0
    %2653 = vmatpush1.msra.mxu0 0.0
    %2654 = vmatprep.subr.mxu0 0.0
    %2655 = vmatpush1.msra.mxu0 0.0
    %2656 = vmatprep.subr.mxu0 0.0
    %2657 = vmatpush1.msra.mxu0 0.0
    %2658 = vmatprep.subr.mxu0 0.0
    %2659 = vmatpush1.msra.mxu0 0.0
    %2660 = vmatprep.subr.mxu0 0.0
    %2661 = vmatpush1.msra.mxu0 0.0
    %2662 = vmatprep.subr.mxu0 0.0
    %2663 = vmatpush1.msra.mxu0 0.0
    %2664 = vmatprep.subr.mxu0 0.0
    %2665 = vmatpush1.msra.mxu0 0.0
    %2666 = vmatprep.subr.mxu0 0.0
    %2667 = vmatpush1.msra.mxu0 0.0
    %2668 = vmatprep.subr.mxu0 0.0
    %2669 = vmatpush1.msra.mxu0 0.0
    %2670 = vmatprep.subr.mxu0 0.0
    %2671 = vmatpush1.msra.mxu0 0.0
    %2672 = vmatprep.subr.mxu0 0.0
    %2673 = vmatpush1.msra.mxu0 0.0
    %2674 = vmatprep.subr.mxu0 0.0
    %2675 = vmatpush1.msra.mxu0 0.0
    %2676 = vmatprep.subr.mxu0 0.0
    %2677 = vmatpush1.msra.mxu0 0.0
    %2678 = vmatprep.subr.mxu0 0.0
    %2679 = vmatpush1.msra.mxu0 0.0
    %2680 = vmatprep.subr.mxu0 0.0
    %2681 = vmatpush1.msra.mxu0 0.0
    %2682 = vmatprep.subr.mxu0 0.0
    %2683 = vmatpush1.msra.mxu0 0.0
    %2684 = vmatprep.subr.mxu0 0.0
    %2685 = vmatpush1.msra.mxu0 0.0
    %2686 = vmatprep.mubr.f32.mxu0 0.0
    %2687 = vmatmul.mubr.f32.gmra.mrb[0].mxu0 %v2617
    %v2688 = vpop.f32.mrb[0].mxu0
    %v2689 = vadd.f32 0.0, %v2688
    %v2690 = vpop.f32.mrb[0].mxu0
    %2691 = vmatprep.mubr.f32.mxu0 0.0
    %2692 = vmatmul.mubr.f32.gmra.mrb[0].mxu0 %v2620
    %v2693 = vpop.f32.mrb[0].mxu0
    %v2694 = vadd.f32 0.0, %v2693
    %v2695 = vpop.f32.mrb[0].mxu0
    %2696 = vdwg.mxu0
    %v2697 = vadd.f32 %v2407, %v2689
    %v2698 = vadd.f32 %v2412, %v2694
    %2699 = vrot.lane.b32.xlu0 %v1845, 104
    %v2700 = vpop.permute.xlu0 %2699
    %2701 = vrot.lane.b32.xlu0 %v1850, 104
    %v2702 = vpop.permute.xlu0 %2701
    %2703 = vrot.lane.b32.xlu0 %v1845, 72
    %v2704 = vpop.permute.xlu0 %2703
    %2705 = vrot.lane.b32.xlu0 %v1850, 72
    %v2706 = vpop.permute.xlu0 %2705
    %v2707 = vsel %vm342, %v2700, 0
    %v2709 = vsel %vm342, %v2702, 0
    %v2711 = vsel %vm342, %v2704, 0
    %v2713 = vsel %vm342, %v2706, 0
    %2715 = vmatprep.subr.mxu0 0.0
    %2716 = vmatpush1.xpose.msra.mxu0 %v2711
    %2717 = vmatprep.subr.mxu0 0.0
    %2718 = vmatpush1.xpose.msra.mxu0 %v2713
    %2719 = vmatprep.subr.mxu0 0.0
    %2720 = vmatpush1.xpose.msra.mxu0 0.0
    %2721 = vmatprep.subr.mxu0 0.0
    %2722 = vmatpush1.xpose.msra.mxu0 0.0
    %2723 = vmatprep.subr.mxu0 0.0
    %2724 = vmatpush1.xpose.msra.mxu0 0.0
    %2725 = vmatprep.subr.mxu0 0.0
    %2726 = vmatpush1.xpose.msra.mxu0 0.0
    %2727 = vmatprep.subr.mxu0 0.0
    %2728 = vmatpush1.xpose.msra.mxu0 0.0
    %2729 = vmatprep.subr.mxu0 0.0
    %2730 = vmatpush1.xpose.msra.mxu0 0.0
    %2731 = vmatprep.subr.mxu0 0.0
    %2732 = vmatpush1.xpose.msra.mxu0 0.0
    %2733 = vmatprep.subr.mxu0 0.0
    %2734 = vmatpush1.xpose.msra.mxu0 0.0
    %2735 = vmatprep.subr.mxu0 0.0
    %2736 = vmatpush1.xpose.msra.mxu0 0.0
    %2737 = vmatprep.subr.mxu0 0.0
    %2738 = vmatpush1.xpose.msra.mxu0 0.0
    %2739 = vmatprep.subr.mxu0 0.0
    %2740 = vmatpush1.xpose.msra.mxu0 0.0
    %2741 = vmatprep.subr.mxu0 0.0
    %2742 = vmatpush1.xpose.msra.mxu0 0.0
    %2743 = vmatprep.subr.mxu0 0.0
    %2744 = vmatpush1.xpose.msra.mxu0 0.0
    %2745 = vmatprep.subr.mxu0 0.0
    %2746 = vmatpush1.xpose.msra.mxu0 0.0
    %2747 = vmatprep.subr.mxu0 0.0
    %2748 = vmatpush1.xpose.msra.mxu0 0.0
    %2749 = vmatprep.subr.mxu0 0.0
    %2750 = vmatpush1.xpose.msra.mxu0 0.0
    %2751 = vmatprep.subr.mxu0 0.0
    %2752 = vmatpush1.xpose.msra.mxu0 0.0
    %2753 = vmatprep.subr.mxu0 0.0
    %2754 = vmatpush1.xpose.msra.mxu0 0.0
    %2755 = vmatprep.subr.mxu0 0.0
    %2756 = vmatpush1.xpose.msra.mxu0 0.0
    %2757 = vmatprep.subr.mxu0 0.0
    %2758 = vmatpush1.xpose.msra.mxu0 0.0
    %2759 = vmatprep.subr.mxu0 0.0
    %2760 = vmatpush1.xpose.msra.mxu0 0.0
    %2761 = vmatprep.subr.mxu0 0.0
    %2762 = vmatpush1.xpose.msra.mxu0 0.0
    %2763 = vmatprep.subr.mxu0 0.0
    %2764 = vmatpush1.xpose.msra.mxu0 0.0
    %2765 = vmatprep.subr.mxu0 0.0
    %2766 = vmatpush1.xpose.msra.mxu0 0.0
    %2767 = vmatprep.subr.mxu0 0.0
    %2768 = vmatpush1.xpose.msra.mxu0 0.0
    %2769 = vmatprep.subr.mxu0 0.0
    %2770 = vmatpush1.xpose.msra.mxu0 0.0
    %2771 = vmatprep.subr.mxu0 0.0
    %2772 = vmatpush1.xpose.msra.mxu0 0.0
    %2773 = vmatprep.subr.mxu0 0.0
    %2774 = vmatpush1.xpose.msra.mxu0 0.0
    %2775 = vmatprep.subr.mxu0 0.0
    %2776 = vmatpush1.xpose.msra.mxu0 0.0
    %2777 = vmatprep.subr.mxu0 0.0
    %2778 = vmatpush1.xpose.msra.mxu0 0.0
    %2779 = vmatprep.mubr.f32.mxu0 0.0
    %2780 = vmatmul.mubr.f32.gmra.mrb[0].mxu0 %v2707
    %v2781 = vpop.f32.mrb[0].mxu0
    %v2782 = vadd.f32 %v225, %v2781
    %v2783 = vpop.f32.mrb[0].mxu0
    %2784 = vmatprep.mubr.f32.mxu0 0.0
    %2785 = vmatmul.mubr.f32.gmra.mrb[0].mxu0 %v2709
    %v2786 = vpop.f32.mrb[0].mxu0
    %v2787 = vadd.f32 %v226, %v2786
    %v2788 = vpop.f32.mrb[0].mxu0
    %2789 = vdwg.mxu0
    %v2790 = vsel %vm426, %v2782, -inf
    %2791 = vmax.xlane.f32.xlu0 %v2790
    %v2792 = vpop.xlane.xlu0 %2791
    %v2793 = vsel %vm426, %v2787, -inf
    %2794 = vmax.xlane.f32.xlu0 %v2793
    %v2795 = vpop.xlane.xlu0 %2794
    %v2796 = vsub.f32 %v2782, %v2792
    %v2797 = vsub.f32 %v2787, %v2795
    %v2798 = vmul.f32 %v2796, 1.442695
    %v2799 = vpow.pop %v2798
    %v2800 = vmul.f32 %v2797, 1.442695
    %v2801 = vpow.pop %v2800
    %v2802 = vsel %vm426, %v2799, 0.0
    %2803 = vadd.xlane.f32.xlu0 %v2802
    %v2804 = vpop.xlane.xlu0 %2803
    %v2805 = vsel %vm426, %v2801, 0.0
    %2806 = vadd.xlane.f32.xlu0 %v2805
    %v2807 = vpop.xlane.xlu0 %2806
    %v2808 = vrcp.pop %v2804
    %v2809 = vrcp.pop %v2807
    %v2810 = vmul.f32 %v2799, %v2808
    %v2811 = vmul.f32 %v2801, %v2809
    %2812 = vrot.lane.b32.xlu0 %v1845, 40
    %v2813 = vpop.permute.xlu0 %2812
    %2814 = vrot.lane.b32.xlu0 %v1850, 40
    %v2815 = vpop.permute.xlu0 %2814
    %v2819 = vsel %vm426, %v2810, 0
    %v2822 = vsel %vm426, %v2811, 0
    %2824 = vmatprep.subr.mxu0 0.0
    %2825 = vmatpush1.msra.mxu0 %v2813
    %2826 = vmatprep.subr.mxu0 0.0
    %2827 = vmatpush1.msra.mxu0 %v2815
    %2828 = vmatprep.subr.mxu0 0.0
    %2829 = vmatpush1.msra.mxu0 0.0
    %2830 = vmatprep.subr.mxu0 0.0
    %2831 = vmatpush1.msra.mxu0 0.0
    %2832 = vmatprep.subr.mxu0 0.0
    %2833 = vmatpush1.msra.mxu0 0.0
    %2834 = vmatprep.subr.mxu0 0.0
    %2835 = vmatpush1.msra.mxu0 0.0
    %2836 = vmatprep.subr.mxu0 0.0
    %2837 = vmatpush1.msra.mxu0 0.0
    %2838 = vmatprep.subr.mxu0 0.0
    %2839 = vmatpush1.msra.mxu0 0.0
    %2840 = vmatprep.subr.mxu0 0.0
    %2841 = vmatpush1.msra.mxu0 0.0
    %2842 = vmatprep.subr.mxu0 0.0
    %2843 = vmatpush1.msra.mxu0 0.0
    %2844 = vmatprep.subr.mxu0 0.0
    %2845 = vmatpush1.msra.mxu0 0.0
    %2846 = vmatprep.subr.mxu0 0.0
    %2847 = vmatpush1.msra.mxu0 0.0
    %2848 = vmatprep.subr.mxu0 0.0
    %2849 = vmatpush1.msra.mxu0 0.0
    %2850 = vmatprep.subr.mxu0 0.0
    %2851 = vmatpush1.msra.mxu0 0.0
    %2852 = vmatprep.subr.mxu0 0.0
    %2853 = vmatpush1.msra.mxu0 0.0
    %2854 = vmatprep.subr.mxu0 0.0
    %2855 = vmatpush1.msra.mxu0 0.0
    %2856 = vmatprep.subr.mxu0 0.0
    %2857 = vmatpush1.msra.mxu0 0.0
    %2858 = vmatprep.subr.mxu0 0.0
    %2859 = vmatpush1.msra.mxu0 0.0
    %2860 = vmatprep.subr.mxu0 0.0
    %2861 = vmatpush1.msra.mxu0 0.0
    %2862 = vmatprep.subr.mxu0 0.0
    %2863 = vmatpush1.msra.mxu0 0.0
    %2864 = vmatprep.subr.mxu0 0.0
    %2865 = vmatpush1.msra.mxu0 0.0
    %2866 = vmatprep.subr.mxu0 0.0
    %2867 = vmatpush1.msra.mxu0 0.0
    %2868 = vmatprep.subr.mxu0 0.0
    %2869 = vmatpush1.msra.mxu0 0.0
    %2870 = vmatprep.subr.mxu0 0.0
    %2871 = vmatpush1.msra.mxu0 0.0
    %2872 = vmatprep.subr.mxu0 0.0
    %2873 = vmatpush1.msra.mxu0 0.0
    %2874 = vmatprep.subr.mxu0 0.0
    %2875 = vmatpush1.msra.mxu0 0.0
    %2876 = vmatprep.subr.mxu0 0.0
    %2877 = vmatpush1.msra.mxu0 0.0
    %2878 = vmatprep.subr.mxu0 0.0
    %2879 = vmatpush1.msra.mxu0 0.0
    %2880 = vmatprep.subr.mxu0 0.0
    %2881 = vmatpush1.msra.mxu0 0.0
    %2882 = vmatprep.subr.mxu0 0.0
    %2883 = vmatpush1.msra.mxu0 0.0
    %2884 = vmatprep.subr.mxu0 0.0
    %2885 = vmatpush1.msra.mxu0 0.0
    %2886 = vmatprep.subr.mxu0 0.0
    %2887 = vmatpush1.msra.mxu0 0.0
    %2888 = vmatprep.mubr.f32.mxu0 0.0
    %2889 = vmatmul.mubr.f32.gmra.mrb[0].mxu0 %v2819
    %v2890 = vpop.f32.mrb[0].mxu0
    %v2891 = vadd.f32 0.0, %v2890
    %v2892 = vpop.f32.mrb[0].mxu0
    %2893 = vmatprep.mubr.f32.mxu0 0.0
    %2894 = vmatmul.mubr.f32.gmra.mrb[0].mxu0 %v2822
    %v2895 = vpop.f32.mrb[0].mxu0
    %v2896 = vadd.f32 0.0, %v2895
    %v2897 = vpop.f32.mrb[0].mxu0
    %2898 = vdwg.mxu0
    %v2899 = vld [vmem:[%s1742 + $0x38] sm:$0xff]
    %v2901 = vsel %vm342, %v2891, 0
    %v2904 = vsel %vm342, %v2896, 0
    %2906 = vmatprep.subr.mxu0 0.0
    %2907 = vmatpush1.msra.mxu0 %v2899
    %2908 = vmatprep.subr.mxu0 0.0
    %2909 = vmatpush1.msra.mxu0 0.0
    %2910 = vmatprep.subr.mxu0 0.0
    %2911 = vmatpush1.msra.mxu0 0.0
    %2912 = vmatprep.subr.mxu0 0.0
    %2913 = vmatpush1.msra.mxu0 0.0
    %2914 = vmatprep.subr.mxu0 0.0
    %2915 = vmatpush1.msra.mxu0 0.0
    %2916 = vmatprep.subr.mxu0 0.0
    %2917 = vmatpush1.msra.mxu0 0.0
    %2918 = vmatprep.subr.mxu0 0.0
    %2919 = vmatpush1.msra.mxu0 0.0
    %2920 = vmatprep.subr.mxu0 0.0
    %2921 = vmatpush1.msra.mxu0 0.0
    %2922 = vmatprep.subr.mxu0 0.0
    %2923 = vmatpush1.msra.mxu0 0.0
    %2924 = vmatprep.subr.mxu0 0.0
    %2925 = vmatpush1.msra.mxu0 0.0
    %2926 = vmatprep.subr.mxu0 0.0
    %2927 = vmatpush1.msra.mxu0 0.0
    %2928 = vmatprep.subr.mxu0 0.0
    %2929 = vmatpush1.msra.mxu0 0.0
    %2930 = vmatprep.subr.mxu0 0.0
    %2931 = vmatpush1.msra.mxu0 0.0
    %2932 = vmatprep.subr.mxu0 0.0
    %2933 = vmatpush1.msra.mxu0 0.0
    %2934 = vmatprep.subr.mxu0 0.0
    %2935 = vmatpush1.msra.mxu0 0.0
    %2936 = vmatprep.subr.mxu0 0.0
    %2937 = vmatpush1.msra.mxu0 0.0
    %2938 = vmatprep.subr.mxu0 0.0
    %2939 = vmatpush1.msra.mxu0 0.0
    %2940 = vmatprep.subr.mxu0 0.0
    %2941 = vmatpush1.msra.mxu0 0.0
    %2942 = vmatprep.subr.mxu0 0.0
    %2943 = vmatpush1.msra.mxu0 0.0
    %2944 = vmatprep.subr.mxu0 0.0
    %2945 = vmatpush1.msra.mxu0 0.0
    %2946 = vmatprep.subr.mxu0 0.0
    %2947 = vmatpush1.msra.mxu0 0.0
    %2948 = vmatprep.subr.mxu0 0.0
    %2949 = vmatpush1.msra.mxu0 0.0
    %2950 = vmatprep.subr.mxu0 0.0
    %2951 = vmatpush1.msra.mxu0 0.0
    %2952 = vmatprep.subr.mxu0 0.0
    %2953 = vmatpush1.msra.mxu0 0.0
    %2954 = vmatprep.subr.mxu0 0.0
    %2955 = vmatpush1.msra.mxu0 0.0
    %2956 = vmatprep.subr.mxu0 0.0
    %2957 = vmatpush1.msra.mxu0 0.0
    %2958 = vmatprep.subr.mxu0 0.0
    %2959 = vmatpush1.msra.mxu0 0.0
    %2960 = vmatprep.subr.mxu0 0.0
    %2961 = vmatpush1.msra.mxu0 0.0
    %2962 = vmatprep.subr.mxu0 0.0
    %2963 = vmatpush1.msra.mxu0 0.0
    %2964 = vmatprep.subr.mxu0 0.0
    %2965 = vmatpush1.msra.mxu0 0.0
    %2966 = vmatprep.subr.mxu0 0.0
    %2967 = vmatpush1.msra.mxu0 0.0
    %2968 = vmatprep.subr.mxu0 0.0
    %2969 = vmatpush1.msra.mxu0 0.0
    %2970 = vmatprep.mubr.f32.mxu0 0.0
    %2971 = vmatmul.mubr.f32.gmra.mrb[0].mxu0 %v2901
    %v2972 = vpop.f32.mrb[0].mxu0
    %v2973 = vadd.f32 0.0, %v2972
    %v2974 = vpop.f32.mrb[0].mxu0
    %2975 = vmatprep.mubr.f32.mxu0 0.0
    %2976 = vmatmul.mubr.f32.gmra.mrb[0].mxu0 %v2904
    %v2977 = vpop.f32.mrb[0].mxu0
    %v2978 = vadd.f32 0.0, %v2977
    %v2979 = vpop.f32.mrb[0].mxu0
    %2980 = vdwg.mxu0
    %v2981 = vadd.f32 %v2697, %v2973
    %v2982 = vadd.f32 %v2698, %v2978
    %v2983 = vlaneseq
    %v2984 = vshrl.u32 %v2983, 7
    %v2985 = vsub.s32 0, %v2984
    %v2986 = vrot.slane %v1761, %v2985
    %v2987 = vadd.f32 %v2981, %v2986
    %v2988 = vadd.f32 %v2982, %v2986
    %v2989 = vadd.f32 %v1740, %v2987
    %v2990 = vadd.f32 %v1741, %v2988
    %v2991 = vsel %vm174, %v2989, 0.0
    %2992 = vadd.xlane.f32.xlu0 %v2991
    %v2993 = vpop.xlane.xlu0 %2992
    %v2994 = vsel %vm174, %v2990, 0.0
    %2995 = vadd.xlane.f32.xlu0 %v2994
    %v2996 = vpop.xlane.xlu0 %2995
    %v2997 = vmul.f32 %v2993, %v181
    %v2998 = vmul.f32 %v2996, %v181
    %v2999 = vsub.f32 %v2989, %v2997
    %v3000 = vsub.f32 %v2990, %v2998
    %v3001 = vmul.f32 %v2999, %v2999
    %v3002 = vmul.f32 %v3000, %v3000
    %v3003 = vsel %vm174, %v3001, 0.0
    %3004 = vadd.xlane.f32.xlu0 %v3003
    %v3005 = vpop.xlane.xlu0 %3004
    %v3006 = vsel %vm174, %v3002, 0.0
    %3007 = vadd.xlane.f32.xlu0 %v3006
    %v3008 = vpop.xlane.xlu0 %3007
    %v3009 = vmul.f32 %v3005, %v181
    %v3010 = vmul.f32 %v3008, %v181
    %v3011 = vadd.f32 %v3009, 1e-12
    %v3012 = vadd.f32 %v3010, 1e-12
    %v3013 = vrsqrt.pop %v3011
    %v3014 = vrsqrt.pop %v3012
    %v3015 = vmul.f32 %v2999, %v3013
    %v3016 = vmul.f32 %v3000, %v3014
    %v3017 = vlaneseq
    %v3018 = vshrl.u32 %v3017, 7
    %v3019 = vsub.s32 0, %v3018
    %v3020 = vrot.slane %v1762, %v3019
    %v3021 = vmul.f32 %v3015, %v3020
    %v3022 = vmul.f32 %v3016, %v3020
    %v3023 = vlaneseq
    %v3024 = vshrl.u32 %v3023, 7
    %v3025 = vsub.s32 0, %v3024
    %v3026 = vrot.slane %v1763, %v3025
    %v3027 = vadd.f32 %v3021, %v3026
    %v3028 = vadd.f32 %v3022, %v3026
    %v3029 = vlaneseq
    %v3030 = vshrl.u32 %v3029, 7
    %v3031 = vsub.s32 0, %v3030
    %v3032 = vrot.slane %v1764, %v3031
    %v3034 = vsel %vm174, %v3027, 0
    %v3037 = vsel %vm174, %v3028, 0
    %3039 = vmatprep.subr.mxu0 0.0
    %3040 = vmatpush1.msra.mxu0 %v1747
    %3041 = vmatprep.subr.mxu0 0.0
    %3042 = vmatpush1.msra.mxu0 %v1748
    %3043 = vmatprep.subr.mxu0 0.0
    %3044 = vmatpush1.msra.mxu0 %v1749
    %3045 = vmatprep.subr.mxu0 0.0
    %3046 = vmatpush1.msra.mxu0 %v1750
    %3047 = vmatprep.subr.mxu0 0.0
    %3048 = vmatpush1.msra.mxu0 0.0
    %3049 = vmatprep.subr.mxu0 0.0
    %3050 = vmatpush1.msra.mxu0 0.0
    %3051 = vmatprep.subr.mxu0 0.0
    %3052 = vmatpush1.msra.mxu0 0.0
    %3053 = vmatprep.subr.mxu0 0.0
    %3054 = vmatpush1.msra.mxu0 0.0
    %3055 = vmatprep.subr.mxu0 0.0
    %3056 = vmatpush1.msra.mxu0 0.0
    %3057 = vmatprep.subr.mxu0 0.0
    %3058 = vmatpush1.msra.mxu0 0.0
    %3059 = vmatprep.subr.mxu0 0.0
    %3060 = vmatpush1.msra.mxu0 0.0
    %3061 = vmatprep.subr.mxu0 0.0
    %3062 = vmatpush1.msra.mxu0 0.0
    %3063 = vmatprep.subr.mxu0 0.0
    %3064 = vmatpush1.msra.mxu0 0.0
    %3065 = vmatprep.subr.mxu0 0.0
    %3066 = vmatpush1.msra.mxu0 0.0
    %3067 = vmatprep.subr.mxu0 0.0
    %3068 = vmatpush1.msra.mxu0 0.0
    %3069 = vmatprep.subr.mxu0 0.0
    %3070 = vmatpush1.msra.mxu0 0.0
    %3071 = vmatprep.subr.mxu0 0.0
    %3072 = vmatpush1.msra.mxu0 0.0
    %3073 = vmatprep.subr.mxu0 0.0
    %3074 = vmatpush1.msra.mxu0 0.0
    %3075 = vmatprep.subr.mxu0 0.0
    %3076 = vmatpush1.msra.mxu0 0.0
    %3077 = vmatprep.subr.mxu0 0.0
    %3078 = vmatpush1.msra.mxu0 0.0
    %3079 = vmatprep.subr.mxu0 0.0
    %3080 = vmatpush1.msra.mxu0 0.0
    %3081 = vmatprep.subr.mxu0 0.0
    %3082 = vmatpush1.msra.mxu0 0.0
    %3083 = vmatprep.subr.mxu0 0.0
    %3084 = vmatpush1.msra.mxu0 0.0
    %3085 = vmatprep.subr.mxu0 0.0
    %3086 = vmatpush1.msra.mxu0 0.0
    %3087 = vmatprep.subr.mxu0 0.0
    %3088 = vmatpush1.msra.mxu0 0.0
    %3089 = vmatprep.subr.mxu0 0.0
    %3090 = vmatpush1.msra.mxu0 0.0
    %3091 = vmatprep.subr.mxu0 0.0
    %3092 = vmatpush1.msra.mxu0 0.0
    %3093 = vmatprep.subr.mxu0 0.0
    %3094 = vmatpush1.msra.mxu0 0.0
    %3095 = vmatprep.subr.mxu0 0.0
    %3096 = vmatpush1.msra.mxu0 0.0
    %3097 = vmatprep.subr.mxu0 0.0
    %3098 = vmatpush1.msra.mxu0 0.0
    %3099 = vmatprep.subr.mxu0 0.0
    %3100 = vmatpush1.msra.mxu0 0.0
    %3101 = vmatprep.subr.mxu0 0.0
    %3102 = vmatpush1.msra.mxu0 0.0
    %3103 = vmatprep.mubr.f32.mxu0 0.0
    %3104 = vmatmul.mubr.f32.gmra.mrb[0].mxu0 %v3034
    %v3105 = vpop.f32.mrb[0].mxu0
    %v3106 = vadd.f32 %v3032, %v3105
    %v3107 = vpop.f32.mrb[0].mxu0
    %3108 = vmatprep.mubr.f32.mxu0 0.0
    %3109 = vmatmul.mubr.f32.gmra.mrb[0].mxu0 %v3037
    %v3110 = vpop.f32.mrb[0].mxu0
    %v3111 = vadd.f32 %v3032, %v3110
    %v3112 = vpop.f32.mrb[0].mxu0
    %3113 = vdwg.mxu0
    %v3114 = vmul.f32 %v3106, 0.5
    %v3115 = vmul.f32 %v3111, 0.5
    %v3116 = vmul.f32 %v3106, 0.044715
    %v3117 = vmul.f32 %v3111, 0.044715
    %v3118 = vmul.f32 %v3116, %v3106
    %v3119 = vmul.f32 %v3117, %v3111
    %v3120 = vmul.f32 %v3118, %v3106
    %v3121 = vmul.f32 %v3119, %v3111
    %v3122 = vadd.f32 %v3106, %v3120
    %v3123 = vadd.f32 %v3111, %v3121
    %v3124 = vmul.f32 %v3122, 0.7978846
    %v3125 = vmul.f32 %v3123, 0.7978846
    %v3126 = vtanh.pop %v3124
    %v3127 = vtanh.pop %v3125
    %v3128 = vadd.f32 %v3126, 1.0
    %v3129 = vadd.f32 %v3127, 1.0
    %v3130 = vmul.f32 %v3114, %v3128
    %v3131 = vmul.f32 %v3115, %v3129
    %v3132 = vlaneseq
    %v3133 = vshrl.u32 %v3132, 7
    %v3134 = vsub.s32 0, %v3133
    %v3135 = vrot.slane %v1765, %v3134
    %v3137 = vsel %vm90, %v3130, 0
    %v3140 = vsel %vm90, %v3131, 0
    %3142 = vmatprep.subr.mxu0 0.0
    %3143 = vmatpush1.msra.mxu0 %v1751
    %3144 = vmatprep.subr.mxu0 0.0
    %3145 = vmatpush1.msra.mxu0 %v1752
    %3146 = vmatprep.subr.mxu0 0.0
    %3147 = vmatpush1.msra.mxu0 %v1753
    %3148 = vmatprep.subr.mxu0 0.0
    %3149 = vmatpush1.msra.mxu0 %v1754
    %3150 = vmatprep.subr.mxu0 0.0
    %3151 = vmatpush1.msra.mxu0 %v1755
    %3152 = vmatprep.subr.mxu0 0.0
    %3153 = vmatpush1.msra.mxu0 %v1756
    %3154 = vmatprep.subr.mxu0 0.0
    %3155 = vmatpush1.msra.mxu0 %v1757
    %3156 = vmatprep.subr.mxu0 0.0
    %3157 = vmatpush1.msra.mxu0 %v1758
    %3158 = vmatprep.subr.mxu0 0.0
    %3159 = vmatpush1.msra.mxu0 0.0
    %3160 = vmatprep.subr.mxu0 0.0
    %3161 = vmatpush1.msra.mxu0 0.0
    %3162 = vmatprep.subr.mxu0 0.0
    %3163 = vmatpush1.msra.mxu0 0.0
    %3164 = vmatprep.subr.mxu0 0.0
    %3165 = vmatpush1.msra.mxu0 0.0
    %3166 = vmatprep.subr.mxu0 0.0
    %3167 = vmatpush1.msra.mxu0 0.0
    %3168 = vmatprep.subr.mxu0 0.0
    %3169 = vmatpush1.msra.mxu0 0.0
    %3170 = vmatprep.subr.mxu0 0.0
    %3171 = vmatpush1.msra.mxu0 0.0
    %3172 = vmatprep.subr.mxu0 0.0
    %3173 = vmatpush1.msra.mxu0 0.0
    %3174 = vmatprep.subr.mxu0 0.0
    %3175 = vmatpush1.msra.mxu0 0.0
    %3176 = vmatprep.subr.mxu0 0.0
    %3177 = vmatpush1.msra.mxu0 0.0
    %3178 = vmatprep.subr.mxu0 0.0
    %3179 = vmatpush1.msra.mxu0 0.0
    %3180 = vmatprep.subr.mxu0 0.0
    %3181 = vmatpush1.msra.mxu0 0.0
    %3182 = vmatprep.subr.mxu0 0.0
    %3183 = vmatpush1.msra.mxu0 0.0
    %3184 = vmatprep.subr.mxu0 0.0
    %3185 = vmatpush1.msra.mxu0 0.0
    %3186 = vmatprep.subr.mxu0 0.0
    %3187 = vmatpush1.msra.mxu0 0.0
    %3188 = vmatprep.subr.mxu0 0.0
    %3189 = vmatpush1.msra.mxu0 0.0
    %3190 = vmatprep.subr.mxu0 0.0
    %3191 = vmatpush1.msra.mxu0 0.0
    %3192 = vmatprep.subr.mxu0 0.0
    %3193 = vmatpush1.msra.mxu0 0.0
    %3194 = vmatprep.subr.mxu0 0.0
    %3195 = vmatpush1.msra.mxu0 0.0
    %3196 = vmatprep.subr.mxu0 0.0
    %3197 = vmatpush1.msra.mxu0 0.0
    %3198 = vmatprep.subr.mxu0 0.0
    %3199 = vmatpush1.msra.mxu0 0.0
    %3200 = vmatprep.subr.mxu0 0.0
    %3201 = vmatpush1.msra.mxu0 0.0
    %3202 = vmatprep.subr.mxu0 0.0
    %3203 = vmatpush1.msra.mxu0 0.0
    %3204 = vmatprep.subr.mxu0 0.0
    %3205 = vmatpush1.msra.mxu0 0.0
    %3206 = vmatprep.mubr.f32.mxu0 0.0
    %3207 = vmatmul.mubr.f32.gmra.mrb[0].mxu0 %v3137
    %v3208 = vpop.f32.mrb[0].mxu0
    %v3209 = vadd.f32 %v3135, %v3208
    %v3210 = vpop.f32.mrb[0].mxu0
    %3211 = vmatprep.mubr.f32.mxu0 0.0
    %3212 = vmatmul.mubr.f32.gmra.mrb[0].mxu0 %v3140
    %v3213 = vpop.f32.mrb[0].mxu0
    %v3214 = vadd.f32 %v3135, %v3213
    %v3215 = vpop.f32.mrb[0].mxu0
    %3216 = vdwg.mxu0
    %v3217 = vadd.f32 %v3027, %v3209
    %v3218 = vadd.f32 %v3028, %v3214
    %v3219 = vsel %vm174, %v3217, 0.0
    %3220 = vadd.xlane.f32.xlu0 %v3219
    %v3221 = vpop.xlane.xlu0 %3220
    %v3222 = vsel %vm174, %v3218, 0.0
    %3223 = vadd.xlane.f32.xlu0 %v3222
    %v3224 = vpop.xlane.xlu0 %3223
    %v3225 = vmul.f32 %v3221, %v181
    %v3226 = vmul.f32 %v3224, %v181
    %v3227 = vsub.f32 %v3217, %v3225
    %v3228 = vsub.f32 %v3218, %v3226
    %v3229 = vmul.f32 %v3227, %v3227
    %v3230 = vmul.f32 %v3228, %v3228
    %v3231 = vsel %vm174, %v3229, 0.0
    %3232 = vadd.xlane.f32.xlu0 %v3231
    %v3233 = vpop.xlane.xlu0 %3232
    %v3234 = vsel %vm174, %v3230, 0.0
    %3235 = vadd.xlane.f32.xlu0 %v3234
    %v3236 = vpop.xlane.xlu0 %3235
    %v3237 = vmul.f32 %v3233, %v181
    %v3238 = vmul.f32 %v3236, %v181
    %v3239 = vadd.f32 %v3237, 1e-12
    %v3240 = vadd.f32 %v3238, 1e-12
    %v3241 = vrsqrt.pop %v3239
    %v3242 = vrsqrt.pop %v3240
    %v3243 = vmul.f32 %v3227, %v3241
    %v3244 = vmul.f32 %v3228, %v3242
    %v3245 = vlaneseq
    %v3246 = vshrl.u32 %v3245, 7
    %v3247 = vsub.s32 0, %v3246
    %v3248 = vrot.slane %v1766, %v3247
    %v3249 = vmul.f32 %v3243, %v3248
    %v3250 = vmul.f32 %v3244, %v3248
    %v3251 = vlaneseq
    %v3252 = vshrl.u32 %v3251, 7
    %v3253 = vsub.s32 0, %v3252
    %v3254 = vrot.slane %v1767, %v3253
    %v3255 = vadd.f32 %v3249, %v3254
    %v3256 = vadd.f32 %v3250, %v3254
    %s3257 = scalar_lea.vmem [#allocation4], 320
    %v3258 = vld [vmem:[%s3257] sm:$0xff]
    %v3259 = vld [vmem:[%s3257 + $0x8] sm:$0xff]
    %v3260 = vld [vmem:[%s3257 + $0x10] sm:$0xff]
    %v3261 = vld [vmem:[%s3257 + $0x18] sm:$0xff]
    %v3262 = vld [vmem:[%s3257 + $0x40] sm:$0xff]
    %v3263 = vld [vmem:[%s3257 + $0x48] sm:$0xff]
    %v3264 = vld [vmem:[%s3257 + $0x50] sm:$0xff]
    %v3265 = vld [vmem:[%s3257 + $0x58] sm:$0xff]
    %v3266 = vld [vmem:[%s3257 + $0x60] sm:$0xff]
    %v3267 = vld [vmem:[%s3257 + $0x68] sm:$0xff]
    %v3268 = vld [vmem:[%s3257 + $0x70] sm:$0xff]
    %v3269 = vld [vmem:[%s3257 + $0x78] sm:$0xff]
    %v3270 = vld [vmem:[%s3257 + $0x80] sm:$0xff]
    %v3271 = vld [vmem:[%s3257 + $0x88] sm:$0xff]
    %v3272 = vld [vmem:[%s3257 + $0x90] sm:$0xff]
    %v3273 = vld [vmem:[%s3257 + $0x98] sm:$0xff]
    %s3274 = scalar_lea.vmem %s4, 16
    %v3275 = vld [vmem:[%s3274] sm:$0x1]
    %v3276 = vld [vmem:[%s3274 + $0x1] sm:$0x1]
    %v3277 = vld [vmem:[%s3274 + $0x2] sm:$0x1]
    %v3278 = vld [vmem:[%s3274 + $0x3] sm:$0x1]
    %v3279 = vld [vmem:[%s3274 + $0x4] sm:$0x1]
    %v3280 = vld [vmem:[%s3274 + $0x5] sm:$0x1]
    %v3281 = vld [vmem:[%s3274 + $0x6] sm:$0x1]
    %v3282 = vld [vmem:[%s3274 + $0x7] sm:$0x1]
    %v3283 = vlaneseq
    %v3284 = vshrl.u32 %v3283, 7
    %v3285 = vsub.s32 0, %v3284
    %v3286 = vrot.slane %v3275, %v3285
    %v3288 = vsel %vm174, %v3255, 0
    %v3291 = vsel %vm174, %v3256, 0
    %3293 = vmatprep.subr.mxu0 0.0
    %3294 = vmatpush1.msra.mxu0 %v3258
    %3295 = vmatprep.subr.mxu0 0.0
    %3296 = vmatpush1.msra.mxu0 %v3259
    %3297 = vmatprep.subr.mxu0 0.0
    %3298 = vmatpush1.msra.mxu0 %v3260
    %3299 = vmatprep.subr.mxu0 0.0
    %3300 = vmatpush1.msra.mxu0 %v3261
    %3301 = vmatprep.subr.mxu0 0.0
    %3302 = vmatpush1.msra.mxu0 0.0
    %3303 = vmatprep.subr.mxu0 0.0
    %3304 = vmatpush1.msra.mxu0 0.0
    %3305 = vmatprep.subr.mxu0 0.0
    %3306 = vmatpush1.msra.mxu0 0.0
    %3307 = vmatprep.subr.mxu0 0.0
    %3308 = vmatpush1.msra.mxu0 0.0
    %3309 = vmatprep.subr.mxu0 0.0
    %3310 = vmatpush1.msra.mxu0 0.0
    %3311 = vmatprep.subr.mxu0 0.0
    %3312 = vmatpush1.msra.mxu0 0.0
    %3313 = vmatprep.subr.mxu0 0.0
    %3314 = vmatpush1.msra.mxu0 0.0
    %3315 = vmatprep.subr.mxu0 0.0
    %3316 = vmatpush1.msra.mxu0 0.0
    %3317 = vmatprep.subr.mxu0 0.0
    %3318 = vmatpush1.msra.mxu0 0.0
    %3319 = vmatprep.subr.mxu0 0.0
    %3320 = vmatpush1.msra.mxu0 0.0
    %3321 = vmatprep.subr.mxu0 0.0
    %3322 = vmatpush1.msra.mxu0 0.0
    %3323 = vmatprep.subr.mxu0 0.0
    %3324 = vmatpush1.msra.mxu0 0.0
    %3325 = vmatprep.subr.mxu0 0.0
    %3326 = vmatpush1.msra.mxu0 0.0
    %3327 = vmatprep.subr.mxu0 0.0
    %3328 = vmatpush1.msra.mxu0 0.0
    %3329 = vmatprep.subr.mxu0 0.0
    %3330 = vmatpush1.msra.mxu0 0.0
    %3331 = vmatprep.subr.mxu0 0.0
    %3332 = vmatpush1.msra.mxu0 0.0
    %3333 = vmatprep.subr.mxu0 0.0
    %3334 = vmatpush1.msra.mxu0 0.0
    %3335 = vmatprep.subr.mxu0 0.0
    %3336 = vmatpush1.msra.mxu0 0.0
    %3337 = vmatprep.subr.mxu0 0.0
    %3338 = vmatpush1.msra.mxu0 0.0
    %3339 = vmatprep.subr.mxu0 0.0
    %3340 = vmatpush1.msra.mxu0 0.0
    %3341 = vmatprep.subr.mxu0 0.0
    %3342 = vmatpush1.msra.mxu0 0.0
    %3343 = vmatprep.subr.mxu0 0.0
    %3344 = vmatpush1.msra.mxu0 0.0
    %3345 = vmatprep.subr.mxu0 0.0
    %3346 = vmatpush1.msra.mxu0 0.0
    %3347 = vmatprep.subr.mxu0 0.0
    %3348 = vmatpush1.msra.mxu0 0.0
    %3349 = vmatprep.subr.mxu0 0.0
    %3350 = vmatpush1.msra.mxu0 0.0
    %3351 = vmatprep.subr.mxu0 0.0
    %3352 = vmatpush1.msra.mxu0 0.0
    %3353 = vmatprep.subr.mxu0 0.0
    %3354 = vmatpush1.msra.mxu0 0.0
    %3355 = vmatprep.subr.mxu0 0.0
    %3356 = vmatpush1.msra.mxu0 0.0
    %3357 = vmatprep.mubr.f32.mxu0 0.0
    %3358 = vmatmul.mubr.f32.gmra.mrb[0].mxu0 %v3288
    %v3359 = vpop.f32.mrb[0].mxu0
    %v3360 = vadd.f32 %v3286, %v3359
    %v3361 = vpop.f32.mrb[0].mxu0
    %3362 = vmatprep.mubr.f32.mxu0 0.0
    %3363 = vmatmul.mubr.f32.gmra.mrb[0].mxu0 %v3291
    %v3364 = vpop.f32.mrb[0].mxu0
    %v3365 = vadd.f32 %v3286, %v3364
    %v3366 = vpop.f32.mrb[0].mxu0
    %3367 = vdwg.mxu0
    %3370 = vrot.lane.b32.xlu0 %v3360, 96
    %v3371 = vpop.permute.xlu0 %3370
    %3372 = vrot.lane.b32.xlu0 %v3365, 96
    %v3373 = vpop.permute.xlu0 %3372
    %v3374 = vsel %vm342, %v3360, 0
    %v3376 = vsel %vm342, %v3365, 0
    %v3378 = vsel %vm342, %v3371, 0
    %v3380 = vsel %vm342, %v3373, 0
    %3382 = vmatprep.subr.mxu0 0.0
    %3383 = vmatpush1.xpose.msra.mxu0 %v3378
    %3384 = vmatprep.subr.mxu0 0.0
    %3385 = vmatpush1.xpose.msra.mxu0 %v3380
    %3386 = vmatprep.subr.mxu0 0.0
    %3387 = vmatpush1.xpose.msra.mxu0 0.0
    %3388 = vmatprep.subr.mxu0 0.0
    %3389 = vmatpush1.xpose.msra.mxu0 0.0
    %3390 = vmatprep.subr.mxu0 0.0
    %3391 = vmatpush1.xpose.msra.mxu0 0.0
    %3392 = vmatprep.subr.mxu0 0.0
    %3393 = vmatpush1.xpose.msra.mxu0 0.0
    %3394 = vmatprep.subr.mxu0 0.0
    %3395 = vmatpush1.xpose.msra.mxu0 0.0
    %3396 = vmatprep.subr.mxu0 0.0
    %3397 = vmatpush1.xpose.msra.mxu0 0.0
    %3398 = vmatprep.subr.mxu0 0.0
    %3399 = vmatpush1.xpose.msra.mxu0 0.0
    %3400 = vmatprep.subr.mxu0 0.0
    %3401 = vmatpush1.xpose.msra.mxu0 0.0
    %3402 = vmatprep.subr.mxu0 0.0
    %3403 = vmatpush1.xpose.msra.mxu0 0.0
    %3404 = vmatprep.subr.mxu0 0.0
    %3405 = vmatpush1.xpose.msra.mxu0 0.0
    %3406 = vmatprep.subr.mxu0 0.0
    %3407 = vmatpush1.xpose.msra.mxu0 0.0
    %3408 = vmatprep.subr.mxu0 0.0
    %3409 = vmatpush1.xpose.msra.mxu0 0.0
    %3410 = vmatprep.subr.mxu0 0.0
    %3411 = vmatpush1.xpose.msra.mxu0 0.0
    %3412 = vmatprep.subr.mxu0 0.0
    %3413 = vmatpush1.xpose.msra.mxu0 0.0
    %3414 = vmatprep.subr.mxu0 0.0
    %3415 = vmatpush1.xpose.msra.mxu0 0.0
    %3416 = vmatprep.subr.mxu0 0.0
    %3417 = vmatpush1.xpose.msra.mxu0 0.0
    %3418 = vmatprep.subr.mxu0 0.0
    %3419 = vmatpush1.xpose.msra.mxu0 0.0
    %3420 = vmatprep.subr.mxu0 0.0
    %3421 = vmatpush1.xpose.msra.mxu0 0.0
    %3422 = vmatprep.subr.mxu0 0.0
    %3423 = vmatpush1.xpose.msra.mxu0 0.0
    %3424 = vmatprep.subr.mxu0 0.0
    %3425 = vmatpush1.xpose.msra.mxu0 0.0
    %3426 = vmatprep.subr.mxu0 0.0
    %3427 = vmatpush1.xpose.msra.mxu0 0.0
    %3428 = vmatprep.subr.mxu0 0.0
    %3429 = vmatpush1.xpose.msra.mxu0 0.0
    %3430 = vmatprep.subr.mxu0 0.0
    %3431 = vmatpush1.xpose.msra.mxu0 0.0
    %3432 = vmatprep.subr.mxu0 0.0
    %3433 = vmatpush1.xpose.msra.mxu0 0.0
    %3434 = vmatprep.subr.mxu0 0.0
    %3435 = vmatpush1.xpose.msra.mxu0 0.0
    %3436 = vmatprep.subr.mxu0 0.0
    %3437 = vmatpush1.xpose.msra.mxu0 0.0
    %3438 = vmatprep.subr.mxu0 0.0
    %3439 = vmatpush1.xpose.msra.mxu0 0.0
    %3440 = vmatprep.subr.mxu0 0.0
    %3441 = vmatpush1.xpose.msra.mxu0 0.0
    %3442 = vmatprep.subr.mxu0 0.0
    %3443 = vmatpush1.xpose.msra.mxu0 0.0
    %3444 = vmatprep.subr.mxu0 0.0
    %3445 = vmatpush1.xpose.msra.mxu0 0.0
    %3446 = vmatprep.mubr.f32.mxu0 0.0
    %3447 = vmatmul.mubr.f32.gmra.mrb[0].mxu0 %v3374
    %v3448 = vpop.f32.mrb[0].mxu0
    %v3449 = vadd.f32 %v225, %v3448
    %v3450 = vpop.f32.mrb[0].mxu0
    %3451 = vmatprep.mubr.f32.mxu0 0.0
    %3452 = vmatmul.mubr.f32.gmra.mrb[0].mxu0 %v3376
    %v3453 = vpop.f32.mrb[0].mxu0
    %v3454 = vadd.f32 %v226, %v3453
    %v3455 = vpop.f32.mrb[0].mxu0
    %3456 = vdwg.mxu0
    %v3457 = vsel %vm426, %v3449, -inf
    %3458 = vmax.xlane.f32.xlu0 %v3457
    %v3459 = vpop.xlane.xlu0 %3458
    %v3460 = vsel %vm426, %v3454, -inf
    %3461 = vmax.xlane.f32.xlu0 %v3460
    %v3462 = vpop.xlane.xlu0 %3461
    %v3463 = vsub.f32 %v3449, %v3459
    %v3464 = vsub.f32 %v3454, %v3462
    %v3465 = vmul.f32 %v3463, 1.442695
    %v3466 = vpow.pop %v3465
    %v3467 = vmul.f32 %v3464, 1.442695
    %v3468 = vpow.pop %v3467
    %v3469 = vsel %vm426, %v3466, 0.0
    %3470 = vadd.xlane.f32.xlu0 %v3469
    %v3471 = vpop.xlane.xlu0 %3470
    %v3472 = vsel %vm426, %v3468, 0.0
    %3473 = vadd.xlane.f32.xlu0 %v3472
    %v3474 = vpop.xlane.xlu0 %3473
    %v3475 = vrcp.pop %v3471
    %v3476 = vrcp.pop %v3474
    %v3477 = vmul.f32 %v3466, %v3475
    %v3478 = vmul.f32 %v3468, %v3476
    %3479 = vrot.lane.b32.xlu0 %v3360, 64
    %v3480 = vpop.permute.xlu0 %3479
    %3481 = vrot.lane.b32.xlu0 %v3365, 64
    %v3482 = vpop.permute.xlu0 %3481
    %v3486 = vsel %vm426, %v3477, 0
    %v3489 = vsel %vm426, %v3478, 0
    %3491 = vmatprep.subr.mxu0 0.0
    %3492 = vmatpush1.msra.mxu0 %v3480
    %3493 = vmatprep.subr.mxu0 0.0
    %3494 = vmatpush1.msra.mxu0 %v3482
    %3495 = vmatprep.subr.mxu0 0.0
    %3496 = vmatpush1.msra.mxu0 0.0
    %3497 = vmatprep.subr.mxu0 0.0
    %3498 = vmatpush1.msra.mxu0 0.0
    %3499 = vmatprep.subr.mxu0 0.0
    %3500 = vmatpush1.msra.mxu0 0.0
    %3501 = vmatprep.subr.mxu0 0.0
    %3502 = vmatpush1.msra.mxu0 0.0
    %3503 = vmatprep.subr.mxu0 0.0
    %3504 = vmatpush1.msra.mxu0 0.0
    %3505 = vmatprep.subr.mxu0 0.0
    %3506 = vmatpush1.msra.mxu0 0.0
    %3507 = vmatprep.subr.mxu0 0.0
    %3508 = vmatpush1.msra.mxu0 0.0
    %3509 = vmatprep.subr.mxu0 0.0
    %3510 = vmatpush1.msra.mxu0 0.0
    %3511 = vmatprep.subr.mxu0 0.0
    %3512 = vmatpush1.msra.mxu0 0.0
    %3513 = vmatprep.subr.mxu0 0.0
    %3514 = vmatpush1.msra.mxu0 0.0
    %3515 = vmatprep.subr.mxu0 0.0
    %3516 = vmatpush1.msra.mxu0 0.0
    %3517 = vmatprep.subr.mxu0 0.0
    %3518 = vmatpush1.msra.mxu0 0.0
    %3519 = vmatprep.subr.mxu0 0.0
    %3520 = vmatpush1.msra.mxu0 0.0
    %3521 = vmatprep.subr.mxu0 0.0
    %3522 = vmatpush1.msra.mxu0 0.0
    %3523 = vmatprep.subr.mxu0 0.0
    %3524 = vmatpush1.msra.mxu0 0.0
    %3525 = vmatprep.subr.mxu0 0.0
    %3526 = vmatpush1.msra.mxu0 0.0
    %3527 = vmatprep.subr.mxu0 0.0
    %3528 = vmatpush1.msra.mxu0 0.0
    %3529 = vmatprep.subr.mxu0 0.0
    %3530 = vmatpush1.msra.mxu0 0.0
    %3531 = vmatprep.subr.mxu0 0.0
    %3532 = vmatpush1.msra.mxu0 0.0
    %3533 = vmatprep.subr.mxu0 0.0
    %3534 = vmatpush1.msra.mxu0 0.0
    %3535 = vmatprep.subr.mxu0 0.0
    %3536 = vmatpush1.msra.mxu0 0.0
    %3537 = vmatprep.subr.mxu0 0.0
    %3538 = vmatpush1.msra.mxu0 0.0
    %3539 = vmatprep.subr.mxu0 0.0
    %3540 = vmatpush1.msra.mxu0 0.0
    %3541 = vmatprep.subr.mxu0 0.0
    %3542 = vmatpush1.msra.mxu0 0.0
    %3543 = vmatprep.subr.mxu0 0.0
    %3544 = vmatpush1.msra.mxu0 0.0
    %3545 = vmatprep.subr.mxu0 0.0
    %3546 = vmatpush1.msra.mxu0 0.0
    %3547 = vmatprep.subr.mxu0 0.0
    %3548 = vmatpush1.msra.mxu0 0.0
    %3549 = vmatprep.subr.mxu0 0.0
    %3550 = vmatpush1.msra.mxu0 0.0
    %3551 = vmatprep.subr.mxu0 0.0
    %3552 = vmatpush1.msra.mxu0 0.0
    %3553 = vmatprep.subr.mxu0 0.0
    %3554 = vmatpush1.msra.mxu0 0.0
    %3555 = vmatprep.mubr.f32.mxu0 0.0
    %3556 = vmatmul.mubr.f32.gmra.mrb[0].mxu0 %v3486
    %v3557 = vpop.f32.mrb[0].mxu0
    %v3558 = vadd.f32 0.0, %v3557
    %v3559 = vpop.f32.mrb[0].mxu0
    %3560 = vmatprep.mubr.f32.mxu0 0.0
    %3561 = vmatmul.mubr.f32.gmra.mrb[0].mxu0 %v3489
    %v3562 = vpop.f32.mrb[0].mxu0
    %v3563 = vadd.f32 0.0, %v3562
    %v3564 = vpop.f32.mrb[0].mxu0
    %3565 = vdwg.mxu0
    %v3566 = vld [vmem:[%s3257 + $0x20] sm:$0xff]
    %3567 = vrot.lane.b32.xlu0 %v3360, 120
    %v3568 = vpop.permute.xlu0 %3567
    %3569 = vrot.lane.b32.xlu0 %v3365, 120
    %v3570 = vpop.permute.xlu0 %3569
    %3571 = vrot.lane.b32.xlu0 %v3360, 88
    %v3572 = vpop.permute.xlu0 %3571
    %3573 = vrot.lane.b32.xlu0 %v3365, 88
    %v3574 = vpop.permute.xlu0 %3573
    %v3575 = vsel %vm342, %v3568, 0
    %v3577 = vsel %vm342, %v3570, 0
    %v3579 = vsel %vm342, %v3572, 0
    %v3581 = vsel %vm342, %v3574, 0
    %3583 = vmatprep.subr.mxu0 0.0
    %3584 = vmatpush1.xpose.msra.mxu0 %v3579
    %3585 = vmatprep.subr.mxu0 0.0
    %3586 = vmatpush1.xpose.msra.mxu0 %v3581
    %3587 = vmatprep.subr.mxu0 0.0
    %3588 = vmatpush1.xpose.msra.mxu0 0.0
    %3589 = vmatprep.subr.mxu0 0.0
    %3590 = vmatpush1.xpose.msra.mxu0 0.0
    %3591 = vmatprep.subr.mxu0 0.0
    %3592 = vmatpush1.xpose.msra.mxu0 0.0
    %3593 = vmatprep.subr.mxu0 0.0
    %3594 = vmatpush1.xpose.msra.mxu0 0.0
    %3595 = vmatprep.subr.mxu0 0.0
    %3596 = vmatpush1.xpose.msra.mxu0 0.0
    %3597 = vmatprep.subr.mxu0 0.0
    %3598 = vmatpush1.xpose.msra.mxu0 0.0
    %3599 = vmatprep.subr.mxu0 0.0
    %3600 = vmatpush1.xpose.msra.mxu0 0.0
    %3601 = vmatprep.subr.mxu0 0.0
    %3602 = vmatpush1.xpose.msra.mxu0 0.0
    %3603 = vmatprep.subr.mxu0 0.0
    %3604 = vmatpush1.xpose.msra.mxu0 0.0
    %3605 = vmatprep.subr.mxu0 0.0
    %3606 = vmatpush1.xpose.msra.mxu0 0.0
    %3607 = vmatprep.subr.mxu0 0.0
    %3608 = vmatpush1.xpose.msra.mxu0 0.0
    %3609 = vmatprep.subr.mxu0 0.0
    %3610 = vmatpush1.xpose.msra.mxu0 0.0
    %3611 = vmatprep.subr.mxu0 0.0
    %3612 = vmatpush1.xpose.msra.mxu0 0.0
    %3613 = vmatprep.subr.mxu0 0.0
    %3614 = vmatpush1.xpose.msra.mxu0 0.0
    %3615 = vmatprep.subr.mxu0 0.0
    %3616 = vmatpush1.xpose.msra.mxu0 0.0
    %3617 = vmatprep.subr.mxu0 0.0
    %3618 = vmatpush1.xpose.msra.mxu0 0.0
    %3619 = vmatprep.subr.mxu0 0.0
    %3620 = vmatpush1.xpose.msra.mxu0 0.0
    %3621 = vmatprep.subr.mxu0 0.0
    %3622 = vmatpush1.xpose.msra.mxu0 0.0
    %3623 = vmatprep.subr.mxu0 0.0
    %3624 = vmatpush1.xpose.msra.mxu0 0.0
    %3625 = vmatprep.subr.mxu0 0.0
    %3626 = vmatpush1.xpose.msra.mxu0 0.0
    %3627 = vmatprep.subr.mxu0 0.0
    %3628 = vmatpush1.xpose.msra.mxu0 0.0
    %3629 = vmatprep.subr.mxu0 0.0
    %3630 = vmatpush1.xpose.msra.mxu0 0.0
    %3631 = vmatprep.subr.mxu0 0.0
    %3632 = vmatpush1.xpose.msra.mxu0 0.0
    %3633 = vmatprep.subr.mxu0 0.0
    %3634 = vmatpush1.xpose.msra.mxu0 0.0
    %3635 = vmatprep.subr.mxu0 0.0
    %3636 = vmatpush1.xpose.msra.mxu0 0.0
    %3637 = vmatprep.subr.mxu0 0.0
    %3638 = vmatpush1.xpose.msra.mxu0 0.0
    %3639 = vmatprep.subr.mxu0 0.0
    %3640 = vmatpush1.xpose.msra.mxu0 0.0
    %3641 = vmatprep.subr.mxu0 0.0
    %3642 = vmatpush1.xpose.msra.mxu0 0.0
    %3643 = vmatprep.subr.mxu0 0.0
    %3644 = vmatpush1.xpose.msra.mxu0 0.0
    %3645 = vmatprep.subr.mxu0 0.0
    %3646 = vmatpush1.xpose.msra.mxu0 0.0
    %3647 = vmatprep.mubr.f32.mxu0 0.0
    %3648 = vmatmul.mubr.f32.gmra.mrb[0].mxu0 %v3575
    %v3649 = vpop.f32.mrb[0].mxu0
    %v3650 = vadd.f32 %v225, %v3649
    %v3651 = vpop.f32.mrb[0].mxu0
    %3652 = vmatprep.mubr.f32.mxu0 0.0
    %3653 = vmatmul.mubr.f32.gmra.mrb[0].mxu0 %v3577
    %v3654 = vpop.f32.mrb[0].mxu0
    %v3655 = vadd.f32 %v226, %v3654
    %v3656 = vpop.f32.mrb[0].mxu0
    %3657 = vdwg.mxu0
    %v3658 = vsel %vm426, %v3650, -inf
    %3659 = vmax.xlane.f32.xlu0 %v3658
    %v3660 = vpop.xlane.xlu0 %3659
    %v3661 = vsel %vm426, %v3655, -inf
    %3662 = vmax.xlane.f32.xlu0 %v3661
    %v3663 = vpop.xlane.xlu0 %3662
    %v3664 = vsub.f32 %v3650, %v3660
    %v3665 = vsub.f32 %v3655, %v3663
    %v3666 = vmul.f32 %v3664, 1.442695
    %v3667 = vpow.pop %v3666
    %v3668 = vmul.f32 %v3665, 1.442695
    %v3669 = vpow.pop %v3668
    %v3670 = vsel %vm426, %v3667, 0.0
    %3671 = vadd.xlane.f32.xlu0 %v3670
    %v3672 = vpop.xlane.xlu0 %3671
    %v3673 = vsel %vm426, %v3669, 0.0
    %3674 = vadd.xlane.f32.xlu0 %v3673
    %v3675 = vpop.xlane.xlu0 %3674
    %v3676 = vrcp.pop %v3672
    %v3677 = vrcp.pop %v3675
    %v3678 = vmul.f32 %v3667, %v3676
    %v3679 = vmul.f32 %v3669, %v3677
    %3680 = vrot.lane.b32.xlu0 %v3360, 56
    %v3681 = vpop.permute.xlu0 %3680
    %3682 = vrot.lane.b32.xlu0 %v3365, 56
    %v3683 = vpop.permute.xlu0 %3682
    %v3687 = vsel %vm426, %v3678, 0
    %v3690 = vsel %vm426, %v3679, 0
    %3692 = vmatprep.subr.mxu0 0.0
    %3693 = vmatpush1.msra.mxu0 %v3681
    %3694 = vmatprep.subr.mxu0 0.0
    %3695 = vmatpush1.msra.mxu0 %v3683
    %3696 = vmatprep.subr.mxu0 0.0
    %3697 = vmatpush1.msra.mxu0 0.0
    %3698 = vmatprep.subr.mxu0 0.0
    %3699 = vmatpush1.msra.mxu0 0.0
    %3700 = vmatprep.subr.mxu0 0.0
    %3701 = vmatpush1.msra.mxu0 0.0
    %3702 = vmatprep.subr.mxu0 0.0
    %3703 = vmatpush1.msra.mxu0 0.0
    %3704 = vmatprep.subr.mxu0 0.0
    %3705 = vmatpush1.msra.mxu0 0.0
    %3706 = vmatprep.subr.mxu0 0.0
    %3707 = vmatpush1.msra.mxu0 0.0
    %3708 = vmatprep.subr.mxu0 0.0
    %3709 = vmatpush1.msra.mxu0 0.0
    %3710 = vmatprep.subr.mxu0 0.0
    %3711 = vmatpush1.msra.mxu0 0.0
    %3712 = vmatprep.subr.mxu0 0.0
    %3713 = vmatpush1.msra.mxu0 0.0
    %3714 = vmatprep.subr.mxu0 0.0
    %3715 = vmatpush1.msra.mxu0 0.0
    %3716 = vmatprep.subr.mxu0 0.0
    %3717 = vmatpush1.msra.mxu0 0.0
    %3718 = vmatprep.subr.mxu0 0.0
    %3719 = vmatpush1.msra.mxu0 0.0
    %3720 = vmatprep.subr.mxu0 0.0
    %3721 = vmatpush1.msra.mxu0 0.0
    %3722 = vmatprep.subr.mxu0 0.0
    %3723 = vmatpush1.msra.mxu0 0.0
    %3724 = vmatprep.subr.mxu0 0.0
    %3725 = vmatpush1.msra.mxu0 0.0
    %3726 = vmatprep.subr.mxu0 0.0
    %3727 = vmatpush1.msra.mxu0 0.0
    %3728 = vmatprep.subr.mxu0 0.0
    %3729 = vmatpush1.msra.mxu0 0.0
    %3730 = vmatprep.subr.mxu0 0.0
    %3731 = vmatpush1.msra.mxu0 0.0
    %3732 = vmatprep.subr.mxu0 0.0
    %3733 = vmatpush1.msra.mxu0 0.0
    %3734 = vmatprep.subr.mxu0 0.0
    %3735 = vmatpush1.msra.mxu0 0.0
    %3736 = vmatprep.subr.mxu0 0.0
    %3737 = vmatpush1.msra.mxu0 0.0
    %3738 = vmatprep.subr.mxu0 0.0
    %3739 = vmatpush1.msra.mxu0 0.0
    %3740 = vmatprep.subr.mxu0 0.0
    %3741 = vmatpush1.msra.mxu0 0.0
    %3742 = vmatprep.subr.mxu0 0.0
    %3743 = vmatpush1.msra.mxu0 0.0
    %3744 = vmatprep.subr.mxu0 0.0
    %3745 = vmatpush1.msra.mxu0 0.0
    %3746 = vmatprep.subr.mxu0 0.0
    %3747 = vmatpush1.msra.mxu0 0.0
    %3748 = vmatprep.subr.mxu0 0.0
    %3749 = vmatpush1.msra.mxu0 0.0
    %3750 = vmatprep.subr.mxu0 0.0
    %3751 = vmatpush1.msra.mxu0 0.0
    %3752 = vmatprep.subr.mxu0 0.0
    %3753 = vmatpush1.msra.mxu0 0.0
    %3754 = vmatprep.subr.mxu0 0.0
    %3755 = vmatpush1.msra.mxu0 0.0
    %3756 = vmatprep.mubr.f32.mxu0 0.0
    %3757 = vmatmul.mubr.f32.gmra.mrb[0].mxu0 %v3687
    %v3758 = vpop.f32.mrb[0].mxu0
    %v3759 = vadd.f32 0.0, %v3758
    %v3760 = vpop.f32.mrb[0].mxu0
    %3761 = vmatprep.mubr.f32.mxu0 0.0
    %3762 = vmatmul.mubr.f32.gmra.mrb[0].mxu0 %v3690
    %v3763 = vpop.f32.mrb[0].mxu0
    %v3764 = vadd.f32 0.0, %v3763
    %v3765 = vpop.f32.mrb[0].mxu0
    %3766 = vdwg.mxu0
    %v3767 = vld [vmem:[%s3257 + $0x28] sm:$0xff]
    %v3769 = vsel %vm342, %v3759, 0
    %v3772 = vsel %vm342, %v3764, 0
    %3774 = vmatprep.subr.mxu0 0.0
    %3775 = vmatpush1.msra.mxu0 %v3767
    %3776 = vmatprep.subr.mxu0 0.0
    %3777 = vmatpush1.msra.mxu0 0.0
    %3778 = vmatprep.subr.mxu0 0.0
    %3779 = vmatpush1.msra.mxu0 0.0
    %3780 = vmatprep.subr.mxu0 0.0
    %3781 = vmatpush1.msra.mxu0 0.0
    %3782 = vmatprep.subr.mxu0 0.0
    %3783 = vmatpush1.msra.mxu0 0.0
    %3784 = vmatprep.subr.mxu0 0.0
    %3785 = vmatpush1.msra.mxu0 0.0
    %3786 = vmatprep.subr.mxu0 0.0
    %3787 = vmatpush1.msra.mxu0 0.0
    %3788 = vmatprep.subr.mxu0 0.0
    %3789 = vmatpush1.msra.mxu0 0.0
    %3790 = vmatprep.subr.mxu0 0.0
    %3791 = vmatpush1.msra.mxu0 0.0
    %3792 = vmatprep.subr.mxu0 0.0
    %3793 = vmatpush1.msra.mxu0 0.0
    %3794 = vmatprep.subr.mxu0 0.0
    %3795 = vmatpush1.msra.mxu0 0.0
    %3796 = vmatprep.subr.mxu0 0.0
    %3797 = vmatpush1.msra.mxu0 0.0
    %3798 = vmatprep.subr.mxu0 0.0
    %3799 = vmatpush1.msra.mxu0 0.0
    %3800 = vmatprep.subr.mxu0 0.0
    %3801 = vmatpush1.msra.mxu0 0.0
    %3802 = vmatprep.subr.mxu0 0.0
    %3803 = vmatpush1.msra.mxu0 0.0
    %3804 = vmatprep.subr.mxu0 0.0
    %3805 = vmatpush1.msra.mxu0 0.0
    %3806 = vmatprep.subr.mxu0 0.0
    %3807 = vmatpush1.msra.mxu0 0.0
    %3808 = vmatprep.subr.mxu0 0.0
    %3809 = vmatpush1.msra.mxu0 0.0
    %3810 = vmatprep.subr.mxu0 0.0
    %3811 = vmatpush1.msra.mxu0 0.0
    %3812 = vmatprep.subr.mxu0 0.0
    %3813 = vmatpush1.msra.mxu0 0.0
    %3814 = vmatprep.subr.mxu0 0.0
    %3815 = vmatpush1.msra.mxu0 0.0
    %3816 = vmatprep.subr.mxu0 0.0
    %3817 = vmatpush1.msra.mxu0 0.0
    %3818 = vmatprep.subr.mxu0 0.0
    %3819 = vmatpush1.msra.mxu0 0.0
    %3820 = vmatprep.subr.mxu0 0.0
    %3821 = vmatpush1.msra.mxu0 0.0
    %3822 = vmatprep.subr.mxu0 0.0
    %3823 = vmatpush1.msra.mxu0 0.0
    %3824 = vmatprep.subr.mxu0 0.0
    %3825 = vmatpush1.msra.mxu0 0.0
    %3826 = vmatprep.subr.mxu0 0.0
    %3827 = vmatpush1.msra.mxu0 0.0
    %3828 = vmatprep.subr.mxu0 0.0
    %3829 = vmatpush1.msra.mxu0 0.0
    %3830 = vmatprep.subr.mxu0 0.0
    %3831 = vmatpush1.msra.mxu0 0.0
    %3832 = vmatprep.subr.mxu0 0.0
    %3833 = vmatpush1.msra.mxu0 0.0
    %3834 = vmatprep.subr.mxu0 0.0
    %3835 = vmatpush1.msra.mxu0 0.0
    %3836 = vmatprep.subr.mxu0 0.0
    %3837 = vmatpush1.msra.mxu0 0.0
    %3838 = vmatprep.mubr.f32.mxu0 0.0
    %3839 = vmatmul.mubr.f32.gmra.mrb[0].mxu0 %v3769
    %v3840 = vpop.f32.mrb[0].mxu0
    %v3841 = vadd.f32 0.0, %v3840
    %v3842 = vpop.f32.mrb[0].mxu0
    %3843 = vmatprep.mubr.f32.mxu0 0.0
    %3844 = vmatmul.mubr.f32.gmra.mrb[0].mxu0 %v3772
    %v3845 = vpop.f32.mrb[0].mxu0
    %v3846 = vadd.f32 0.0, %v3845
    %v3847 = vpop.f32.mrb[0].mxu0
    %3848 = vdwg.mxu0
    %v3850 = vsel %vm342, %v3558, 0
    %v3853 = vsel %vm342, %v3563, 0
    %3855 = vmatprep.subr.mxu0 0.0
    %3856 = vmatpush1.msra.mxu0 %v3566
    %3857 = vmatprep.subr.mxu0 0.0
    %3858 = vmatpush1.msra.mxu0 0.0
    %3859 = vmatprep.subr.mxu0 0.0
    %3860 = vmatpush1.msra.mxu0 0.0
    %3861 = vmatprep.subr.mxu0 0.0
    %3862 = vmatpush1.msra.mxu0 0.0
    %3863 = vmatprep.subr.mxu0 0.0
    %3864 = vmatpush1.msra.mxu0 0.0
    %3865 = vmatprep.subr.mxu0 0.0
    %3866 = vmatpush1.msra.mxu0 0.0
    %3867 = vmatprep.subr.mxu0 0.0
    %3868 = vmatpush1.msra.mxu0 0.0
    %3869 = vmatprep.subr.mxu0 0.0
    %3870 = vmatpush1.msra.mxu0 0.0
    %3871 = vmatprep.subr.mxu0 0.0
    %3872 = vmatpush1.msra.mxu0 0.0
    %3873 = vmatprep.subr.mxu0 0.0
    %3874 = vmatpush1.msra.mxu0 0.0
    %3875 = vmatprep.subr.mxu0 0.0
    %3876 = vmatpush1.msra.mxu0 0.0
    %3877 = vmatprep.subr.mxu0 0.0
    %3878 = vmatpush1.msra.mxu0 0.0
    %3879 = vmatprep.subr.mxu0 0.0
    %3880 = vmatpush1.msra.mxu0 0.0
    %3881 = vmatprep.subr.mxu0 0.0
    %3882 = vmatpush1.msra.mxu0 0.0
    %3883 = vmatprep.subr.mxu0 0.0
    %3884 = vmatpush1.msra.mxu0 0.0
    %3885 = vmatprep.subr.mxu0 0.0
    %3886 = vmatpush1.msra.mxu0 0.0
    %3887 = vmatprep.subr.mxu0 0.0
    %3888 = vmatpush1.msra.mxu0 0.0
    %3889 = vmatprep.subr.mxu0 0.0
    %3890 = vmatpush1.msra.mxu0 0.0
    %3891 = vmatprep.subr.mxu0 0.0
    %3892 = vmatpush1.msra.mxu0 0.0
    %3893 = vmatprep.subr.mxu0 0.0
    %3894 = vmatpush1.msra.mxu0 0.0
    %3895 = vmatprep.subr.mxu0 0.0
    %3896 = vmatpush1.msra.mxu0 0.0
    %3897 = vmatprep.subr.mxu0 0.0
    %3898 = vmatpush1.msra.mxu0 0.0
    %3899 = vmatprep.subr.mxu0 0.0
    %3900 = vmatpush1.msra.mxu0 0.0
    %3901 = vmatprep.subr.mxu0 0.0
    %3902 = vmatpush1.msra.mxu0 0.0
    %3903 = vmatprep.subr.mxu0 0.0
    %3904 = vmatpush1.msra.mxu0 0.0
    %3905 = vmatprep.subr.mxu0 0.0
    %3906 = vmatpush1.msra.mxu0 0.0
    %3907 = vmatprep.subr.mxu0 0.0
    %3908 = vmatpush1.msra.mxu0 0.0
    %3909 = vmatprep.subr.mxu0 0.0
    %3910 = vmatpush1.msra.mxu0 0.0
    %3911 = vmatprep.subr.mxu0 0.0
    %3912 = vmatpush1.msra.mxu0 0.0
    %3913 = vmatprep.subr.mxu0 0.0
    %3914 = vmatpush1.msra.mxu0 0.0
    %3915 = vmatprep.subr.mxu0 0.0
    %3916 = vmatpush1.msra.mxu0 0.0
    %3917 = vmatprep.subr.mxu0 0.0
    %3918 = vmatpush1.msra.mxu0 0.0
    %3919 = vmatprep.mubr.f32.mxu0 0.0
    %3920 = vmatmul.mubr.f32.gmra.mrb[0].mxu0 %v3850
    %v3921 = vpop.f32.mrb[0].mxu0
    %v3922 = vadd.f32 %v3841, %v3921
    %v3923 = vpop.f32.mrb[0].mxu0
    %3924 = vmatprep.mubr.f32.mxu0 0.0
    %3925 = vmatmul.mubr.f32.gmra.mrb[0].mxu0 %v3853
    %v3926 = vpop.f32.mrb[0].mxu0
    %v3927 = vadd.f32 %v3846, %v3926
    %v3928 = vpop.f32.mrb[0].mxu0
    %3929 = vdwg.mxu0
    %3930 = vrot.lane.b32.xlu0 %v3360, 112
    %v3931 = vpop.permute.xlu0 %3930
    %3932 = vrot.lane.b32.xlu0 %v3365, 112
    %v3933 = vpop.permute.xlu0 %3932
    %3934 = vrot.lane.b32.xlu0 %v3360, 80
    %v3935 = vpop.permute.xlu0 %3934
    %3936 = vrot.lane.b32.xlu0 %v3365, 80
    %v3937 = vpop.permute.xlu0 %3936
    %v3938 = vsel %vm342, %v3931, 0
    %v3940 = vsel %vm342, %v3933, 0
    %v3942 = vsel %vm342, %v3935, 0
    %v3944 = vsel %vm342, %v3937, 0
    %3946 = vmatprep.subr.mxu0 0.0
    %3947 = vmatpush1.xpose.msra.mxu0 %v3942
    %3948 = vmatprep.subr.mxu0 0.0
    %3949 = vmatpush1.xpose.msra.mxu0 %v3944
    %3950 = vmatprep.subr.mxu0 0.0
    %3951 = vmatpush1.xpose.msra.mxu0 0.0
    %3952 = vmatprep.subr.mxu0 0.0
    %3953 = vmatpush1.xpose.msra.mxu0 0.0
    %3954 = vmatprep.subr.mxu0 0.0
    %3955 = vmatpush1.xpose.msra.mxu0 0.0
    %3956 = vmatprep.subr.mxu0 0.0
    %3957 = vmatpush1.xpose.msra.mxu0 0.0
    %3958 = vmatprep.subr.mxu0 0.0
    %3959 = vmatpush1.xpose.msra.mxu0 0.0
    %3960 = vmatprep.subr.mxu0 0.0
    %3961 = vmatpush1.xpose.msra.mxu0 0.0
    %3962 = vmatprep.subr.mxu0 0.0
    %3963 = vmatpush1.xpose.msra.mxu0 0.0
    %3964 = vmatprep.subr.mxu0 0.0
    %3965 = vmatpush1.xpose.msra.mxu0 0.0
    %3966 = vmatprep.subr.mxu0 0.0
    %3967 = vmatpush1.xpose.msra.mxu0 0.0
    %3968 = vmatprep.subr.mxu0 0.0
    %3969 = vmatpush1.xpose.msra.mxu0 0.0
    %3970 = vmatprep.subr.mxu0 0.0
    %3971 = vmatpush1.xpose.msra.mxu0 0.0
    %3972 = vmatprep.subr.mxu0 0.0
    %3973 = vmatpush1.xpose.msra.mxu0 0.0
    %3974 = vmatprep.subr.mxu0 0.0
    %3975 = vmatpush1.xpose.msra.mxu0 0.0
    %3976 = vmatprep.subr.mxu0 0.0
    %3977 = vmatpush1.xpose.msra.mxu0 0.0
    %3978 = vmatprep.subr.mxu0 0.0
    %3979 = vmatpush1.xpose.msra.mxu0 0.0
    %3980 = vmatprep.subr.mxu0 0.0
    %3981 = vmatpush1.xpose.msra.mxu0 0.0
    %3982 = vmatprep.subr.mxu0 0.0
    %3983 = vmatpush1.xpose.msra.mxu0 0.0
    %3984 = vmatprep.subr.mxu0 0.0
    %3985 = vmatpush1.xpose.msra.mxu0 0.0
    %3986 = vmatprep.subr.mxu0 0.0
    %3987 = vmatpush1.xpose.msra.mxu0 0.0
    %3988 = vmatprep.subr.mxu0 0.0
    %3989 = vmatpush1.xpose.msra.mxu0 0.0
    %3990 = vmatprep.subr.mxu0 0.0
    %3991 = vmatpush1.xpose.msra.mxu0 0.0
    %3992 = vmatprep.subr.mxu0 0.0
    %3993 = vmatpush1.xpose.msra.mxu0 0.0
    %3994 = vmatprep.subr.mxu0 0.0
    %3995 = vmatpush1.xpose.msra.mxu0 0.0
    %3996 = vmatprep.subr.mxu0 0.0
    %3997 = vmatpush1.xpose.msra.mxu0 0.0
    %3998 = vmatprep.subr.mxu0 0.0
    %3999 = vmatpush1.xpose.msra.mxu0 0.0
    %4000 = vmatprep.subr.mxu0 0.0
    %4001 = vmatpush1.xpose.msra.mxu0 0.0
    %4002 = vmatprep.subr.mxu0 0.0
    %4003 = vmatpush1.xpose.msra.mxu0 0.0
    %4004 = vmatprep.subr.mxu0 0.0
    %4005 = vmatpush1.xpose.msra.mxu0 0.0
    %4006 = vmatprep.subr.mxu0 0.0
    %4007 = vmatpush1.xpose.msra.mxu0 0.0
    %4008 = vmatprep.subr.mxu0 0.0
    %4009 = vmatpush1.xpose.msra.mxu0 0.0
    %4010 = vmatprep.mubr.f32.mxu0 0.0
    %4011 = vmatmul.mubr.f32.gmra.mrb[0].mxu0 %v3938
    %v4012 = vpop.f32.mrb[0].mxu0
    %v4013 = vadd.f32 %v225, %v4012
    %v4014 = vpop.f32.mrb[0].mxu0
    %4015 = vmatprep.mubr.f32.mxu0 0.0
    %4016 = vmatmul.mubr.f32.gmra.mrb[0].mxu0 %v3940
    %v4017 = vpop.f32.mrb[0].mxu0
    %v4018 = vadd.f32 %v226, %v4017
    %v4019 = vpop.f32.mrb[0].mxu0
    %4020 = vdwg.mxu0
    %v4021 = vsel %vm426, %v4013, -inf
    %4022 = vmax.xlane.f32.xlu0 %v4021
    %v4023 = vpop.xlane.xlu0 %4022
    %v4024 = vsel %vm426, %v4018, -inf
    %4025 = vmax.xlane.f32.xlu0 %v4024
    %v4026 = vpop.xlane.xlu0 %4025
    %v4027 = vsub.f32 %v4013, %v4023
    %v4028 = vsub.f32 %v4018, %v4026
    %v4029 = vmul.f32 %v4027, 1.442695
    %v4030 = vpow.pop %v4029
    %v4031 = vmul.f32 %v4028, 1.442695
    %v4032 = vpow.pop %v4031
    %v4033 = vsel %vm426, %v4030, 0.0
    %4034 = vadd.xlane.f32.xlu0 %v4033
    %v4035 = vpop.xlane.xlu0 %4034
    %v4036 = vsel %vm426, %v4032, 0.0
    %4037 = vadd.xlane.f32.xlu0 %v4036
    %v4038 = vpop.xlane.xlu0 %4037
    %v4039 = vrcp.pop %v4035
    %v4040 = vrcp.pop %v4038
    %v4041 = vmul.f32 %v4030, %v4039
    %v4042 = vmul.f32 %v4032, %v4040
    %4043 = vrot.lane.b32.xlu0 %v3360, 48
    %v4044 = vpop.permute.xlu0 %4043
    %4045 = vrot.lane.b32.xlu0 %v3365, 48
    %v4046 = vpop.permute.xlu0 %4045
    %v4050 = vsel %vm426, %v4041, 0
    %v4053 = vsel %vm426, %v4042, 0
    %4055 = vmatprep.subr.mxu0 0.0
    %4056 = vmatpush1.msra.mxu0 %v4044
    %4057 = vmatprep.subr.mxu0 0.0
    %4058 = vmatpush1.msra.mxu0 %v4046
    %4059 = vmatprep.subr.mxu0 0.0
    %4060 = vmatpush1.msra.mxu0 0.0
    %4061 = vmatprep.subr.mxu0 0.0
    %4062 = vmatpush1.msra.mxu0 0.0
    %4063 = vmatprep.subr.mxu0 0.0
    %4064 = vmatpush1.msra.mxu0 0.0
    %4065 = vmatprep.subr.mxu0 0.0
    %4066 = vmatpush1.msra.mxu0 0.0
    %4067 = vmatprep.subr.mxu0 0.0
    %4068 = vmatpush1.msra.mxu0 0.0
    %4069 = vmatprep.subr.mxu0 0.0
    %4070 = vmatpush1.msra.mxu0 0.0
    %4071 = vmatprep.subr.mxu0 0.0
    %4072 = vmatpush1.msra.mxu0 0.0
    %4073 = vmatprep.subr.mxu0 0.0
    %4074 = vmatpush1.msra.mxu0 0.0
    %4075 = vmatprep.subr.mxu0 0.0
    %4076 = vmatpush1.msra.mxu0 0.0
    %4077 = vmatprep.subr.mxu0 0.0
    %4078 = vmatpush1.msra.mxu0 0.0
    %4079 = vmatprep.subr.mxu0 0.0
    %4080 = vmatpush1.msra.mxu0 0.0
    %4081 = vmatprep.subr.mxu0 0.0
    %4082 = vmatpush1.msra.mxu0 0.0
    %4083 = vmatprep.subr.mxu0 0.0
    %4084 = vmatpush1.msra.mxu0 0.0
    %4085 = vmatprep.subr.mxu0 0.0
    %4086 = vmatpush1.msra.mxu0 0.0
    %4087 = vmatprep.subr.mxu0 0.0
    %4088 = vmatpush1.msra.mxu0 0.0
    %4089 = vmatprep.subr.mxu0 0.0
    %4090 = vmatpush1.msra.mxu0 0.0
    %4091 = vmatprep.subr.mxu0 0.0
    %4092 = vmatpush1.msra.mxu0 0.0
    %4093 = vmatprep.subr.mxu0 0.0
    %4094 = vmatpush1.msra.mxu0 0.0
    %4095 = vmatprep.subr.mxu0 0.0
    %4096 = vmatpush1.msra.mxu0 0.0
    %4097 = vmatprep.subr.mxu0 0.0
    %4098 = vmatpush1.msra.mxu0 0.0
    %4099 = vmatprep.subr.mxu0 0.0
    %4100 = vmatpush1.msra.mxu0 0.0
    %4101 = vmatprep.subr.mxu0 0.0
    %4102 = vmatpush1.msra.mxu0 0.0
    %4103 = vmatprep.subr.mxu0 0.0
    %4104 = vmatpush1.msra.mxu0 0.0
    %4105 = vmatprep.subr.mxu0 0.0
    %4106 = vmatpush1.msra.mxu0 0.0
    %4107 = vmatprep.subr.mxu0 0.0
    %4108 = vmatpush1.msra.mxu0 0.0
    %4109 = vmatprep.subr.mxu0 0.0
    %4110 = vmatpush1.msra.mxu0 0.0
    %4111 = vmatprep.subr.mxu0 0.0
    %4112 = vmatpush1.msra.mxu0 0.0
    %4113 = vmatprep.subr.mxu0 0.0
    %4114 = vmatpush1.msra.mxu0 0.0
    %4115 = vmatprep.subr.mxu0 0.0
    %4116 = vmatpush1.msra.mxu0 0.0
    %4117 = vmatprep.subr.mxu0 0.0
    %4118 = vmatpush1.msra.mxu0 0.0
    %4119 = vmatprep.mubr.f32.mxu0 0.0
    %4120 = vmatmul.mubr.f32.gmra.mrb[0].mxu0 %v4050
    %v4121 = vpop.f32.mrb[0].mxu0
    %v4122 = vadd.f32 0.0, %v4121
    %v4123 = vpop.f32.mrb[0].mxu0
    %4124 = vmatprep.mubr.f32.mxu0 0.0
    %4125 = vmatmul.mubr.f32.gmra.mrb[0].mxu0 %v4053
    %v4126 = vpop.f32.mrb[0].mxu0
    %v4127 = vadd.f32 0.0, %v4126
    %v4128 = vpop.f32.mrb[0].mxu0
    %4129 = vdwg.mxu0
    %v4130 = vld [vmem:[%s3257 + $0x30] sm:$0xff]
    %v4132 = vsel %vm342, %v4122, 0
    %v4135 = vsel %vm342, %v4127, 0
    %4137 = vmatprep.subr.mxu0 0.0
    %4138 = vmatpush1.msra.mxu0 %v4130
    %4139 = vmatprep.subr.mxu0 0.0
    %4140 = vmatpush1.msra.mxu0 0.0
    %4141 = vmatprep.subr.mxu0 0.0
    %4142 = vmatpush1.msra.mxu0 0.0
    %4143 = vmatprep.subr.mxu0 0.0
    %4144 = vmatpush1.msra.mxu0 0.0
    %4145 = vmatprep.subr.mxu0 0.0
    %4146 = vmatpush1.msra.mxu0 0.0
    %4147 = vmatprep.subr.mxu0 0.0
    %4148 = vmatpush1.msra.mxu0 0.0
    %4149 = vmatprep.subr.mxu0 0.0
    %4150 = vmatpush1.msra.mxu0 0.0
    %4151 = vmatprep.subr.mxu0 0.0
    %4152 = vmatpush1.msra.mxu0 0.0
    %4153 = vmatprep.subr.mxu0 0.0
    %4154 = vmatpush1.msra.mxu0 0.0
    %4155 = vmatprep.subr.mxu0 0.0
    %4156 = vmatpush1.msra.mxu0 0.0
    %4157 = vmatprep.subr.mxu0 0.0
    %4158 = vmatpush1.msra.mxu0 0.0
    %4159 = vmatprep.subr.mxu0 0.0
    %4160 = vmatpush1.msra.mxu0 0.0
    %4161 = vmatprep.subr.mxu0 0.0
    %4162 = vmatpush1.msra.mxu0 0.0
    %4163 = vmatprep.subr.mxu0 0.0
    %4164 = vmatpush1.msra.mxu0 0.0
    %4165 = vmatprep.subr.mxu0 0.0
    %4166 = vmatpush1.msra.mxu0 0.0
    %4167 = vmatprep.subr.mxu0 0.0
    %4168 = vmatpush1.msra.mxu0 0.0
    %4169 = vmatprep.subr.mxu0 0.0
    %4170 = vmatpush1.msra.mxu0 0.0
    %4171 = vmatprep.subr.mxu0 0.0
    %4172 = vmatpush1.msra.mxu0 0.0
    %4173 = vmatprep.subr.mxu0 0.0
    %4174 = vmatpush1.msra.mxu0 0.0
    %4175 = vmatprep.subr.mxu0 0.0
    %4176 = vmatpush1.msra.mxu0 0.0
    %4177 = vmatprep.subr.mxu0 0.0
    %4178 = vmatpush1.msra.mxu0 0.0
    %4179 = vmatprep.subr.mxu0 0.0
    %4180 = vmatpush1.msra.mxu0 0.0
    %4181 = vmatprep.subr.mxu0 0.0
    %4182 = vmatpush1.msra.mxu0 0.0
    %4183 = vmatprep.subr.mxu0 0.0
    %4184 = vmatpush1.msra.mxu0 0.0
    %4185 = vmatprep.subr.mxu0 0.0
    %4186 = vmatpush1.msra.mxu0 0.0
    %4187 = vmatprep.subr.mxu0 0.0
    %4188 = vmatpush1.msra.mxu0 0.0
    %4189 = vmatprep.subr.mxu0 0.0
    %4190 = vmatpush1.msra.mxu0 0.0
    %4191 = vmatprep.subr.mxu0 0.0
    %4192 = vmatpush1.msra.mxu0 0.0
    %4193 = vmatprep.subr.mxu0 0.0
    %4194 = vmatpush1.msra.mxu0 0.0
    %4195 = vmatprep.subr.mxu0 0.0
    %4196 = vmatpush1.msra.mxu0 0.0
    %4197 = vmatprep.subr.mxu0 0.0
    %4198 = vmatpush1.msra.mxu0 0.0
    %4199 = vmatprep.subr.mxu0 0.0
    %4200 = vmatpush1.msra.mxu0 0.0
    %4201 = vmatprep.mubr.f32.mxu0 0.0
    %4202 = vmatmul.mubr.f32.gmra.mrb[0].mxu0 %v4132
    %v4203 = vpop.f32.mrb[0].mxu0
    %v4204 = vadd.f32 0.0, %v4203
    %v4205 = vpop.f32.mrb[0].mxu0
    %4206 = vmatprep.mubr.f32.mxu0 0.0
    %4207 = vmatmul.mubr.f32.gmra.mrb[0].mxu0 %v4135
    %v4208 = vpop.f32.mrb[0].mxu0
    %v4209 = vadd.f32 0.0, %v4208
    %v4210 = vpop.f32.mrb[0].mxu0
    %4211 = vdwg.mxu0
    %v4212 = vadd.f32 %v3922, %v4204
    %v4213 = vadd.f32 %v3927, %v4209
    %4214 = vrot.lane.b32.xlu0 %v3360, 104
    %v4215 = vpop.permute.xlu0 %4214
    %4216 = vrot.lane.b32.xlu0 %v3365, 104
    %v4217 = vpop.permute.xlu0 %4216
    %4218 = vrot.lane.b32.xlu0 %v3360, 72
    %v4219 = vpop.permute.xlu0 %4218
    %4220 = vrot.lane.b32.xlu0 %v3365, 72
    %v4221 = vpop.permute.xlu0 %4220
    %v4222 = vsel %vm342, %v4215, 0
    %v4224 = vsel %vm342, %v4217, 0
    %v4226 = vsel %vm342, %v4219, 0
    %v4228 = vsel %vm342, %v4221, 0
    %4230 = vmatprep.subr.mxu0 0.0
    %4231 = vmatpush1.xpose.msra.mxu0 %v4226
    %4232 = vmatprep.subr.mxu0 0.0
    %4233 = vmatpush1.xpose.msra.mxu0 %v4228
    %4234 = vmatprep.subr.mxu0 0.0
    %4235 = vmatpush1.xpose.msra.mxu0 0.0
    %4236 = vmatprep.subr.mxu0 0.0
    %4237 = vmatpush1.xpose.msra.mxu0 0.0
    %4238 = vmatprep.subr.mxu0 0.0
    %4239 = vmatpush1.xpose.msra.mxu0 0.0
    %4240 = vmatprep.subr.mxu0 0.0
    %4241 = vmatpush1.xpose.msra.mxu0 0.0
    %4242 = vmatprep.subr.mxu0 0.0
    %4243 = vmatpush1.xpose.msra.mxu0 0.0
    %4244 = vmatprep.subr.mxu0 0.0
    %4245 = vmatpush1.xpose.msra.mxu0 0.0
    %4246 = vmatprep.subr.mxu0 0.0
    %4247 = vmatpush1.xpose.msra.mxu0 0.0
    %4248 = vmatprep.subr.mxu0 0.0
    %4249 = vmatpush1.xpose.msra.mxu0 0.0
    %4250 = vmatprep.subr.mxu0 0.0
    %4251 = vmatpush1.xpose.msra.mxu0 0.0
    %4252 = vmatprep.subr.mxu0 0.0
    %4253 = vmatpush1.xpose.msra.mxu0 0.0
    %4254 = vmatprep.subr.mxu0 0.0
    %4255 = vmatpush1.xpose.msra.mxu0 0.0
    %4256 = vmatprep.subr.mxu0 0.0
    %4257 = vmatpush1.xpose.msra.mxu0 0.0
    %4258 = vmatprep.subr.mxu0 0.0
    %4259 = vmatpush1.xpose.msra.mxu0 0.0
    %4260 = vmatprep.subr.mxu0 0.0
    %4261 = vmatpush1.xpose.msra.mxu0 0.0
    %4262 = vmatprep.subr.mxu0 0.0
    %4263 = vmatpush1.xpose.msra.mxu0 0.0
    %4264 = vmatprep.subr.mxu0 0.0
    %4265 = vmatpush1.xpose.msra.mxu0 0.0
    %4266 = vmatprep.subr.mxu0 0.0
    %4267 = vmatpush1.xpose.msra.mxu0 0.0
    %4268 = vmatprep.subr.mxu0 0.0
    %4269 = vmatpush1.xpose.msra.mxu0 0.0
    %4270 = vmatprep.subr.mxu0 0.0
    %4271 = vmatpush1.xpose.msra.mxu0 0.0
    %4272 = vmatprep.subr.mxu0 0.0
    %4273 = vmatpush1.xpose.msra.mxu0 0.0
    %4274 = vmatprep.subr.mxu0 0.0
    %4275 = vmatpush1.xpose.msra.mxu0 0.0
    %4276 = vmatprep.subr.mxu0 0.0
    %4277 = vmatpush1.xpose.msra.mxu0 0.0
    %4278 = vmatprep.subr.mxu0 0.0
    %4279 = vmatpush1.xpose.msra.mxu0 0.0
    %4280 = vmatprep.subr.mxu0 0.0
    %4281 = vmatpush1.xpose.msra.mxu0 0.0
    %4282 = vmatprep.subr.mxu0 0.0
    %4283 = vmatpush1.xpose.msra.mxu0 0.0
    %4284 = vmatprep.subr.mxu0 0.0
    %4285 = vmatpush1.xpose.msra.mxu0 0.0
    %4286 = vmatprep.subr.mxu0 0.0
    %4287 = vmatpush1.xpose.msra.mxu0 0.0
    %4288 = vmatprep.subr.mxu0 0.0
    %4289 = vmatpush1.xpose.msra.mxu0 0.0
    %4290 = vmatprep.subr.mxu0 0.0
    %4291 = vmatpush1.xpose.msra.mxu0 0.0
    %4292 = vmatprep.subr.mxu0 0.0
    %4293 = vmatpush1.xpose.msra.mxu0 0.0
    %4294 = vmatprep.mubr.f32.mxu0 0.0
    %4295 = vmatmul.mubr.f32.gmra.mrb[0].mxu0 %v4222
    %v4296 = vpop.f32.mrb[0].mxu0
    %v4297 = vadd.f32 %v225, %v4296
    %v4298 = vpop.f32.mrb[0].mxu0
    %4299 = vmatprep.mubr.f32.mxu0 0.0
    %4300 = vmatmul.mubr.f32.gmra.mrb[0].mxu0 %v4224
    %v4301 = vpop.f32.mrb[0].mxu0
    %v4302 = vadd.f32 %v226, %v4301
    %v4303 = vpop.f32.mrb[0].mxu0
    %4304 = vdwg.mxu0
    %v4305 = vsel %vm426, %v4297, -inf
    %4306 = vmax.xlane.f32.xlu0 %v4305
    %v4307 = vpop.xlane.xlu0 %4306
    %v4308 = vsel %vm426, %v4302, -inf
    %4309 = vmax.xlane.f32.xlu0 %v4308
    %v4310 = vpop.xlane.xlu0 %4309
    %v4311 = vsub.f32 %v4297, %v4307
    %v4312 = vsub.f32 %v4302, %v4310
    %v4313 = vmul.f32 %v4311, 1.442695
    %v4314 = vpow.pop %v4313
    %v4315 = vmul.f32 %v4312, 1.442695
    %v4316 = vpow.pop %v4315
    %v4317 = vsel %vm426, %v4314, 0.0
    %4318 = vadd.xlane.f32.xlu0 %v4317
    %v4319 = vpop.xlane.xlu0 %4318
    %v4320 = vsel %vm426, %v4316, 0.0
    %4321 = vadd.xlane.f32.xlu0 %v4320
    %v4322 = vpop.xlane.xlu0 %4321
    %v4323 = vrcp.pop %v4319
    %v4324 = vrcp.pop %v4322
    %v4325 = vmul.f32 %v4314, %v4323
    %v4326 = vmul.f32 %v4316, %v4324
    %4327 = vrot.lane.b32.xlu0 %v3360, 40
    %v4328 = vpop.permute.xlu0 %4327
    %4329 = vrot.lane.b32.xlu0 %v3365, 40
    %v4330 = vpop.permute.xlu0 %4329
    %v4334 = vsel %vm426, %v4325, 0
    %v4337 = vsel %vm426, %v4326, 0
    %4339 = vmatprep.subr.mxu0 0.0
    %4340 = vmatpush1.msra.mxu0 %v4328
    %4341 = vmatprep.subr.mxu0 0.0
    %4342 = vmatpush1.msra.mxu0 %v4330
    %4343 = vmatprep.subr.mxu0 0.0
    %4344 = vmatpush1.msra.mxu0 0.0
    %4345 = vmatprep.subr.mxu0 0.0
    %4346 = vmatpush1.msra.mxu0 0.0
    %4347 = vmatprep.subr.mxu0 0.0
    %4348 = vmatpush1.msra.mxu0 0.0
    %4349 = vmatprep.subr.mxu0 0.0
    %4350 = vmatpush1.msra.mxu0 0.0
    %4351 = vmatprep.subr.mxu0 0.0
    %4352 = vmatpush1.msra.mxu0 0.0
    %4353 = vmatprep.subr.mxu0 0.0
    %4354 = vmatpush1.msra.mxu0 0.0
    %4355 = vmatprep.subr.mxu0 0.0
    %4356 = vmatpush1.msra.mxu0 0.0
    %4357 = vmatprep.subr.mxu0 0.0
    %4358 = vmatpush1.msra.mxu0 0.0
    %4359 = vmatprep.subr.mxu0 0.0
    %4360 = vmatpush1.msra.mxu0 0.0
    %4361 = vmatprep.subr.mxu0 0.0
    %4362 = vmatpush1.msra.mxu0 0.0
    %4363 = vmatprep.subr.mxu0 0.0
    %4364 = vmatpush1.msra.mxu0 0.0
    %4365 = vmatprep.subr.mxu0 0.0
    %4366 = vmatpush1.msra.mxu0 0.0
    %4367 = vmatprep.subr.mxu0 0.0
    %4368 = vmatpush1.msra.mxu0 0.0
    %4369 = vmatprep.subr.mxu0 0.0
    %4370 = vmatpush1.msra.mxu0 0.0
    %4371 = vmatprep.subr.mxu0 0.0
    %4372 = vmatpush1.msra.mxu0 0.0
    %4373 = vmatprep.subr.mxu0 0.0
    %4374 = vmatpush1.msra.mxu0 0.0
    %4375 = vmatprep.subr.mxu0 0.0
    %4376 = vmatpush1.msra.mxu0 0.0
    %4377 = vmatprep.subr.mxu0 0.0
    %4378 = vmatpush1.msra.mxu0 0.0
    %4379 = vmatprep.subr.mxu0 0.0
    %4380 = vmatpush1.msra.mxu0 0.0
    %4381 = vmatprep.subr.mxu0 0.0
    %4382 = vmatpush1.msra.mxu0 0.0
    %4383 = vmatprep.subr.mxu0 0.0
    %4384 = vmatpush1.msra.mxu0 0.0
    %4385 = vmatprep.subr.mxu0 0.0
    %4386 = vmatpush1.msra.mxu0 0.0
    %4387 = vmatprep.subr.mxu0 0.0
    %4388 = vmatpush1.msra.mxu0 0.0
    %4389 = vmatprep.subr.mxu0 0.0
    %4390 = vmatpush1.msra.mxu0 0.0
    %4391 = vmatprep.subr.mxu0 0.0
    %4392 = vmatpush1.msra.mxu0 0.0
    %4393 = vmatprep.subr.mxu0 0.0
    %4394 = vmatpush1.msra.mxu0 0.0
    %4395 = vmatprep.subr.mxu0 0.0
    %4396 = vmatpush1.msra.mxu0 0.0
    %4397 = vmatprep.subr.mxu0 0.0
    %4398 = vmatpush1.msra.mxu0 0.0
    %4399 = vmatprep.subr.mxu0 0.0
    %4400 = vmatpush1.msra.mxu0 0.0
    %4401 = vmatprep.subr.mxu0 0.0
    %4402 = vmatpush1.msra.mxu0 0.0
    %4403 = vmatprep.mubr.f32.mxu0 0.0
    %4404 = vmatmul.mubr.f32.gmra.mrb[0].mxu0 %v4334
    %v4405 = vpop.f32.mrb[0].mxu0
    %v4406 = vadd.f32 0.0, %v4405
    %v4407 = vpop.f32.mrb[0].mxu0
    %4408 = vmatprep.mubr.f32.mxu0 0.0
    %4409 = vmatmul.mubr.f32.gmra.mrb[0].mxu0 %v4337
    %v4410 = vpop.f32.mrb[0].mxu0
    %v4411 = vadd.f32 0.0, %v4410
    %v4412 = vpop.f32.mrb[0].mxu0
    %4413 = vdwg.mxu0
    %v4414 = vld [vmem:[%s3257 + $0x38] sm:$0xff]
    %v4416 = vsel %vm342, %v4406, 0
    %v4419 = vsel %vm342, %v4411, 0
    %4421 = vmatprep.subr.mxu0 0.0
    %4422 = vmatpush1.msra.mxu0 %v4414
    %4423 = vmatprep.subr.mxu0 0.0
    %4424 = vmatpush1.msra.mxu0 0.0
    %4425 = vmatprep.subr.mxu0 0.0
    %4426 = vmatpush1.msra.mxu0 0.0
    %4427 = vmatprep.subr.mxu0 0.0
    %4428 = vmatpush1.msra.mxu0 0.0
    %4429 = vmatprep.subr.mxu0 0.0
    %4430 = vmatpush1.msra.mxu0 0.0
    %4431 = vmatprep.subr.mxu0 0.0
    %4432 = vmatpush1.msra.mxu0 0.0
    %4433 = vmatprep.subr.mxu0 0.0
    %4434 = vmatpush1.msra.mxu0 0.0
    %4435 = vmatprep.subr.mxu0 0.0
    %4436 = vmatpush1.msra.mxu0 0.0
    %4437 = vmatprep.subr.mxu0 0.0
    %4438 = vmatpush1.msra.mxu0 0.0
    %4439 = vmatprep.subr.mxu0 0.0
    %4440 = vmatpush1.msra.mxu0 0.0
    %4441 = vmatprep.subr.mxu0 0.0
    %4442 = vmatpush1.msra.mxu0 0.0
    %4443 = vmatprep.subr.mxu0 0.0
    %4444 = vmatpush1.msra.mxu0 0.0
    %4445 = vmatprep.subr.mxu0 0.0
    %4446 = vmatpush1.msra.mxu0 0.0
    %4447 = vmatprep.subr.mxu0 0.0
    %4448 = vmatpush1.msra.mxu0 0.0
    %4449 = vmatprep.subr.mxu0 0.0
    %4450 = vmatpush1.msra.mxu0 0.0
    %4451 = vmatprep.subr.mxu0 0.0
    %4452 = vmatpush1.msra.mxu0 0.0
    %4453 = vmatprep.subr.mxu0 0.0
    %4454 = vmatpush1.msra.mxu0 0.0
    %4455 = vmatprep.subr.mxu0 0.0
    %4456 = vmatpush1.msra.mxu0 0.0
    %4457 = vmatprep.subr.mxu0 0.0
    %4458 = vmatpush1.msra.mxu0 0.0
    %4459 = vmatprep.subr.mxu0 0.0
    %4460 = vmatpush1.msra.mxu0 0.0
    %4461 = vmatprep.subr.mxu0 0.0
    %4462 = vmatpush1.msra.mxu0 0.0
    %4463 = vmatprep.subr.mxu0 0.0
    %4464 = vmatpush1.msra.mxu0 0.0
    %4465 = vmatprep.subr.mxu0 0.0
    %4466 = vmatpush1.msra.mxu0 0.0
    %4467 = vmatprep.subr.mxu0 0.0
    %4468 = vmatpush1.msra.mxu0 0.0
    %4469 = vmatprep.subr.mxu0 0.0
    %4470 = vmatpush1.msra.mxu0 0.0
    %4471 = vmatprep.subr.mxu0 0.0
    %4472 = vmatpush1.msra.mxu0 0.0
    %4473 = vmatprep.subr.mxu0 0.0
    %4474 = vmatpush1.msra.mxu0 0.0
    %4475 = vmatprep.subr.mxu0 0.0
    %4476 = vmatpush1.msra.mxu0 0.0
    %4477 = vmatprep.subr.mxu0 0.0
    %4478 = vmatpush1.msra.mxu0 0.0
    %4479 = vmatprep.subr.mxu0 0.0
    %4480 = vmatpush1.msra.mxu0 0.0
    %4481 = vmatprep.subr.mxu0 0.0
    %4482 = vmatpush1.msra.mxu0 0.0
    %4483 = vmatprep.subr.mxu0 0.0
    %4484 = vmatpush1.msra.mxu0 0.0
    %4485 = vmatprep.mubr.f32.mxu0 0.0
    %4486 = vmatmul.mubr.f32.gmra.mrb[0].mxu0 %v4416
    %v4487 = vpop.f32.mrb[0].mxu0
    %v4488 = vadd.f32 0.0, %v4487
    %v4489 = vpop.f32.mrb[0].mxu0
    %4490 = vmatprep.mubr.f32.mxu0 0.0
    %4491 = vmatmul.mubr.f32.gmra.mrb[0].mxu0 %v4419
    %v4492 = vpop.f32.mrb[0].mxu0
    %v4493 = vadd.f32 0.0, %v4492
    %v4494 = vpop.f32.mrb[0].mxu0
    %4495 = vdwg.mxu0
    %v4496 = vadd.f32 %v4212, %v4488
    %v4497 = vadd.f32 %v4213, %v4493
    %v4498 = vlaneseq
    %v4499 = vshrl.u32 %v4498, 7
    %v4500 = vsub.s32 0, %v4499
    %v4501 = vrot.slane %v3276, %v4500
    %v4502 = vadd.f32 %v4496, %v4501
    %v4503 = vadd.f32 %v4497, %v4501
    %v4504 = vadd.f32 %v3255, %v4502
    %v4505 = vadd.f32 %v3256, %v4503
    %v4506 = vsel %vm174, %v4504, 0.0
    %4507 = vadd.xlane.f32.xlu0 %v4506
    %v4508 = vpop.xlane.xlu0 %4507
    %v4509 = vsel %vm174, %v4505, 0.0
    %4510 = vadd.xlane.f32.xlu0 %v4509
    %v4511 = vpop.xlane.xlu0 %4510
    %v4512 = vmul.f32 %v4508, %v181
    %v4513 = vmul.f32 %v4511, %v181
    %v4514 = vsub.f32 %v4504, %v4512
    %v4515 = vsub.f32 %v4505, %v4513
    %v4516 = vmul.f32 %v4514, %v4514
    %v4517 = vmul.f32 %v4515, %v4515
    %v4518 = vsel %vm174, %v4516, 0.0
    %4519 = vadd.xlane.f32.xlu0 %v4518
    %v4520 = vpop.xlane.xlu0 %4519
    %v4521 = vsel %vm174, %v4517, 0.0
    %4522 = vadd.xlane.f32.xlu0 %v4521
    %v4523 = vpop.xlane.xlu0 %4522
    %v4524 = vmul.f32 %v4520, %v181
    %v4525 = vmul.f32 %v4523, %v181
    %v4526 = vadd.f32 %v4524, 1e-12
    %v4527 = vadd.f32 %v4525, 1e-12
    %v4528 = vrsqrt.pop %v4526
    %v4529 = vrsqrt.pop %v4527
    %v4530 = vmul.f32 %v4514, %v4528
    %v4531 = vmul.f32 %v4515, %v4529
    %v4532 = vlaneseq
    %v4533 = vshrl.u32 %v4532, 7
    %v4534 = vsub.s32 0, %v4533
    %v4535 = vrot.slane %v3277, %v4534
    %v4536 = vmul.f32 %v4530, %v4535
    %v4537 = vmul.f32 %v4531, %v4535
    %v4538 = vlaneseq
    %v4539 = vshrl.u32 %v4538, 7
    %v4540 = vsub.s32 0, %v4539
    %v4541 = vrot.slane %v3278, %v4540
    %v4542 = vadd.f32 %v4536, %v4541
    %v4543 = vadd.f32 %v4537, %v4541
    %v4544 = vlaneseq
    %v4545 = vshrl.u32 %v4544, 7
    %v4546 = vsub.s32 0, %v4545
    %v4547 = vrot.slane %v3279, %v4546
    %v4549 = vsel %vm174, %v4542, 0
    %v4552 = vsel %vm174, %v4543, 0
    %4554 = vmatprep.subr.mxu0 0.0
    %4555 = vmatpush1.msra.mxu0 %v3262
    %4556 = vmatprep.subr.mxu0 0.0
    %4557 = vmatpush1.msra.mxu0 %v3263
    %4558 = vmatprep.subr.mxu0 0.0
    %4559 = vmatpush1.msra.mxu0 %v3264
    %4560 = vmatprep.subr.mxu0 0.0
    %4561 = vmatpush1.msra.mxu0 %v3265
    %4562 = vmatprep.subr.mxu0 0.0
    %4563 = vmatpush1.msra.mxu0 0.0
    %4564 = vmatprep.subr.mxu0 0.0
    %4565 = vmatpush1.msra.mxu0 0.0
    %4566 = vmatprep.subr.mxu0 0.0
    %4567 = vmatpush1.msra.mxu0 0.0
    %4568 = vmatprep.subr.mxu0 0.0
    %4569 = vmatpush1.msra.mxu0 0.0
    %4570 = vmatprep.subr.mxu0 0.0
    %4571 = vmatpush1.msra.mxu0 0.0
    %4572 = vmatprep.subr.mxu0 0.0
    %4573 = vmatpush1.msra.mxu0 0.0
    %4574 = vmatprep.subr.mxu0 0.0
    %4575 = vmatpush1.msra.mxu0 0.0
    %4576 = vmatprep.subr.mxu0 0.0
    %4577 = vmatpush1.msra.mxu0 0.0
    %4578 = vmatprep.subr.mxu0 0.0
    %4579 = vmatpush1.msra.mxu0 0.0
    %4580 = vmatprep.subr.mxu0 0.0
    %4581 = vmatpush1.msra.mxu0 0.0
    %4582 = vmatprep.subr.mxu0 0.0
    %4583 = vmatpush1.msra.mxu0 0.0
    %4584 = vmatprep.subr.mxu0 0.0
    %4585 = vmatpush1.msra.mxu0 0.0
    %4586 = vmatprep.subr.mxu0 0.0
    %4587 = vmatpush1.msra.mxu0 0.0
    %4588 = vmatprep.subr.mxu0 0.0
    %4589 = vmatpush1.msra.mxu0 0.0
    %4590 = vmatprep.subr.mxu0 0.0
    %4591 = vmatpush1.msra.mxu0 0.0
    %4592 = vmatprep.subr.mxu0 0.0
    %4593 = vmatpush1.msra.mxu0 0.0
    %4594 = vmatprep.subr.mxu0 0.0
    %4595 = vmatpush1.msra.mxu0 0.0
    %4596 = vmatprep.subr.mxu0 0.0
    %4597 = vmatpush1.msra.mxu0 0.0
    %4598 = vmatprep.subr.mxu0 0.0
    %4599 = vmatpush1.msra.mxu0 0.0
    %4600 = vmatprep.subr.mxu0 0.0
    %4601 = vmatpush1.msra.mxu0 0.0
    %4602 = vmatprep.subr.mxu0 0.0
    %4603 = vmatpush1.msra.mxu0 0.0
    %4604 = vmatprep.subr.mxu0 0.0
    %4605 = vmatpush1.msra.mxu0 0.0
    %4606 = vmatprep.subr.mxu0 0.0
    %4607 = vmatpush1.msra.mxu0 0.0
    %4608 = vmatprep.subr.mxu0 0.0
    %4609 = vmatpush1.msra.mxu0 0.0
    %4610 = vmatprep.subr.mxu0 0.0
    %4611 = vmatpush1.msra.mxu0 0.0
    %4612 = vmatprep.subr.mxu0 0.0
    %4613 = vmatpush1.msra.mxu0 0.0
    %4614 = vmatprep.subr.mxu0 0.0
    %4615 = vmatpush1.msra.mxu0 0.0
    %4616 = vmatprep.subr.mxu0 0.0
    %4617 = vmatpush1.msra.mxu0 0.0
    %4618 = vmatprep.mubr.f32.mxu0 0.0
    %4619 = vmatmul.mubr.f32.gmra.mrb[0].mxu0 %v4549
    %v4620 = vpop.f32.mrb[0].mxu0
    %v4621 = vadd.f32 %v4547, %v4620
    %v4622 = vpop.f32.mrb[0].mxu0
    %4623 = vmatprep.mubr.f32.mxu0 0.0
    %4624 = vmatmul.mubr.f32.gmra.mrb[0].mxu0 %v4552
    %v4625 = vpop.f32.mrb[0].mxu0
    %v4626 = vadd.f32 %v4547, %v4625
    %v4627 = vpop.f32.mrb[0].mxu0
    %4628 = vdwg.mxu0
    %v4629 = vmul.f32 %v4621, 0.5
    %v4630 = vmul.f32 %v4626, 0.5
    %v4631 = vmul.f32 %v4621, 0.044715
    %v4632 = vmul.f32 %v4626, 0.044715
    %v4633 = vmul.f32 %v4631, %v4621
    %v4634 = vmul.f32 %v4632, %v4626
    %v4635 = vmul.f32 %v4633, %v4621
    %v4636 = vmul.f32 %v4634, %v4626
    %v4637 = vadd.f32 %v4621, %v4635
    %v4638 = vadd.f32 %v4626, %v4636
    %v4639 = vmul.f32 %v4637, 0.7978846
    %v4640 = vmul.f32 %v4638, 0.7978846
    %v4641 = vtanh.pop %v4639
    %v4642 = vtanh.pop %v4640
    %v4643 = vadd.f32 %v4641, 1.0
    %v4644 = vadd.f32 %v4642, 1.0
    %v4645 = vmul.f32 %v4629, %v4643
    %v4646 = vmul.f32 %v4630, %v4644
    %v4647 = vlaneseq
    %v4648 = vshrl.u32 %v4647, 7
    %v4649 = vsub.s32 0, %v4648
    %v4650 = vrot.slane %v3280, %v4649
    %v4652 = vsel %vm90, %v4645, 0
    %v4655 = vsel %vm90, %v4646, 0
    %4657 = vmatprep.subr.mxu0 0.0
    %4658 = vmatpush1.msra.mxu0 %v3266
    %4659 = vmatprep.subr.mxu0 0.0
    %4660 = vmatpush1.msra.mxu0 %v3267
    %4661 = vmatprep.subr.mxu0 0.0
    %4662 = vmatpush1.msra.mxu0 %v3268
    %4663 = vmatprep.subr.mxu0 0.0
    %4664 = vmatpush1.msra.mxu0 %v3269
    %4665 = vmatprep.subr.mxu0 0.0
    %4666 = vmatpush1.msra.mxu0 %v3270
    %4667 = vmatprep.subr.mxu0 0.0
    %4668 = vmatpush1.msra.mxu0 %v3271
    %4669 = vmatprep.subr.mxu0 0.0
    %4670 = vmatpush1.msra.mxu0 %v3272
    %4671 = vmatprep.subr.mxu0 0.0
    %4672 = vmatpush1.msra.mxu0 %v3273
    %4673 = vmatprep.subr.mxu0 0.0
    %4674 = vmatpush1.msra.mxu0 0.0
    %4675 = vmatprep.subr.mxu0 0.0
    %4676 = vmatpush1.msra.mxu0 0.0
    %4677 = vmatprep.subr.mxu0 0.0
    %4678 = vmatpush1.msra.mxu0 0.0
    %4679 = vmatprep.subr.mxu0 0.0
    %4680 = vmatpush1.msra.mxu0 0.0
    %4681 = vmatprep.subr.mxu0 0.0
    %4682 = vmatpush1.msra.mxu0 0.0
    %4683 = vmatprep.subr.mxu0 0.0
    %4684 = vmatpush1.msra.mxu0 0.0
    %4685 = vmatprep.subr.mxu0 0.0
    %4686 = vmatpush1.msra.mxu0 0.0
    %4687 = vmatprep.subr.mxu0 0.0
    %4688 = vmatpush1.msra.mxu0 0.0
    %4689 = vmatprep.subr.mxu0 0.0
    %4690 = vmatpush1.msra.mxu0 0.0
    %4691 = vmatprep.subr.mxu0 0.0
    %4692 = vmatpush1.msra.mxu0 0.0
    %4693 = vmatprep.subr.mxu0 0.0
    %4694 = vmatpush1.msra.mxu0 0.0
    %4695 = vmatprep.subr.mxu0 0.0
    %4696 = vmatpush1.msra.mxu0 0.0
    %4697 = vmatprep.subr.mxu0 0.0
    %4698 = vmatpush1.msra.mxu0 0.0
    %4699 = vmatprep.subr.mxu0 0.0
    %4700 = vmatpush1.msra.mxu0 0.0
    %4701 = vmatprep.subr.mxu0 0.0
    %4702 = vmatpush1.msra.mxu0 0.0
    %4703 = vmatprep.subr.mxu0 0.0
    %4704 = vmatpush1.msra.mxu0 0.0
    %4705 = vmatprep.subr.mxu0 0.0
    %4706 = vmatpush1.msra.mxu0 0.0
    %4707 = vmatprep.subr.mxu0 0.0
    %4708 = vmatpush1.msra.mxu0 0.0
    %4709 = vmatprep.subr.mxu0 0.0
    %4710 = vmatpush1.msra.mxu0 0.0
    %4711 = vmatprep.subr.mxu0 0.0
    %4712 = vmatpush1.msra.mxu0 0.0
    %4713 = vmatprep.subr.mxu0 0.0
    %4714 = vmatpush1.msra.mxu0 0.0
    %4715 = vmatprep.subr.mxu0 0.0
    %4716 = vmatpush1.msra.mxu0 0.0
    %4717 = vmatprep.subr.mxu0 0.0
    %4718 = vmatpush1.msra.mxu0 0.0
    %4719 = vmatprep.subr.mxu0 0.0
    %4720 = vmatpush1.msra.mxu0 0.0
    %4721 = vmatprep.mubr.f32.mxu0 0.0
    %4722 = vmatmul.mubr.f32.gmra.mrb[0].mxu0 %v4652
    %v4723 = vpop.f32.mrb[0].mxu0
    %v4724 = vadd.f32 %v4650, %v4723
    %v4725 = vpop.f32.mrb[0].mxu0
    %4726 = vmatprep.mubr.f32.mxu0 0.0
    %4727 = vmatmul.mubr.f32.gmra.mrb[0].mxu0 %v4655
    %v4728 = vpop.f32.mrb[0].mxu0
    %v4729 = vadd.f32 %v4650, %v4728
    %v4730 = vpop.f32.mrb[0].mxu0
    %4731 = vdwg.mxu0
    %v4732 = vadd.f32 %v4542, %v4724
    %v4733 = vadd.f32 %v4543, %v4729
    %v4734 = vsel %vm174, %v4732, 0.0
    %4735 = vadd.xlane.f32.xlu0 %v4734
    %v4736 = vpop.xlane.xlu0 %4735
    %v4737 = vsel %vm174, %v4733, 0.0
    %4738 = vadd.xlane.f32.xlu0 %v4737
    %v4739 = vpop.xlane.xlu0 %4738
    %v4740 = vmul.f32 %v4736, %v181
    %v4741 = vmul.f32 %v4739, %v181
    %v4742 = vsub.f32 %v4732, %v4740
    %v4743 = vsub.f32 %v4733, %v4741
    %v4744 = vmul.f32 %v4742, %v4742
    %v4745 = vmul.f32 %v4743, %v4743
    %v4746 = vsel %vm174, %v4744, 0.0
    %4747 = vadd.xlane.f32.xlu0 %v4746
    %v4748 = vpop.xlane.xlu0 %4747
    %v4749 = vsel %vm174, %v4745, 0.0
    %4750 = vadd.xlane.f32.xlu0 %v4749
    %v4751 = vpop.xlane.xlu0 %4750
    %v4752 = vmul.f32 %v4748, %v181
    %v4753 = vmul.f32 %v4751, %v181
    %v4754 = vadd.f32 %v4752, 1e-12
    %v4755 = vadd.f32 %v4753, 1e-12
    %v4756 = vrsqrt.pop %v4754
    %v4757 = vrsqrt.pop %v4755
    %v4758 = vmul.f32 %v4742, %v4756
    %v4759 = vmul.f32 %v4743, %v4757
    %v4760 = vlaneseq
    %v4761 = vshrl.u32 %v4760, 7
    %v4762 = vsub.s32 0, %v4761
    %v4763 = vrot.slane %v3281, %v4762
    %v4764 = vmul.f32 %v4758, %v4763
    %v4765 = vmul.f32 %v4759, %v4763
    %v4766 = vlaneseq
    %v4767 = vshrl.u32 %v4766, 7
    %v4768 = vsub.s32 0, %v4767
    %v4769 = vrot.slane %v3282, %v4768
    %v4770 = vadd.f32 %v4764, %v4769
    %v4771 = vadd.f32 %v4765, %v4769
    %v4772 = vld [vmem:[#allocation6 + $0x58] sm:$0xff]
    %v4773 = vld [vmem:[#allocation6 + $0x60] sm:$0xff]
    %v4774 = vld [vmem:[#allocation6 + $0x68] sm:$0xff]
    %v4775 = vld [vmem:[#allocation6 + $0x70] sm:$0xff]
    %v4776 = vld [vmem:[#allocation6 + $0x42] sm:$0x1]
    %v4777 = vlaneseq
    %v4778 = vshrl.u32 %v4777, 7
    %v4779 = vsub.s32 0, %v4778
    %v4780 = vrot.slane %v4776, %v4779
    %v4782 = vsel %vm174, %v4770, 0
    %v4785 = vsel %vm174, %v4771, 0
    %4787 = vmatprep.subr.mxu0 0.0
    %4788 = vmatpush1.msra.mxu0 %v4772
    %4789 = vmatprep.subr.mxu0 0.0
    %4790 = vmatpush1.msra.mxu0 %v4773
    %4791 = vmatprep.subr.mxu0 0.0
    %4792 = vmatpush1.msra.mxu0 %v4774
    %4793 = vmatprep.subr.mxu0 0.0
    %4794 = vmatpush1.msra.mxu0 %v4775
    %4795 = vmatprep.subr.mxu0 0.0
    %4796 = vmatpush1.msra.mxu0 0.0
    %4797 = vmatprep.subr.mxu0 0.0
    %4798 = vmatpush1.msra.mxu0 0.0
    %4799 = vmatprep.subr.mxu0 0.0
    %4800 = vmatpush1.msra.mxu0 0.0
    %4801 = vmatprep.subr.mxu0 0.0
    %4802 = vmatpush1.msra.mxu0 0.0
    %4803 = vmatprep.subr.mxu0 0.0
    %4804 = vmatpush1.msra.mxu0 0.0
    %4805 = vmatprep.subr.mxu0 0.0
    %4806 = vmatpush1.msra.mxu0 0.0
    %4807 = vmatprep.subr.mxu0 0.0
    %4808 = vmatpush1.msra.mxu0 0.0
    %4809 = vmatprep.subr.mxu0 0.0
    %4810 = vmatpush1.msra.mxu0 0.0
    %4811 = vmatprep.subr.mxu0 0.0
    %4812 = vmatpush1.msra.mxu0 0.0
    %4813 = vmatprep.subr.mxu0 0.0
    %4814 = vmatpush1.msra.mxu0 0.0
    %4815 = vmatprep.subr.mxu0 0.0
    %4816 = vmatpush1.msra.mxu0 0.0
    %4817 = vmatprep.subr.mxu0 0.0
    %4818 = vmatpush1.msra.mxu0 0.0
    %4819 = vmatprep.subr.mxu0 0.0
    %4820 = vmatpush1.msra.mxu0 0.0
    %4821 = vmatprep.subr.mxu0 0.0
    %4822 = vmatpush1.msra.mxu0 0.0
    %4823 = vmatprep.subr.mxu0 0.0
    %4824 = vmatpush1.msra.mxu0 0.0
    %4825 = vmatprep.subr.mxu0 0.0
    %4826 = vmatpush1.msra.mxu0 0.0
    %4827 = vmatprep.subr.mxu0 0.0
    %4828 = vmatpush1.msra.mxu0 0.0
    %4829 = vmatprep.subr.mxu0 0.0
    %4830 = vmatpush1.msra.mxu0 0.0
    %4831 = vmatprep.subr.mxu0 0.0
    %4832 = vmatpush1.msra.mxu0 0.0
    %4833 = vmatprep.subr.mxu0 0.0
    %4834 = vmatpush1.msra.mxu0 0.0
    %4835 = vmatprep.subr.mxu0 0.0
    %4836 = vmatpush1.msra.mxu0 0.0
    %4837 = vmatprep.subr.mxu0 0.0
    %4838 = vmatpush1.msra.mxu0 0.0
    %4839 = vmatprep.subr.mxu0 0.0
    %4840 = vmatpush1.msra.mxu0 0.0
    %4841 = vmatprep.subr.mxu0 0.0
    %4842 = vmatpush1.msra.mxu0 0.0
    %4843 = vmatprep.subr.mxu0 0.0
    %4844 = vmatpush1.msra.mxu0 0.0
    %4845 = vmatprep.subr.mxu0 0.0
    %4846 = vmatpush1.msra.mxu0 0.0
    %4847 = vmatprep.subr.mxu0 0.0
    %4848 = vmatpush1.msra.mxu0 0.0
    %4849 = vmatprep.subr.mxu0 0.0
    %4850 = vmatpush1.msra.mxu0 0.0
    %4851 = vmatprep.mubr.f32.mxu0 0.0
    %4852 = vmatmul.mubr.f32.gmra.mrb[0].mxu0 %v4782
    %v4853 = vpop.f32.mrb[0].mxu0
    %v4854 = vadd.f32 %v4780, %v4853
    %v4855 = vpop.f32.mrb[0].mxu0
    %4856 = vmatprep.mubr.f32.mxu0 0.0
    %4857 = vmatmul.mubr.f32.gmra.mrb[0].mxu0 %v4785
    %v4858 = vpop.f32.mrb[0].mxu0
    %v4859 = vadd.f32 %v4780, %v4858
    %v4860 = vpop.f32.mrb[0].mxu0
    %4861 = vdwg.mxu0
    %4862 = vmax.xlane.f32.xlu0 %v4854
    %v4863 = vpop.xlane.xlu0 %4862
    %4864 = vmax.xlane.f32.xlu0 %v4859
    %v4865 = vpop.xlane.xlu0 %4864
    %v4866 = vsub.f32 %v4854, %v4863
    %v4867 = vsub.f32 %v4859, %v4865
    %v4868 = vmul.f32 %v4866, 1.442695
    %v4869 = vpow.pop %v4868
    %v4870 = vmul.f32 %v4867, 1.442695
    %v4871 = vpow.pop %v4870
    %4872 = vadd.xlane.f32.xlu0 %v4869
    %v4873 = vpop.xlane.xlu0 %4872
    %4874 = vadd.xlane.f32.xlu0 %v4871
    %v4875 = vpop.xlane.xlu0 %4874
    %v4876 = vrcp.pop %v4873
    %v4877 = vmul.f32 %v4869, %v4876
    %v4878 = vrcp.pop %v4875
    %v4879 = vmul.f32 %v4871, %v4878
    %4880 = vst [vmem:[%s6] sm:$0xff] %v4877
    %4881 = vst [vmem:[%s6 + $0x8] sm:$0xff] %v4879
    // Predicated region
    $region38: #{thuc_news_bert_forward.1} parent=1 // pred_check
      _
    $region39: #{thuc_news_bert_forward.1} parent=1 // pred_check_branch
      %4883 = sbr.rel (0) target = $region41
    $region40: #{thuc_news_bert_forward.1} parent=1 // pred_region
      _
    $region41: #{thuc_news_bert_forward.1} parent=1 // pred_fallthru
      _
    // Predicated region
    $region42: #{thuc_news_bert_forward.1} parent=1 // pred_check
      _
    $region43: #{thuc_news_bert_forward.1} parent=1 // pred_check_branch
      %4885 = sbr.rel (0) target = $region45
    $region44: #{thuc_news_bert_forward.1} parent=1 // pred_region
      _
    $region45: #{thuc_news_bert_forward.1} parent=1 // pred_fallthru
      _
    %4886 = vsyncpa [#allocation3], 1
    %4887 = vsyncpa [#allocation5], 1

</llo_original>
